<compile_context>
chip_gen: v7x
topology: tpu7x:2x2x1
jax: 0.10.0
libtpu: 0.0.40
codegen_flags: <defaults>
</compile_context>

<pallas_src>
import jax
import jax.numpy as jnp
from jax import lax
from jax.experimental import pallas as pl
from jax.experimental.pallas import tpu as pltpu
from jax.scipy.special import logsumexp as _logsumexp


_NEG = float(jnp.finfo(jnp.float32).min)   # finite "minus infinity" sentinel
_MAX_TILE_ELEMS = 512 * 1024               # ~2 MiB of f32 per input tile (>=85% of HBM roofline)


def _round_up(x, m):
    return ((x + m - 1) // m) * m


def _make_lse_kernel(N, M, TM, TN, row_ragged, col_ragged, flat_limit):
    """Row-block-parallel streaming logsumexp kernel factory (all args static)."""
    G = TM // 8
    if flat_limit is not None:
        q, rem = flat_limit // M, flat_limit % M   # static: flat index limit decomposition

    def kernel(x_ref, out_ref, m_ref, l_ref):
        i = pl.program_id(0)                       # row-block (parallel)
        j = pl.program_id(1)                       # col-block (reduction)

        @pl.when(j == 0)
        def _init():
            m_ref[...] = jnp.full_like(m_ref, _NEG)
            l_ref[...] = jnp.zeros_like(l_ref)

        tile = x_ref[...].astype(jnp.float32)      # (TM, TN), upcast in-kernel if bf16/f16

        # In-kernel masking of ragged edges (replaces wrapper-side padding).
        mask = None
        if flat_limit is not None:
            r = lax.broadcasted_iota(jnp.int32, (TM, TN), 0) + i * TM
            c = lax.broadcasted_iota(jnp.int32, (TM, TN), 1) + j * TN
            mask = (r < q) | ((r == q) & (c < rem))
        else:
            if row_ragged:
                r = lax.broadcasted_iota(jnp.int32, (TM, 1), 0) + i * TM
                mask = r < N
            if col_ragged:
                c = lax.broadcasted_iota(jnp.int32, (1, TN), 1) + j * TN
                cm = c < M
                mask = cm if mask is None else (mask & cm)

        if mask is not None:
            tile = jnp.where(mask, tile, _NEG)

        # Fold TM rows onto the (8, TN) accumulators: purely elementwise (VPU/EUP),
        # no cross-lane work per tile.
        t3 = tile.reshape(G, 8, TN)
        gmax = jnp.max(t3, axis=0)                             # (8, TN)
        m_prev = m_ref[...]
        m_new = jnp.maximum(m_prev, gmax)                      # always finite (>= _NEG)
        p3 = jnp.exp(t3 - m_new[None, :, :])                   # (G, 8, TN)
        if mask is not None:
            mask3 = jnp.broadcast_to(mask, (TM, TN)).reshape(G, 8, TN)
            p3 = jnp.where(mask3, p3, 0.0)                     # robust: pad never contributes
        psum = jnp.sum(p3, axis=0)                             # (8, TN)
        l_ref[...] = l_ref[...] * jnp.exp(m_prev - m_new) + psum
        m_ref[...] = m_new

        # One cross-lane reduce per row-block: emit this row-block's partial LSE.
        @pl.when(j == pl.num_programs(1) - 1)
        def _finalize():
            m = m_ref[...]
            l = l_ref[...]
            gm = jnp.max(m, keepdims=True)                             # (1, 1)
            s = jnp.sum(l * jnp.exp(m - gm), keepdims=True)            # (1, 1)
            partial = gm + jnp.log(s)                                  # (1, 1)
            out_ref[...] = jnp.broadcast_to(partial.reshape(1, 1, 1), out_ref.shape)

    return kernel


def _global_logsumexp(x2, flat_limit=None):
    """logsumexp over all elements of a 2-D array via a Pallas streaming reduce."""
    N, M = x2.shape
    sub = 8 if x2.dtype.itemsize >= 4 else 16       # sublane granularity (f32 vs bf16/f16)
    phys_w = _round_up(M, 128)

    # Tile selection: prefer full-width rows (contiguous DMA, no column mask),
    # otherwise wide lane-dense tiles; ~2 MiB per tile value.
    if phys_w * sub <= _MAX_TILE_ELEMS:
        TN = M
        TM = min(_round_up(N, sub), max(sub, (_MAX_TILE_ELEMS // phys_w) // sub * sub))
    else:
        TN = 8192
        TM = min(_round_up(N, sub), max(sub, (_MAX_TILE_ELEMS // TN) // sub * sub))

    R = pl.cdiv(N, TM)
    C = pl.cdiv(M, TN)
    row_ragged = (N % TM) != 0
    col_ragged = (TN != M) and ((M % TN) != 0)

    kernel = _make_lse_kernel(N, M, TM, TN, row_ragged, col_ragged, flat_limit)

    partials = pl.pallas_call(
        kernel,
        out_shape=jax.ShapeDtypeStruct((R, 8, 128), jnp.float32),
        grid_spec=pltpu.PrefetchScalarGridSpec(
            num_scalar_prefetch=0,
            grid=(R, C),
            in_specs=[pl.BlockSpec((TM, TN), lambda i, j: (i, j))],
            out_specs=pl.BlockSpec((1, 8, 128), lambda i, j: (i, 0, 0)),
            scratch_shapes=[pltpu.VMEM((8, TN), jnp.float32),    # running max (per sublane, lane)
                            pltpu.VMEM((8, TN), jnp.float32)],   # running rescaled sum
        ),
        compiler_params=pltpu.CompilerParams(
            # Row-block axis is independent (-> both TCs on v7x); column axis
            # carries the accumulators and is the (last) reduction axis.
            dimension_semantics=("parallel", "arbitrary"),
            vmem_limit_bytes=32 * 1024 * 1024,
        ),
    )(x2)

    return _logsumexp(partials[:, 0, 0])


def momentum_baseline(neg_logits, log_moving_average, momentum_logit, training=True):
    """
    neg_logits        : float tensor of any rank (reduced over all elements)
    log_moving_average: f32[1] buffer value
    momentum_logit    : f32[1] buffer value (= logit(momentum))
    returns           : f32[1] updated log moving average (training) / buffer unchanged (eval)
    """
    lma = jnp.asarray(log_moving_average, jnp.float32).reshape(-1)[0]
    if not training:
        return lma.reshape(1)

    x = neg_logits
    if x.dtype not in (jnp.float32, jnp.bfloat16, jnp.float16):
        x = x.astype(jnp.float32)
    numel = int(x.size)
    assert numel > 0, "neg_logits must be non-empty"

    flat_limit = None
    if x.ndim >= 2:
        x2 = x.reshape(x.shape[0], -1)              # metadata-only collapse, no padding
    else:
        flat = x.reshape(-1)                        # 0-D / 1-D: build a sublane-dense 2-D view
        L = flat.shape[0]
        W = min(_round_up(L, 128), 4096)
        rows = pl.cdiv(L, W)
        if rows * W != L:
            # Small tail pad only for ragged vector inputs; pad values are
            # excluded in-kernel via the flat-index mask.
            flat = jnp.pad(flat, (0, rows * W - L))
            flat_limit = L
        x2 = flat.reshape(rows, W)

    lse = _global_logsumexp(x2, flat_limit)
    log_batch_average = lse - jnp.log(jnp.float32(numel))

    mlogit = jnp.asarray(momentum_logit, jnp.float32).reshape(-1)[0]
    log_alpha = jax.nn.log_sigmoid(mlogit)
    log_1m_alpha = jax.nn.log_sigmoid(-mlogit)
    updated = jnp.logaddexp(lma + log_alpha, log_batch_average + log_1m_alpha)
    # TODO(synk): in-place buffer mutation (log_moving_average.data = ...) and the custom
    # LogMeanExp backward are host/autograd-side; the updated value is returned functionally.
    return updated.reshape(1)


def _reference(neg_logits, log_moving_average, momentum_logit):
    log_batch_average = (_logsumexp(neg_logits.astype(jnp.float32))
                         - jnp.log(jnp.float32(neg_logits.size)))
    log_alpha = jax.nn.log_sigmoid(jnp.asarray(momentum_logit, jnp.float32))
    log_1m_alpha = jax.nn.log_sigmoid(-jnp.asarray(momentum_logit, jnp.float32))
    return jnp.logaddexp(jnp.asarray(log_moving_average, jnp.float32) + log_alpha,
                         log_batch_average + log_1m_alpha)


if __name__ == "__main__":
    key = jax.random.PRNGKey(0)

    # Multi-row-block, ragged shape: exercises the parallel row-block axis,
    # in-kernel row masking, and a full-width (non-128-multiple) lane dim.
    N, M = 520, 1000
    neg_logits = jax.random.normal(key, (N, M), dtype=jnp.float32)

    momentum = 0.9
    log_moving_average = jnp.zeros((1,), dtype=jnp.float32)                     # buffer init
    momentum_logit = jnp.log(jnp.array([momentum], jnp.float32) / (1.0 - momentum))  # logit(momentum)

    out = momentum_baseline(neg_logits, log_moving_average, momentum_logit, training=True)
    out = jax.block_until_ready(out)

    ref = _reference(neg_logits, log_moving_average, momentum_logit)
    assert out.shape == (1,)
    assert jnp.allclose(out, ref, atol=1e-5, rtol=1e-4), (out, ref)

    # Also exercise the 1-D (flat-masked) path once.
    v = jax.random.normal(jax.random.PRNGKey(1), (777,), dtype=jnp.float32)
    out_v = jax.block_until_ready(
        momentum_baseline(v, log_moving_average, momentum_logit, training=True))
    ref_v = _reference(v, log_moving_average, momentum_logit)
    assert jnp.allclose(out_v, ref_v, atol=1e-5, rtol=1e-4), (out_v, ref_v)

    print("KERNEL_OK")
</pallas_src>

<mosaic_0001>
module attributes {stable_mosaic.version = 11 : i64} {
  func.func @kernel(%arg0: i32, %arg1: i32, %arg2: memref<512x1000xf32, #tpu.memory_space<vmem>>, %arg3: memref<1x8x128xf32, #tpu.memory_space<vmem>>, %arg4: memref<8x1000xf32, #tpu.memory_space<vmem>>, %arg5: memref<8x1000xf32, #tpu.memory_space<vmem>>) attributes {dimension_semantics = [#tpu.dimension_semantics<parallel>, #tpu.dimension_semantics<arbitrary>], iteration_bounds = array<i64: 2, 1>, scalar_prefetch = 0 : i64, scratch_operands = 2 : i64, tpu.core_type = #tpu.core_type<tc>, window_params = [{transform_indices = @transform_0, window_bounds = array<i64: 512, 1000>}, {transform_indices = @transform_1, window_bounds = array<i64: 1, 8, 128>}]} {
    %c0_i32 = arith.constant 0 : i32
    %0 = arith.cmpi eq, %arg1, %c0_i32 : i32
    %1 = arith.extui %0 : i1 to i32
    %c0_i32_0 = arith.constant 0 : i32
    %2 = arith.cmpi ne, %1, %c0_i32_0 : i32
    scf.if %2 {
      %cst_15 = arith.constant -3.40282347E+38 : f32
      %38 = vector.broadcast %cst_15 : f32 to vector<8x1000xf32>
      %c0_16 = arith.constant 0 : index
      %c0_17 = arith.constant 0 : index
      %39 = vector.load %arg4[%c0_16, %c0_17] : memref<8x1000xf32, #tpu.memory_space<vmem>>, vector<8x1000xf32>
      tpu.vector_store %arg4[%c0_16, %c0_17], %38 {strides = array<i32>} : memref<8x1000xf32, #tpu.memory_space<vmem>>, vector<8x1000xf32>,
      %cst_18 = arith.constant 0.000000e+00 : f32
      %40 = vector.broadcast %cst_18 : f32 to vector<8x1000xf32>
      %c0_19 = arith.constant 0 : index
      %c0_20 = arith.constant 0 : index
      %41 = vector.load %arg5[%c0_19, %c0_20] : memref<8x1000xf32, #tpu.memory_space<vmem>>, vector<8x1000xf32>
      tpu.vector_store %arg5[%c0_19, %c0_20], %40 {strides = array<i32>} : memref<8x1000xf32, #tpu.memory_space<vmem>>, vector<8x1000xf32>,
    } else {
    }
    %c0 = arith.constant 0 : index
    %c0_1 = arith.constant 0 : index
    %3 = vector.load %arg2[%c0, %c0_1] : memref<512x1000xf32, #tpu.memory_space<vmem>>, vector<512x1000xf32>
    %4 = tpu.iota {dimensions = array<i32: 0>} : vector<512x1xi32>
    %c512_i32 = arith.constant 512 : i32
    %5 = arith.muli %arg0, %c512_i32 : i32
    %6 = vector.broadcast %5 : i32 to vector<512x1xi32>
    %7 = arith.addi %4, %6 : vector<512x1xi32>
    %c520_i32 = arith.constant 520 : i32
    %8 = vector.broadcast %c520_i32 : i32 to vector<512x1xi32>
    %9 = arith.cmpi slt, %7, %8 : vector<512x1xi32>
    %cst = arith.constant -3.40282347E+38 : f32
    %10 = vector.shape_cast %9 : vector<512x1xi1> to vector<512x1xi1>
    %11 = vector.broadcast %10 : vector<512x1xi1> to vector<512x1000xi1>
    %12 = vector.broadcast %cst : f32 to vector<512x1000xf32>
    %13 = arith.select %11, %3, %12 : vector<512x1000xi1>, vector<512x1000xf32>
    %14 = vector.shape_cast %13 : vector<512x1000xf32> to vector<64x8x1000xf32>
    %cst_2 = arith.constant dense<0xFF800000> : vector<8x1000xf32>
    %15 = vector.multi_reduction <maximumf>, %14, %cst_2 [0] : vector<64x8x1000xf32> to vector<8x1000xf32>
    %c0_3 = arith.constant 0 : index
    %c0_4 = arith.constant 0 : index
    %16 = vector.load %arg4[%c0_3, %c0_4] : memref<8x1000xf32, #tpu.memory_space<vmem>>, vector<8x1000xf32>
    %17 = arith.maximumf %16, %15 : vector<8x1000xf32>
    %18 = vector.shape_cast %17 : vector<8x1000xf32> to vector<1x8x1000xf32>
    %19 = vector.broadcast %18 : vector<1x8x1000xf32> to vector<64x8x1000xf32>
    %20 = arith.subf %14, %19 : vector<64x8x1000xf32>
    %21 = math.exp %20 : vector<64x8x1000xf32>
    %22 = vector.shape_cast %9 : vector<512x1xi1> to vector<512x1xi1>
    %23 = vector.broadcast %22 : vector<512x1xi1> to vector<512x1000xi1>
    %24 = vector.shape_cast %23 : vector<512x1000xi1> to vector<64x8x1000xi1>
    %cst_5 = arith.constant 0.000000e+00 : f32
    %25 = vector.broadcast %cst_5 : f32 to vector<64x8x1000xf32>
    %26 = arith.select %24, %21, %25 : vector<64x8x1000xi1>, vector<64x8x1000xf32>
    %cst_6 = arith.constant dense<0.000000e+00> : vector<8x1000xf32>
    %27 = vector.multi_reduction <add>, %26, %cst_6 [0] : vector<64x8x1000xf32> to vector<8x1000xf32>
    %c0_7 = arith.constant 0 : index
    %c0_8 = arith.constant 0 : index
    %28 = vector.load %arg5[%c0_7, %c0_8] : memref<8x1000xf32, #tpu.memory_space<vmem>>, vector<8x1000xf32>
    %29 = arith.subf %16, %17 : vector<8x1000xf32>
    %30 = math.exp %29 : vector<8x1000xf32>
    %31 = arith.mulf %28, %30 : vector<8x1000xf32>
    %32 = arith.addf %31, %27 : vector<8x1000xf32>
    %c0_9 = arith.constant 0 : index
    %c0_10 = arith.constant 0 : index
    %33 = vector.load %arg5[%c0_9, %c0_10] : memref<8x1000xf32, #tpu.memory_space<vmem>>, vector<8x1000xf32>
    tpu.vector_store %arg5[%c0_9, %c0_10], %32 {strides = array<i32>} : memref<8x1000xf32, #tpu.memory_space<vmem>>, vector<8x1000xf32>,
    %c0_11 = arith.constant 0 : index
    %c0_12 = arith.constant 0 : index
    %34 = vector.load %arg4[%c0_11, %c0_12] : memref<8x1000xf32, #tpu.memory_space<vmem>>, vector<8x1000xf32>
    tpu.vector_store %arg4[%c0_11, %c0_12], %17 {strides = array<i32>} : memref<8x1000xf32, #tpu.memory_space<vmem>>, vector<8x1000xf32>,
    %c0_i32_13 = arith.constant 0 : i32
    %35 = arith.cmpi eq, %arg1, %c0_i32_13 : i32
    %36 = arith.extui %35 : i1 to i32
    %c0_i32_14 = arith.constant 0 : i32
    %37 = arith.cmpi ne, %36, %c0_i32_14 : i32
    scf.if %37 {
      %c0_15 = arith.constant 0 : index
      %c0_16 = arith.constant 0 : index
      %38 = vector.load %arg4[%c0_15, %c0_16] : memref<8x1000xf32, #tpu.memory_space<vmem>>, vector<8x1000xf32>
      %c0_17 = arith.constant 0 : index
      %c0_18 = arith.constant 0 : index
      %39 = vector.load %arg5[%c0_17, %c0_18] : memref<8x1000xf32, #tpu.memory_space<vmem>>, vector<8x1000xf32>
      %40 = vector.shape_cast %38 : vector<8x1000xf32> to vector<1x8x1000xf32>
      %cst_19 = arith.constant dense<0xFF800000> : vector<1xf32>
      %41 = vector.multi_reduction <maximumf>, %40, %cst_19 [1, 2] : vector<1x8x1000xf32> to vector<1xf32>
      %42 = vector.shape_cast %41 : vector<1xf32> to vector<1x1x1xf32>
      %43 = vector.extract %42[0, 0, 0] : f32 from vector<1x1x1xf32>
      %44 = vector.broadcast %43 : f32 to vector<1x1xf32>
      %45 = vector.broadcast %44 : vector<1x1xf32> to vector<8x1000xf32>
      %46 = arith.subf %38, %45 : vector<8x1000xf32>
      %47 = math.exp %46 : vector<8x1000xf32>
      %48 = arith.mulf %39, %47 : vector<8x1000xf32>
      %49 = vector.shape_cast %48 : vector<8x1000xf32> to vector<1x8x1000xf32>
      %cst_20 = arith.constant dense<0.000000e+00> : vector<1xf32>
      %50 = vector.multi_reduction <add>, %49, %cst_20 [1, 2] : vector<1x8x1000xf32> to vector<1xf32>
      %51 = vector.shape_cast %50 : vector<1xf32> to vector<1x1x1xf32>
      %52 = vector.extract %51[0, 0, 0] : f32 from vector<1x1x1xf32>
      %53 = vector.broadcast %52 : f32 to vector<1x1xf32>
      %54 = math.log %53 : vector<1x1xf32>
      %55 = arith.addf %44, %54 : vector<1x1xf32>
      %56 = vector.shape_cast %55 : vector<1x1xf32> to vector<1x1x1xf32>
      %57 = vector.shape_cast %56 : vector<1x1x1xf32> to vector<1x1x1xf32>
      %58 = vector.broadcast %57 : vector<1x1x1xf32> to vector<1x8x128xf32>
      %c0_21 = arith.constant 0 : index
      %c0_22 = arith.constant 0 : index
      %c0_23 = arith.constant 0 : index
      %59 = vector.load %arg3[%c0_21, %c0_22, %c0_23] : memref<1x8x128xf32, #tpu.memory_space<vmem>>, vector<1x8x128xf32>
      tpu.vector_store %arg3[%c0_21, %c0_22, %c0_23], %58 {strides = array<i32>} : memref<1x8x128xf32, #tpu.memory_space<vmem>>, vector<1x8x128xf32>,
    } else {
    }
    return
  }
  func.func @transform_0(%arg0: i32, %arg1: i32) -> (i32, i32) {
    %c0_i32 = arith.constant 0 : i32
    return %arg0, %arg1 : i32, i32
  }
  func.func @transform_1(%arg0: i32, %arg1: i32) -> (i32, i32, i32) {
    %c0_i32 = arith.constant 0 : i32
    %c0_i32_0 = arith.constant 0 : i32
    %c0_i32_1 = arith.constant 0 : i32
    return %arg0, %c0_i32, %c0_i32_0 : i32, i32, i32
  }
}

</mosaic_0001>

<llo_original>
// kernel: tpu_custom_call.1
$region0: #{tpu_custom_call.1}
  #allocation0 [shape = 'u32[]', space=smem, size = 0x4, offset = 0x4, fixed_abs, tag = 'smem constant byte address 0x4 - core index']
  #allocation1 [shape = 'u32[144,128]{1,0:T(1,128)}', space=vmem, size = 0x12000, scoped, tag = 'internal scratch']
  #allocation2 [shape = 'f32[8,1000]{1,0:T(8,128)}', space=vmem, size = 0x8000, scoped, tag = 'scratch operand']
  #allocation3 [shape = 'f32[8,1000]{1,0:T(8,128)}', space=vmem, size = 0x8000, scoped, tag = 'scratch operand']
  %s0 = inlined_call_operand.hbm [shape: f32[520,1000], index: 0, kind: input, shape index: {}]
  %s1 = inlined_call_operand.hbm [shape: f32[2,8,128], index: 1, kind: output, shape index: {}]
  %s2 = sld [smem:[#allocation0]]
  $region49: #{tpu_custom_call.1} parent=0
    _
  %s4 = ssub.s32 1, %s2
  %s5 = scalar_select 0, %s4, %s2
  $region1: #{tpu_custom_call.1} parent=0
    #allocation4 [shape = 'u8[4194304]{0}', space=vmem, size = 0x400000, scoped, tag = 'input window, operand 0']
    #allocation5 [shape = 's32[2]{0}', space=sflag, size = 0x8, scoped, tag = 'scoped memory for tpu_custom_call.1']
    #allocation6 [shape = 's32[2]{0}', space=sflag, size = 0x8, scoped, tag = 'scoped memory for tpu_custom_call.1']
    #allocation7 [shape = 'u8[8192]{0}', space=vmem, size = 0x2000, scoped, tag = 'output window, operand 0']
    %6 = vsyncpa [#allocation5], 0
    %s7 = scalar_lea.sflag [#allocation5], 1
    %8 = vsyncpa %s7, 0
    %9 = vsyncpa [#allocation6], 0
    %s10 = scalar_lea.sflag [#allocation6], 1
    %11 = vsyncpa %s10, 0
    loop: start=0, step=1, limit=4
    $region2: #{tpu_custom_call.1} parent=1 // loop_pre_header
      _
    $region3: #{tpu_custom_call.1} parent=1 // loop_header
      %s13 = sphi 0, %s17
      %p14 = scmp.ge.s32.totalorder %s13, 4
      %s20 = sphi 0, %s32
      %s21 = sphi 0, %s28
      %s22 = sphi 0, %s20
      %s23 = sphi 0, %s21
      %s24 = sphi 0, %s22
      %s25 = sphi 0, %s23
      %s37 = sphi 0, %s39
      %s40 = sphi 0, %s37
      %s41 = sphi 0, %s40
      %s57 = sphi 0, %s41
      %s63 = sphi 0, %s65
      %s66 = sphi 0, %s63
      %s67 = sphi 0, %s66
      %s83 = sphi 0, %s67
    $region4: #{tpu_custom_call.1} parent=1 // loop_header_branch
      %16 = sbr.rel (%p14) target = $region8
    $region5: #{tpu_custom_call.1} parent=1 // loop_body
      %s18 = ssub.s32 %s13, 1
      %s19 = ssub.s32 %s13, 2
      %s26 = sadd.s32 1, %s21
      %p27 = scmp.ge.s32.totalorder %s26, 1
      %s28 = scalar_select %p27, 0, %s26
      %s29 = sadd.s32 1, %s20
      %s30 = scalar_select %p27, %s29, %s20
      %p31 = scmp.ge.s32.totalorder %s30, 2
      %s32 = scalar_select %p31, 0, %s30
      %s33 = ssub.s32 %s20, %s32
      %s34 = ssub.s32 %s21, %s28
      %s35 = sor.u32 %s33, %s34
      %p36 = scmp.eq.s32.totalorder %s35, 0
      %s38 = sadd.s32 %s37, 1
      %s39 = scalar_select %p36, %s37, %s38
      %p42 = pneg %p36
      %p43 = scmp.eq.s32.totalorder %s13, 1
      %p44 = por %p42, %p43
      %p45 = scmp.ne.s32.totalorder %s37, %s40
      %p46 = scmp.eq.s32.totalorder %s13, 0
      %p47 = por %p45, %p46
      %p48 = scmp.ne.s32.totalorder %s37, %s40
      %p49 = scmp.eq.s32.totalorder %s18, 1
      %p50 = por %p48, %p49
      %p51 = scmp.ne.s32.totalorder %s40, %s41
      %p52 = scmp.eq.s32.totalorder %s18, 0
      %p53 = por %p51, %p52
      %p54 = scmp.ne.s32.totalorder %s40, %s41
      %p55 = scmp.eq.s32.totalorder %s19, 1
      %p56 = por %p54, %p55
      %p58 = scmp.ne.s32.totalorder %s41, %s57
      %p59 = scmp.eq.s32.totalorder %s19, 0
      %p60 = por %p58, %p59
      %s61 = ssub.s32 %s20, %s32
      %p62 = scmp.eq.s32.totalorder %s61, 0
      %s64 = sadd.s32 %s63, 1
      %s65 = scalar_select %p62, %s63, %s64
      %p68 = pneg %p62
      %p69 = scmp.eq.s32.totalorder %s13, 1
      %p70 = por %p68, %p69
      %p71 = scmp.ne.s32.totalorder %s63, %s66
      %p72 = scmp.eq.s32.totalorder %s13, 0
      %p73 = por %p71, %p72
      %p74 = scmp.ne.s32.totalorder %s63, %s66
      %p75 = scmp.eq.s32.totalorder %s18, 1
      %p76 = por %p74, %p75
      %p77 = scmp.ne.s32.totalorder %s66, %s67
      %p78 = scmp.eq.s32.totalorder %s18, 0
      %p79 = por %p77, %p78
      %p80 = scmp.ne.s32.totalorder %s66, %s67
      %p81 = scmp.eq.s32.totalorder %s19, 1
      %p82 = por %p80, %p81
      %p84 = scmp.ne.s32.totalorder %s67, %s83
      %p85 = scmp.eq.s32.totalorder %s19, 0
      %p86 = por %p84, %p85
      %p87 = scmp.le.s32.totalorder 1, %s13
      %p88 = scmp.lt.s32.totalorder %s13, 3
      %p89 = pnand %p87, %p88
      %p90 = pneg %p89
      // Predicated region
      $region9: #{tpu_custom_call.1} parent=5 // pred_check
        _
      $region10: #{tpu_custom_call.1} parent=5 // pred_check_branch
        %92 = sbr.rel (%p89) target = $region12
      $region11: #{tpu_custom_call.1} parent=5 // pred_region
        %s93 = ssub.s32 %s13, 1
      $region12: #{tpu_custom_call.1} parent=5 // pred_fallthru
        _
      %p94 = scmp.lt.s32.totalorder %s13, 2
      // Predicated region
      $region13: #{tpu_custom_call.1} parent=5 // pred_check
        %p95 = pneg %p94
      $region14: #{tpu_custom_call.1} parent=5 // pred_check_branch
        %97 = sbr.rel (%p95) target = $region16
      $region15: #{tpu_custom_call.1} parent=5 // pred_region
        // Predicated region
        $region17: #{tpu_custom_call.1} parent=15 // pred_check
          %p98 = pneg %p47
        $region18: #{tpu_custom_call.1} parent=15 // pred_check_branch
          %100 = sbr.rel (%p98) target = $region20
        $region19: #{tpu_custom_call.1} parent=15 // pred_region
          %s101 = sand.u32 %s37, 1
          %s102 = scalar_lea.sflag [#allocation5], %s101
          %s103 = sand.u32 %s37, 1
          %s104 = smul.addr %s103, 4096
          %s105 = scalar_lea.vmem [#allocation4], %s104
          %s106 = smul.u32 64, %s20
          %s107 = smul.u32 8, %s21
          %s108 = ssub.s32 65, %s106
          %p109 = scmp.lt.s32.totalorder %s108, 64
          %s110 = scalar_select %p109, %s108, 64
          %s111 = smul.u32 128, %s110
          %s112 = smul.u32 %s111, 8
          %s114 = ssub.s32 65536, %s112
          %115 = vsyncadd %s102, %s114
          %p116 = scmp.ne.s32.totalorder 0, %s112
          %s117 = smul.addr %s106, 8
          %s118 = sadd.s32 %s107, %s117
          %s119 = smul.addr %s118, 128
          %s120 = scalar_lea.hbm %s0, %s119
          %s121 = smul.u32 64, %s110
          %s122 = sshll.u32 %s105, 4
          %s123 = int_to_ptr.vmem [resolvable:$true] %s122
          %s124 = sshll.u32 %s121, 4
          %128 = dma.hbm_to_vmem [thread:$0]  (%p116), %s120, %s124, %s123, %s102, 1024, 1024, 64
        $region20: #{tpu_custom_call.1} parent=15 // pred_fallthru
          _
      $region16: #{tpu_custom_call.1} parent=5 // pred_fallthru
        _
      %p129 = scmp.le.s32.totalorder 1, %s13
      %p130 = scmp.lt.s32.totalorder %s13, 3
      %p131 = pnand %p129, %p130
      %p132 = pneg %p131
      // Predicated region
      $region21: #{tpu_custom_call.1} parent=5 // pred_check
        _
      $region22: #{tpu_custom_call.1} parent=5 // pred_check_branch
        %134 = sbr.rel (%p131) target = $region24
      $region23: #{tpu_custom_call.1} parent=5 // pred_region
        %s135 = ssub.s32 %s13, 1
        %s136 = sand.u32 %s40, 1
        %s137 = scalar_lea.sflag [#allocation5], %s136
        %s138 = sand.u32 %s40, 1
        %s139 = smul.addr %s138, 4096
        %s140 = scalar_lea.vmem [#allocation4], %s139
        // Predicated region
        $region25: #{tpu_custom_call.1} parent=23 // pred_check
          %p141 = pneg %p53
        $region26: #{tpu_custom_call.1} parent=23 // pred_check_branch
          %143 = sbr.rel (%p141) target = $region28
        $region27: #{tpu_custom_call.1} parent=23 // pred_region
          %144 = dma.done %s137, 65536
        $region28: #{tpu_custom_call.1} parent=23 // pred_fallthru
          _
        %s145 = sand.u32 %s40, 1
        %s146 = scalar_lea.sflag [#allocation5], %s145
        %s147 = sand.u32 %s40, 1
        %s148 = smul.addr %s147, 4096
        %s149 = scalar_lea.vmem [#allocation4], %s148
        %p150 = pneg %p53
        %p151 = pneg %p50
        %p152 = pneg %p79
        %p153 = pneg %p76
        %s154 = sand.u32 %s66, 1
        %s155 = scalar_lea.sflag [#allocation6], %s154
        %s156 = sand.u32 %s66, 1
        %s157 = smul.addr %s156, 8
        %s158 = scalar_lea.vmem [#allocation7], %s157
        %s159 = smul.u32 64, %s22
        %s160 = smul.u32 8, %s23
        %s161 = ssub.s32 65, %s159
        %p162 = scmp.lt.s32.totalorder %s161, 64
        %s163 = scalar_select %p162, %s161, 64
        %s164 = smul.u32 128, %s163
        %s165 = smul.u32 %s164, 8
        %p166 = scmp.eq.s32.totalorder %s23, 0
        // Predicated region
        $region29: #{tpu_custom_call.1} parent=23 // pred_check
          %p167 = pneg %p166
        $region30: #{tpu_custom_call.1} parent=23 // pred_check_branch
          %169 = sbr.rel (%p167) target = $region32
        $region31: #{tpu_custom_call.1} parent=23 // pred_region
          %170 = vst [vmem:[#allocation2] sm:$0xff] -3.4028235e+38
          %171 = vst [vmem:[#allocation2 + $0x8] sm:$0xff] -3.4028235e+38
          %172 = vst [vmem:[#allocation2 + $0x10] sm:$0xff] -3.4028235e+38
          %173 = vst [vmem:[#allocation2 + $0x18] sm:$0xff] -3.4028235e+38
          %174 = vst [vmem:[#allocation2 + $0x20] sm:$0xff] -3.4028235e+38
          %175 = vst [vmem:[#allocation2 + $0x28] sm:$0xff] -3.4028235e+38
          %176 = vst [vmem:[#allocation2 + $0x30] sm:$0xff] -3.4028235e+38
          %vm177 = vcmask 850944
          %178 = vst.msk [vmem:[#allocation2 + $0x38] sm:$0xff] %vm177, -3.4028235e+38
          %179 = vst [vmem:[#allocation3] sm:$0xff] 0.0
          %180 = vst [vmem:[#allocation3 + $0x8] sm:$0xff] 0.0
          %181 = vst [vmem:[#allocation3 + $0x10] sm:$0xff] 0.0
          %182 = vst [vmem:[#allocation3 + $0x18] sm:$0xff] 0.0
          %183 = vst [vmem:[#allocation3 + $0x20] sm:$0xff] 0.0
          %184 = vst [vmem:[#allocation3 + $0x28] sm:$0xff] 0.0
          %185 = vst [vmem:[#allocation3 + $0x30] sm:$0xff] 0.0
          %186 = vst.msk [vmem:[#allocation3 + $0x38] sm:$0xff] %vm177, 0.0
        $region32: #{tpu_custom_call.1} parent=23 // pred_fallthru
          _
        %v187 = vld [vmem:[%s140] sm:$0xff]
        %v188 = vld [vmem:[%s140 + $0x8] sm:$0xff]
        %v189 = vld [vmem:[%s140 + $0x10] sm:$0xff]
        %v190 = vld [vmem:[%s140 + $0x18] sm:$0xff]
        %v191 = vld [vmem:[%s140 + $0x20] sm:$0xff]
        %v192 = vld [vmem:[%s140 + $0x28] sm:$0xff]
        %v193 = vld [vmem:[%s140 + $0x30] sm:$0xff]
        %v194 = vld [vmem:[%s140 + $0x38] sm:$0xff]
        %v195 = vld [vmem:[%s140 + $0x40] sm:$0xff]
        %v196 = vld [vmem:[%s140 + $0x48] sm:$0xff]
        %v197 = vld [vmem:[%s140 + $0x50] sm:$0xff]
        %v198 = vld [vmem:[%s140 + $0x58] sm:$0xff]
        %v199 = vld [vmem:[%s140 + $0x60] sm:$0xff]
        %v200 = vld [vmem:[%s140 + $0x68] sm:$0xff]
        %v201 = vld [vmem:[%s140 + $0x70] sm:$0xff]
        %v202 = vld [vmem:[%s140 + $0x78] sm:$0xff]
        %v203 = vld [vmem:[%s140 + $0x80] sm:$0xff]
        %v204 = vld [vmem:[%s140 + $0x88] sm:$0xff]
        %v205 = vld [vmem:[%s140 + $0x90] sm:$0xff]
        %v206 = vld [vmem:[%s140 + $0x98] sm:$0xff]
        %v207 = vld [vmem:[%s140 + $0xa0] sm:$0xff]
        %v208 = vld [vmem:[%s140 + $0xa8] sm:$0xff]
        %v209 = vld [vmem:[%s140 + $0xb0] sm:$0xff]
        %v210 = vld [vmem:[%s140 + $0xb8] sm:$0xff]
        %v211 = vld [vmem:[%s140 + $0xc0] sm:$0xff]
        %v212 = vld [vmem:[%s140 + $0xc8] sm:$0xff]
        %v213 = vld [vmem:[%s140 + $0xd0] sm:$0xff]
        %v214 = vld [vmem:[%s140 + $0xd8] sm:$0xff]
        %v215 = vld [vmem:[%s140 + $0xe0] sm:$0xff]
        %v216 = vld [vmem:[%s140 + $0xe8] sm:$0xff]
        %v217 = vld [vmem:[%s140 + $0xf0] sm:$0xff]
        %v218 = vld [vmem:[%s140 + $0xf8] sm:$0xff]
        %v219 = vld [vmem:[%s140 + $0x100] sm:$0xff]
        %v220 = vld [vmem:[%s140 + $0x108] sm:$0xff]
        %v221 = vld [vmem:[%s140 + $0x110] sm:$0xff]
        %v222 = vld [vmem:[%s140 + $0x118] sm:$0xff]
        %v223 = vld [vmem:[%s140 + $0x120] sm:$0xff]
        %v224 = vld [vmem:[%s140 + $0x128] sm:$0xff]
        %v225 = vld [vmem:[%s140 + $0x130] sm:$0xff]
        %v226 = vld [vmem:[%s140 + $0x138] sm:$0xff]
        %v227 = vld [vmem:[%s140 + $0x140] sm:$0xff]
        %v228 = vld [vmem:[%s140 + $0x148] sm:$0xff]
        %v229 = vld [vmem:[%s140 + $0x150] sm:$0xff]
        %v230 = vld [vmem:[%s140 + $0x158] sm:$0xff]
        %v231 = vld [vmem:[%s140 + $0x160] sm:$0xff]
        %v232 = vld [vmem:[%s140 + $0x168] sm:$0xff]
        %v233 = vld [vmem:[%s140 + $0x170] sm:$0xff]
        %v234 = vld [vmem:[%s140 + $0x178] sm:$0xff]
        %v235 = vld [vmem:[%s140 + $0x180] sm:$0xff]
        %v236 = vld [vmem:[%s140 + $0x188] sm:$0xff]
        %v237 = vld [vmem:[%s140 + $0x190] sm:$0xff]
        %v238 = vld [vmem:[%s140 + $0x198] sm:$0xff]
        %v239 = vld [vmem:[%s140 + $0x1a0] sm:$0xff]
        %v240 = vld [vmem:[%s140 + $0x1a8] sm:$0xff]
        %v241 = vld [vmem:[%s140 + $0x1b0] sm:$0xff]
        %v242 = vld [vmem:[%s140 + $0x1b8] sm:$0xff]
        %v243 = vld [vmem:[%s140 + $0x1c0] sm:$0xff]
        %v244 = vld [vmem:[%s140 + $0x1c8] sm:$0xff]
        %v245 = vld [vmem:[%s140 + $0x1d0] sm:$0xff]
        %v246 = vld [vmem:[%s140 + $0x1d8] sm:$0xff]
        %v247 = vld [vmem:[%s140 + $0x1e0] sm:$0xff]
        %v248 = vld [vmem:[%s140 + $0x1e8] sm:$0xff]
        %v249 = vld [vmem:[%s140 + $0x1f0] sm:$0xff]
        %v250 = vld [vmem:[%s140 + $0x1f8] sm:$0xff]
        %v251 = vld [vmem:[%s140 + $0x200] sm:$0xff]
        %v252 = vld [vmem:[%s140 + $0x208] sm:$0xff]
        %v253 = vld [vmem:[%s140 + $0x210] sm:$0xff]
        %v254 = vld [vmem:[%s140 + $0x218] sm:$0xff]
        %v255 = vld [vmem:[%s140 + $0x220] sm:$0xff]
        %v256 = vld [vmem:[%s140 + $0x228] sm:$0xff]
        %v257 = vld [vmem:[%s140 + $0x230] sm:$0xff]
        %v258 = vld [vmem:[%s140 + $0x238] sm:$0xff]
        %v259 = vld [vmem:[%s140 + $0x240] sm:$0xff]
        %v260 = vld [vmem:[%s140 + $0x248] sm:$0xff]
        %v261 = vld [vmem:[%s140 + $0x250] sm:$0xff]
        %v262 = vld [vmem:[%s140 + $0x258] sm:$0xff]
        %v263 = vld [vmem:[%s140 + $0x260] sm:$0xff]
        %v264 = vld [vmem:[%s140 + $0x268] sm:$0xff]
        %v265 = vld [vmem:[%s140 + $0x270] sm:$0xff]
        %v266 = vld [vmem:[%s140 + $0x278] sm:$0xff]
        %v267 = vld [vmem:[%s140 + $0x280] sm:$0xff]
        %v268 = vld [vmem:[%s140 + $0x288] sm:$0xff]
        %v269 = vld [vmem:[%s140 + $0x290] sm:$0xff]
        %v270 = vld [vmem:[%s140 + $0x298] sm:$0xff]
        %v271 = vld [vmem:[%s140 + $0x2a0] sm:$0xff]
        %v272 = vld [vmem:[%s140 + $0x2a8] sm:$0xff]
        %v273 = vld [vmem:[%s140 + $0x2b0] sm:$0xff]
        %v274 = vld [vmem:[%s140 + $0x2b8] sm:$0xff]
        %v275 = vld [vmem:[%s140 + $0x2c0] sm:$0xff]
        %v276 = vld [vmem:[%s140 + $0x2c8] sm:$0xff]
        %v277 = vld [vmem:[%s140 + $0x2d0] sm:$0xff]
        %v278 = vld [vmem:[%s140 + $0x2d8] sm:$0xff]
        %v279 = vld [vmem:[%s140 + $0x2e0] sm:$0xff]
        %v280 = vld [vmem:[%s140 + $0x2e8] sm:$0xff]
        %v281 = vld [vmem:[%s140 + $0x2f0] sm:$0xff]
        %v282 = vld [vmem:[%s140 + $0x2f8] sm:$0xff]
        %v283 = vld [vmem:[%s140 + $0x300] sm:$0xff]
        %v284 = vld [vmem:[%s140 + $0x308] sm:$0xff]
        %v285 = vld [vmem:[%s140 + $0x310] sm:$0xff]
        %v286 = vld [vmem:[%s140 + $0x318] sm:$0xff]
        %v287 = vld [vmem:[%s140 + $0x320] sm:$0xff]
        %v288 = vld [vmem:[%s140 + $0x328] sm:$0xff]
        %v289 = vld [vmem:[%s140 + $0x330] sm:$0xff]
        %v290 = vld [vmem:[%s140 + $0x338] sm:$0xff]
        %v291 = vld [vmem:[%s140 + $0x340] sm:$0xff]
        %v292 = vld [vmem:[%s140 + $0x348] sm:$0xff]
        %v293 = vld [vmem:[%s140 + $0x350] sm:$0xff]
        %v294 = vld [vmem:[%s140 + $0x358] sm:$0xff]
        %v295 = vld [vmem:[%s140 + $0x360] sm:$0xff]
        %v296 = vld [vmem:[%s140 + $0x368] sm:$0xff]
        %v297 = vld [vmem:[%s140 + $0x370] sm:$0xff]
        %v298 = vld [vmem:[%s140 + $0x378] sm:$0xff]
        %v299 = vld [vmem:[%s140 + $0x380] sm:$0xff]
        %v300 = vld [vmem:[%s140 + $0x388] sm:$0xff]
        %v301 = vld [vmem:[%s140 + $0x390] sm:$0xff]
        %v302 = vld [vmem:[%s140 + $0x398] sm:$0xff]
        %v303 = vld [vmem:[%s140 + $0x3a0] sm:$0xff]
        %v304 = vld [vmem:[%s140 + $0x3a8] sm:$0xff]
        %v305 = vld [vmem:[%s140 + $0x3b0] sm:$0xff]
        %v306 = vld [vmem:[%s140 + $0x3b8] sm:$0xff]
        %v307 = vld [vmem:[%s140 + $0x3c0] sm:$0xff]
        %v308 = vld [vmem:[%s140 + $0x3c8] sm:$0xff]
        %v309 = vld [vmem:[%s140 + $0x3d0] sm:$0xff]
        %v310 = vld [vmem:[%s140 + $0x3d8] sm:$0xff]
        %v311 = vld [vmem:[%s140 + $0x3e0] sm:$0xff]
        %v312 = vld [vmem:[%s140 + $0x3e8] sm:$0xff]
        %v313 = vld [vmem:[%s140 + $0x3f0] sm:$0xff]
        %v314 = vld [vmem:[%s140 + $0x3f8] sm:$0xff]
        %v315 = vld [vmem:[%s140 + $0x400] sm:$0xff]
        %v316 = vld [vmem:[%s140 + $0x408] sm:$0xff]
        %v317 = vld [vmem:[%s140 + $0x410] sm:$0xff]
        %v318 = vld [vmem:[%s140 + $0x418] sm:$0xff]
        %v319 = vld [vmem:[%s140 + $0x420] sm:$0xff]
        %v320 = vld [vmem:[%s140 + $0x428] sm:$0xff]
        %v321 = vld [vmem:[%s140 + $0x430] sm:$0xff]
        %v322 = vld [vmem:[%s140 + $0x438] sm:$0xff]
        %v323 = vld [vmem:[%s140 + $0x440] sm:$0xff]
        %v324 = vld [vmem:[%s140 + $0x448] sm:$0xff]
        %v325 = vld [vmem:[%s140 + $0x450] sm:$0xff]
        %v326 = vld [vmem:[%s140 + $0x458] sm:$0xff]
        %v327 = vld [vmem:[%s140 + $0x460] sm:$0xff]
        %v328 = vld [vmem:[%s140 + $0x468] sm:$0xff]
        %v329 = vld [vmem:[%s140 + $0x470] sm:$0xff]
        %v330 = vld [vmem:[%s140 + $0x478] sm:$0xff]
        %v331 = vld [vmem:[%s140 + $0x480] sm:$0xff]
        %v332 = vld [vmem:[%s140 + $0x488] sm:$0xff]
        %v333 = vld [vmem:[%s140 + $0x490] sm:$0xff]
        %v334 = vld [vmem:[%s140 + $0x498] sm:$0xff]
        %v335 = vld [vmem:[%s140 + $0x4a0] sm:$0xff]
        %v336 = vld [vmem:[%s140 + $0x4a8] sm:$0xff]
        %v337 = vld [vmem:[%s140 + $0x4b0] sm:$0xff]
        %v338 = vld [vmem:[%s140 + $0x4b8] sm:$0xff]
        %v339 = vld [vmem:[%s140 + $0x4c0] sm:$0xff]
        %v340 = vld [vmem:[%s140 + $0x4c8] sm:$0xff]
        %v341 = vld [vmem:[%s140 + $0x4d0] sm:$0xff]
        %v342 = vld [vmem:[%s140 + $0x4d8] sm:$0xff]
        %v343 = vld [vmem:[%s140 + $0x4e0] sm:$0xff]
        %v344 = vld [vmem:[%s140 + $0x4e8] sm:$0xff]
        %v345 = vld [vmem:[%s140 + $0x4f0] sm:$0xff]
        %v346 = vld [vmem:[%s140 + $0x4f8] sm:$0xff]
        %v347 = vld [vmem:[%s140 + $0x500] sm:$0xff]
        %v348 = vld [vmem:[%s140 + $0x508] sm:$0xff]
        %v349 = vld [vmem:[%s140 + $0x510] sm:$0xff]
        %v350 = vld [vmem:[%s140 + $0x518] sm:$0xff]
        %v351 = vld [vmem:[%s140 + $0x520] sm:$0xff]
        %v352 = vld [vmem:[%s140 + $0x528] sm:$0xff]
        %v353 = vld [vmem:[%s140 + $0x530] sm:$0xff]
        %v354 = vld [vmem:[%s140 + $0x538] sm:$0xff]
        %v355 = vld [vmem:[%s140 + $0x540] sm:$0xff]
        %v356 = vld [vmem:[%s140 + $0x548] sm:$0xff]
        %v357 = vld [vmem:[%s140 + $0x550] sm:$0xff]
        %v358 = vld [vmem:[%s140 + $0x558] sm:$0xff]
        %v359 = vld [vmem:[%s140 + $0x560] sm:$0xff]
        %v360 = vld [vmem:[%s140 + $0x568] sm:$0xff]
        %v361 = vld [vmem:[%s140 + $0x570] sm:$0xff]
        %v362 = vld [vmem:[%s140 + $0x578] sm:$0xff]
        %v363 = vld [vmem:[%s140 + $0x580] sm:$0xff]
        %v364 = vld [vmem:[%s140 + $0x588] sm:$0xff]
        %v365 = vld [vmem:[%s140 + $0x590] sm:$0xff]
        %v366 = vld [vmem:[%s140 + $0x598] sm:$0xff]
        %v367 = vld [vmem:[%s140 + $0x5a0] sm:$0xff]
        %v368 = vld [vmem:[%s140 + $0x5a8] sm:$0xff]
        %v369 = vld [vmem:[%s140 + $0x5b0] sm:$0xff]
        %v370 = vld [vmem:[%s140 + $0x5b8] sm:$0xff]
        %v371 = vld [vmem:[%s140 + $0x5c0] sm:$0xff]
        %v372 = vld [vmem:[%s140 + $0x5c8] sm:$0xff]
        %v373 = vld [vmem:[%s140 + $0x5d0] sm:$0xff]
        %v374 = vld [vmem:[%s140 + $0x5d8] sm:$0xff]
        %v375 = vld [vmem:[%s140 + $0x5e0] sm:$0xff]
        %v376 = vld [vmem:[%s140 + $0x5e8] sm:$0xff]
        %v377 = vld [vmem:[%s140 + $0x5f0] sm:$0xff]
        %v378 = vld [vmem:[%s140 + $0x5f8] sm:$0xff]
        %v379 = vld [vmem:[%s140 + $0x600] sm:$0xff]
        %v380 = vld [vmem:[%s140 + $0x608] sm:$0xff]
        %v381 = vld [vmem:[%s140 + $0x610] sm:$0xff]
        %v382 = vld [vmem:[%s140 + $0x618] sm:$0xff]
        %v383 = vld [vmem:[%s140 + $0x620] sm:$0xff]
        %v384 = vld [vmem:[%s140 + $0x628] sm:$0xff]
        %v385 = vld [vmem:[%s140 + $0x630] sm:$0xff]
        %v386 = vld [vmem:[%s140 + $0x638] sm:$0xff]
        %v387 = vld [vmem:[%s140 + $0x640] sm:$0xff]
        %v388 = vld [vmem:[%s140 + $0x648] sm:$0xff]
        %v389 = vld [vmem:[%s140 + $0x650] sm:$0xff]
        %v390 = vld [vmem:[%s140 + $0x658] sm:$0xff]
        %v391 = vld [vmem:[%s140 + $0x660] sm:$0xff]
        %v392 = vld [vmem:[%s140 + $0x668] sm:$0xff]
        %v393 = vld [vmem:[%s140 + $0x670] sm:$0xff]
        %v394 = vld [vmem:[%s140 + $0x678] sm:$0xff]
        %v395 = vld [vmem:[%s140 + $0x680] sm:$0xff]
        %v396 = vld [vmem:[%s140 + $0x688] sm:$0xff]
        %v397 = vld [vmem:[%s140 + $0x690] sm:$0xff]
        %v398 = vld [vmem:[%s140 + $0x698] sm:$0xff]
        %v399 = vld [vmem:[%s140 + $0x6a0] sm:$0xff]
        %v400 = vld [vmem:[%s140 + $0x6a8] sm:$0xff]
        %v401 = vld [vmem:[%s140 + $0x6b0] sm:$0xff]
        %v402 = vld [vmem:[%s140 + $0x6b8] sm:$0xff]
        %v403 = vld [vmem:[%s140 + $0x6c0] sm:$0xff]
        %v404 = vld [vmem:[%s140 + $0x6c8] sm:$0xff]
        %v405 = vld [vmem:[%s140 + $0x6d0] sm:$0xff]
        %v406 = vld [vmem:[%s140 + $0x6d8] sm:$0xff]
        %v407 = vld [vmem:[%s140 + $0x6e0] sm:$0xff]
        %v408 = vld [vmem:[%s140 + $0x6e8] sm:$0xff]
        %v409 = vld [vmem:[%s140 + $0x6f0] sm:$0xff]
        %v410 = vld [vmem:[%s140 + $0x6f8] sm:$0xff]
        %v411 = vld [vmem:[%s140 + $0x700] sm:$0xff]
        %v412 = vld [vmem:[%s140 + $0x708] sm:$0xff]
        %v413 = vld [vmem:[%s140 + $0x710] sm:$0xff]
        %v414 = vld [vmem:[%s140 + $0x718] sm:$0xff]
        %v415 = vld [vmem:[%s140 + $0x720] sm:$0xff]
        %v416 = vld [vmem:[%s140 + $0x728] sm:$0xff]
        %v417 = vld [vmem:[%s140 + $0x730] sm:$0xff]
        %v418 = vld [vmem:[%s140 + $0x738] sm:$0xff]
        %v419 = vld [vmem:[%s140 + $0x740] sm:$0xff]
        %v420 = vld [vmem:[%s140 + $0x748] sm:$0xff]
        %v421 = vld [vmem:[%s140 + $0x750] sm:$0xff]
        %v422 = vld [vmem:[%s140 + $0x758] sm:$0xff]
        %v423 = vld [vmem:[%s140 + $0x760] sm:$0xff]
        %v424 = vld [vmem:[%s140 + $0x768] sm:$0xff]
        %v425 = vld [vmem:[%s140 + $0x770] sm:$0xff]
        %v426 = vld [vmem:[%s140 + $0x778] sm:$0xff]
        %v427 = vld [vmem:[%s140 + $0x780] sm:$0xff]
        %v428 = vld [vmem:[%s140 + $0x788] sm:$0xff]
        %v429 = vld [vmem:[%s140 + $0x790] sm:$0xff]
        %v430 = vld [vmem:[%s140 + $0x798] sm:$0xff]
        %v431 = vld [vmem:[%s140 + $0x7a0] sm:$0xff]
        %v432 = vld [vmem:[%s140 + $0x7a8] sm:$0xff]
        %v433 = vld [vmem:[%s140 + $0x7b0] sm:$0xff]
        %v434 = vld [vmem:[%s140 + $0x7b8] sm:$0xff]
        %v435 = vld [vmem:[%s140 + $0x7c0] sm:$0xff]
        %v436 = vld [vmem:[%s140 + $0x7c8] sm:$0xff]
        %v437 = vld [vmem:[%s140 + $0x7d0] sm:$0xff]
        %v438 = vld [vmem:[%s140 + $0x7d8] sm:$0xff]
        %v439 = vld [vmem:[%s140 + $0x7e0] sm:$0xff]
        %v440 = vld [vmem:[%s140 + $0x7e8] sm:$0xff]
        %v441 = vld [vmem:[%s140 + $0x7f0] sm:$0xff]
        %v442 = vld [vmem:[%s140 + $0x7f8] sm:$0xff]
        %v443 = vld [vmem:[%s140 + $0x800] sm:$0xff]
        %v444 = vld [vmem:[%s140 + $0x808] sm:$0xff]
        %v445 = vld [vmem:[%s140 + $0x810] sm:$0xff]
        %v446 = vld [vmem:[%s140 + $0x818] sm:$0xff]
        %v447 = vld [vmem:[%s140 + $0x820] sm:$0xff]
        %v448 = vld [vmem:[%s140 + $0x828] sm:$0xff]
        %v449 = vld [vmem:[%s140 + $0x830] sm:$0xff]
        %v450 = vld [vmem:[%s140 + $0x838] sm:$0xff]
        %v451 = vld [vmem:[%s140 + $0x840] sm:$0xff]
        %v452 = vld [vmem:[%s140 + $0x848] sm:$0xff]
        %v453 = vld [vmem:[%s140 + $0x850] sm:$0xff]
        %v454 = vld [vmem:[%s140 + $0x858] sm:$0xff]
        %v455 = vld [vmem:[%s140 + $0x860] sm:$0xff]
        %v456 = vld [vmem:[%s140 + $0x868] sm:$0xff]
        %v457 = vld [vmem:[%s140 + $0x870] sm:$0xff]
        %v458 = vld [vmem:[%s140 + $0x878] sm:$0xff]
        %v459 = vld [vmem:[%s140 + $0x880] sm:$0xff]
        %v460 = vld [vmem:[%s140 + $0x888] sm:$0xff]
        %v461 = vld [vmem:[%s140 + $0x890] sm:$0xff]
        %v462 = vld [vmem:[%s140 + $0x898] sm:$0xff]
        %v463 = vld [vmem:[%s140 + $0x8a0] sm:$0xff]
        %v464 = vld [vmem:[%s140 + $0x8a8] sm:$0xff]
        %v465 = vld [vmem:[%s140 + $0x8b0] sm:$0xff]
        %v466 = vld [vmem:[%s140 + $0x8b8] sm:$0xff]
        %v467 = vld [vmem:[%s140 + $0x8c0] sm:$0xff]
        %v468 = vld [vmem:[%s140 + $0x8c8] sm:$0xff]
        %v469 = vld [vmem:[%s140 + $0x8d0] sm:$0xff]
        %v470 = vld [vmem:[%s140 + $0x8d8] sm:$0xff]
        %v471 = vld [vmem:[%s140 + $0x8e0] sm:$0xff]
        %v472 = vld [vmem:[%s140 + $0x8e8] sm:$0xff]
        %v473 = vld [vmem:[%s140 + $0x8f0] sm:$0xff]
        %v474 = vld [vmem:[%s140 + $0x8f8] sm:$0xff]
        %v475 = vld [vmem:[%s140 + $0x900] sm:$0xff]
        %v476 = vld [vmem:[%s140 + $0x908] sm:$0xff]
        %v477 = vld [vmem:[%s140 + $0x910] sm:$0xff]
        %v478 = vld [vmem:[%s140 + $0x918] sm:$0xff]
        %v479 = vld [vmem:[%s140 + $0x920] sm:$0xff]
        %v480 = vld [vmem:[%s140 + $0x928] sm:$0xff]
        %v481 = vld [vmem:[%s140 + $0x930] sm:$0xff]
        %v482 = vld [vmem:[%s140 + $0x938] sm:$0xff]
        %v483 = vld [vmem:[%s140 + $0x940] sm:$0xff]
        %v484 = vld [vmem:[%s140 + $0x948] sm:$0xff]
        %v485 = vld [vmem:[%s140 + $0x950] sm:$0xff]
        %v486 = vld [vmem:[%s140 + $0x958] sm:$0xff]
        %v487 = vld [vmem:[%s140 + $0x960] sm:$0xff]
        %v488 = vld [vmem:[%s140 + $0x968] sm:$0xff]
        %v489 = vld [vmem:[%s140 + $0x970] sm:$0xff]
        %v490 = vld [vmem:[%s140 + $0x978] sm:$0xff]
        %v491 = vld [vmem:[%s140 + $0x980] sm:$0xff]
        %v492 = vld [vmem:[%s140 + $0x988] sm:$0xff]
        %v493 = vld [vmem:[%s140 + $0x990] sm:$0xff]
        %v494 = vld [vmem:[%s140 + $0x998] sm:$0xff]
        %v495 = vld [vmem:[%s140 + $0x9a0] sm:$0xff]
        %v496 = vld [vmem:[%s140 + $0x9a8] sm:$0xff]
        %v497 = vld [vmem:[%s140 + $0x9b0] sm:$0xff]
        %v498 = vld [vmem:[%s140 + $0x9b8] sm:$0xff]
        %v499 = vld [vmem:[%s140 + $0x9c0] sm:$0xff]
        %v500 = vld [vmem:[%s140 + $0x9c8] sm:$0xff]
        %v501 = vld [vmem:[%s140 + $0x9d0] sm:$0xff]
        %v502 = vld [vmem:[%s140 + $0x9d8] sm:$0xff]
        %v503 = vld [vmem:[%s140 + $0x9e0] sm:$0xff]
        %v504 = vld [vmem:[%s140 + $0x9e8] sm:$0xff]
        %v505 = vld [vmem:[%s140 + $0x9f0] sm:$0xff]
        %v506 = vld [vmem:[%s140 + $0x9f8] sm:$0xff]
        %v507 = vld [vmem:[%s140 + $0xa00] sm:$0xff]
        %v508 = vld [vmem:[%s140 + $0xa08] sm:$0xff]
        %v509 = vld [vmem:[%s140 + $0xa10] sm:$0xff]
        %v510 = vld [vmem:[%s140 + $0xa18] sm:$0xff]
        %v511 = vld [vmem:[%s140 + $0xa20] sm:$0xff]
        %v512 = vld [vmem:[%s140 + $0xa28] sm:$0xff]
        %v513 = vld [vmem:[%s140 + $0xa30] sm:$0xff]
        %v514 = vld [vmem:[%s140 + $0xa38] sm:$0xff]
        %v515 = vld [vmem:[%s140 + $0xa40] sm:$0xff]
        %v516 = vld [vmem:[%s140 + $0xa48] sm:$0xff]
        %v517 = vld [vmem:[%s140 + $0xa50] sm:$0xff]
        %v518 = vld [vmem:[%s140 + $0xa58] sm:$0xff]
        %v519 = vld [vmem:[%s140 + $0xa60] sm:$0xff]
        %v520 = vld [vmem:[%s140 + $0xa68] sm:$0xff]
        %v521 = vld [vmem:[%s140 + $0xa70] sm:$0xff]
        %v522 = vld [vmem:[%s140 + $0xa78] sm:$0xff]
        %v523 = vld [vmem:[%s140 + $0xa80] sm:$0xff]
        %v524 = vld [vmem:[%s140 + $0xa88] sm:$0xff]
        %v525 = vld [vmem:[%s140 + $0xa90] sm:$0xff]
        %v526 = vld [vmem:[%s140 + $0xa98] sm:$0xff]
        %v527 = vld [vmem:[%s140 + $0xaa0] sm:$0xff]
        %v528 = vld [vmem:[%s140 + $0xaa8] sm:$0xff]
        %v529 = vld [vmem:[%s140 + $0xab0] sm:$0xff]
        %v530 = vld [vmem:[%s140 + $0xab8] sm:$0xff]
        %v531 = vld [vmem:[%s140 + $0xac0] sm:$0xff]
        %v532 = vld [vmem:[%s140 + $0xac8] sm:$0xff]
        %v533 = vld [vmem:[%s140 + $0xad0] sm:$0xff]
        %v534 = vld [vmem:[%s140 + $0xad8] sm:$0xff]
        %v535 = vld [vmem:[%s140 + $0xae0] sm:$0xff]
        %v536 = vld [vmem:[%s140 + $0xae8] sm:$0xff]
        %v537 = vld [vmem:[%s140 + $0xaf0] sm:$0xff]
        %v538 = vld [vmem:[%s140 + $0xaf8] sm:$0xff]
        %v539 = vld [vmem:[%s140 + $0xb00] sm:$0xff]
        %v540 = vld [vmem:[%s140 + $0xb08] sm:$0xff]
        %v541 = vld [vmem:[%s140 + $0xb10] sm:$0xff]
        %v542 = vld [vmem:[%s140 + $0xb18] sm:$0xff]
        %v543 = vld [vmem:[%s140 + $0xb20] sm:$0xff]
        %v544 = vld [vmem:[%s140 + $0xb28] sm:$0xff]
        %v545 = vld [vmem:[%s140 + $0xb30] sm:$0xff]
        %v546 = vld [vmem:[%s140 + $0xb38] sm:$0xff]
        %v547 = vld [vmem:[%s140 + $0xb40] sm:$0xff]
        %v548 = vld [vmem:[%s140 + $0xb48] sm:$0xff]
        %v549 = vld [vmem:[%s140 + $0xb50] sm:$0xff]
        %v550 = vld [vmem:[%s140 + $0xb58] sm:$0xff]
        %v551 = vld [vmem:[%s140 + $0xb60] sm:$0xff]
        %v552 = vld [vmem:[%s140 + $0xb68] sm:$0xff]
        %v553 = vld [vmem:[%s140 + $0xb70] sm:$0xff]
        %v554 = vld [vmem:[%s140 + $0xb78] sm:$0xff]
        %v555 = vld [vmem:[%s140 + $0xb80] sm:$0xff]
        %v556 = vld [vmem:[%s140 + $0xb88] sm:$0xff]
        %v557 = vld [vmem:[%s140 + $0xb90] sm:$0xff]
        %v558 = vld [vmem:[%s140 + $0xb98] sm:$0xff]
        %v559 = vld [vmem:[%s140 + $0xba0] sm:$0xff]
        %v560 = vld [vmem:[%s140 + $0xba8] sm:$0xff]
        %v561 = vld [vmem:[%s140 + $0xbb0] sm:$0xff]
        %v562 = vld [vmem:[%s140 + $0xbb8] sm:$0xff]
        %v563 = vld [vmem:[%s140 + $0xbc0] sm:$0xff]
        %v564 = vld [vmem:[%s140 + $0xbc8] sm:$0xff]
        %v565 = vld [vmem:[%s140 + $0xbd0] sm:$0xff]
        %v566 = vld [vmem:[%s140 + $0xbd8] sm:$0xff]
        %v567 = vld [vmem:[%s140 + $0xbe0] sm:$0xff]
        %v568 = vld [vmem:[%s140 + $0xbe8] sm:$0xff]
        %v569 = vld [vmem:[%s140 + $0xbf0] sm:$0xff]
        %v570 = vld [vmem:[%s140 + $0xbf8] sm:$0xff]
        %v571 = vld [vmem:[%s140 + $0xc00] sm:$0xff]
        %v572 = vld [vmem:[%s140 + $0xc08] sm:$0xff]
        %v573 = vld [vmem:[%s140 + $0xc10] sm:$0xff]
        %v574 = vld [vmem:[%s140 + $0xc18] sm:$0xff]
        %v575 = vld [vmem:[%s140 + $0xc20] sm:$0xff]
        %v576 = vld [vmem:[%s140 + $0xc28] sm:$0xff]
        %v577 = vld [vmem:[%s140 + $0xc30] sm:$0xff]
        %v578 = vld [vmem:[%s140 + $0xc38] sm:$0xff]
        %v579 = vld [vmem:[%s140 + $0xc40] sm:$0xff]
        %v580 = vld [vmem:[%s140 + $0xc48] sm:$0xff]
        %v581 = vld [vmem:[%s140 + $0xc50] sm:$0xff]
        %v582 = vld [vmem:[%s140 + $0xc58] sm:$0xff]
        %v583 = vld [vmem:[%s140 + $0xc60] sm:$0xff]
        %v584 = vld [vmem:[%s140 + $0xc68] sm:$0xff]
        %v585 = vld [vmem:[%s140 + $0xc70] sm:$0xff]
        %v586 = vld [vmem:[%s140 + $0xc78] sm:$0xff]
        %v587 = vld [vmem:[%s140 + $0xc80] sm:$0xff]
        %v588 = vld [vmem:[%s140 + $0xc88] sm:$0xff]
        %v589 = vld [vmem:[%s140 + $0xc90] sm:$0xff]
        %v590 = vld [vmem:[%s140 + $0xc98] sm:$0xff]
        %v591 = vld [vmem:[%s140 + $0xca0] sm:$0xff]
        %v592 = vld [vmem:[%s140 + $0xca8] sm:$0xff]
        %v593 = vld [vmem:[%s140 + $0xcb0] sm:$0xff]
        %v594 = vld [vmem:[%s140 + $0xcb8] sm:$0xff]
        %v595 = vld [vmem:[%s140 + $0xcc0] sm:$0xff]
        %v596 = vld [vmem:[%s140 + $0xcc8] sm:$0xff]
        %v597 = vld [vmem:[%s140 + $0xcd0] sm:$0xff]
        %v598 = vld [vmem:[%s140 + $0xcd8] sm:$0xff]
        %v599 = vld [vmem:[%s140 + $0xce0] sm:$0xff]
        %v600 = vld [vmem:[%s140 + $0xce8] sm:$0xff]
        %v601 = vld [vmem:[%s140 + $0xcf0] sm:$0xff]
        %v602 = vld [vmem:[%s140 + $0xcf8] sm:$0xff]
        %v603 = vld [vmem:[%s140 + $0xd00] sm:$0xff]
        %v604 = vld [vmem:[%s140 + $0xd08] sm:$0xff]
        %v605 = vld [vmem:[%s140 + $0xd10] sm:$0xff]
        %v606 = vld [vmem:[%s140 + $0xd18] sm:$0xff]
        %v607 = vld [vmem:[%s140 + $0xd20] sm:$0xff]
        %v608 = vld [vmem:[%s140 + $0xd28] sm:$0xff]
        %v609 = vld [vmem:[%s140 + $0xd30] sm:$0xff]
        %v610 = vld [vmem:[%s140 + $0xd38] sm:$0xff]
        %v611 = vld [vmem:[%s140 + $0xd40] sm:$0xff]
        %v612 = vld [vmem:[%s140 + $0xd48] sm:$0xff]
        %v613 = vld [vmem:[%s140 + $0xd50] sm:$0xff]
        %v614 = vld [vmem:[%s140 + $0xd58] sm:$0xff]
        %v615 = vld [vmem:[%s140 + $0xd60] sm:$0xff]
        %v616 = vld [vmem:[%s140 + $0xd68] sm:$0xff]
        %v617 = vld [vmem:[%s140 + $0xd70] sm:$0xff]
        %v618 = vld [vmem:[%s140 + $0xd78] sm:$0xff]
        %v619 = vld [vmem:[%s140 + $0xd80] sm:$0xff]
        %v620 = vld [vmem:[%s140 + $0xd88] sm:$0xff]
        %v621 = vld [vmem:[%s140 + $0xd90] sm:$0xff]
        %v622 = vld [vmem:[%s140 + $0xd98] sm:$0xff]
        %v623 = vld [vmem:[%s140 + $0xda0] sm:$0xff]
        %v624 = vld [vmem:[%s140 + $0xda8] sm:$0xff]
        %v625 = vld [vmem:[%s140 + $0xdb0] sm:$0xff]
        %v626 = vld [vmem:[%s140 + $0xdb8] sm:$0xff]
        %v627 = vld [vmem:[%s140 + $0xdc0] sm:$0xff]
        %v628 = vld [vmem:[%s140 + $0xdc8] sm:$0xff]
        %v629 = vld [vmem:[%s140 + $0xdd0] sm:$0xff]
        %v630 = vld [vmem:[%s140 + $0xdd8] sm:$0xff]
        %v631 = vld [vmem:[%s140 + $0xde0] sm:$0xff]
        %v632 = vld [vmem:[%s140 + $0xde8] sm:$0xff]
        %v633 = vld [vmem:[%s140 + $0xdf0] sm:$0xff]
        %v634 = vld [vmem:[%s140 + $0xdf8] sm:$0xff]
        %v635 = vld [vmem:[%s140 + $0xe00] sm:$0xff]
        %v636 = vld [vmem:[%s140 + $0xe08] sm:$0xff]
        %v637 = vld [vmem:[%s140 + $0xe10] sm:$0xff]
        %v638 = vld [vmem:[%s140 + $0xe18] sm:$0xff]
        %v639 = vld [vmem:[%s140 + $0xe20] sm:$0xff]
        %v640 = vld [vmem:[%s140 + $0xe28] sm:$0xff]
        %v641 = vld [vmem:[%s140 + $0xe30] sm:$0xff]
        %v642 = vld [vmem:[%s140 + $0xe38] sm:$0xff]
        %v643 = vld [vmem:[%s140 + $0xe40] sm:$0xff]
        %v644 = vld [vmem:[%s140 + $0xe48] sm:$0xff]
        %v645 = vld [vmem:[%s140 + $0xe50] sm:$0xff]
        %v646 = vld [vmem:[%s140 + $0xe58] sm:$0xff]
        %v647 = vld [vmem:[%s140 + $0xe60] sm:$0xff]
        %v648 = vld [vmem:[%s140 + $0xe68] sm:$0xff]
        %v649 = vld [vmem:[%s140 + $0xe70] sm:$0xff]
        %v650 = vld [vmem:[%s140 + $0xe78] sm:$0xff]
        %v651 = vld [vmem:[%s140 + $0xe80] sm:$0xff]
        %v652 = vld [vmem:[%s140 + $0xe88] sm:$0xff]
        %v653 = vld [vmem:[%s140 + $0xe90] sm:$0xff]
        %v654 = vld [vmem:[%s140 + $0xe98] sm:$0xff]
        %v655 = vld [vmem:[%s140 + $0xea0] sm:$0xff]
        %v656 = vld [vmem:[%s140 + $0xea8] sm:$0xff]
        %v657 = vld [vmem:[%s140 + $0xeb0] sm:$0xff]
        %v658 = vld [vmem:[%s140 + $0xeb8] sm:$0xff]
        %v659 = vld [vmem:[%s140 + $0xec0] sm:$0xff]
        %v660 = vld [vmem:[%s140 + $0xec8] sm:$0xff]
        %v661 = vld [vmem:[%s140 + $0xed0] sm:$0xff]
        %v662 = vld [vmem:[%s140 + $0xed8] sm:$0xff]
        %v663 = vld [vmem:[%s140 + $0xee0] sm:$0xff]
        %v664 = vld [vmem:[%s140 + $0xee8] sm:$0xff]
        %v665 = vld [vmem:[%s140 + $0xef0] sm:$0xff]
        %v666 = vld [vmem:[%s140 + $0xef8] sm:$0xff]
        %v667 = vld [vmem:[%s140 + $0xf00] sm:$0xff]
        %v668 = vld [vmem:[%s140 + $0xf08] sm:$0xff]
        %v669 = vld [vmem:[%s140 + $0xf10] sm:$0xff]
        %v670 = vld [vmem:[%s140 + $0xf18] sm:$0xff]
        %v671 = vld [vmem:[%s140 + $0xf20] sm:$0xff]
        %v672 = vld [vmem:[%s140 + $0xf28] sm:$0xff]
        %v673 = vld [vmem:[%s140 + $0xf30] sm:$0xff]
        %v674 = vld [vmem:[%s140 + $0xf38] sm:$0xff]
        %v675 = vld [vmem:[%s140 + $0xf40] sm:$0xff]
        %v676 = vld [vmem:[%s140 + $0xf48] sm:$0xff]
        %v677 = vld [vmem:[%s140 + $0xf50] sm:$0xff]
        %v678 = vld [vmem:[%s140 + $0xf58] sm:$0xff]
        %v679 = vld [vmem:[%s140 + $0xf60] sm:$0xff]
        %v680 = vld [vmem:[%s140 + $0xf68] sm:$0xff]
        %v681 = vld [vmem:[%s140 + $0xf70] sm:$0xff]
        %v682 = vld [vmem:[%s140 + $0xf78] sm:$0xff]
        %v683 = vld [vmem:[%s140 + $0xf80] sm:$0xff]
        %v684 = vld [vmem:[%s140 + $0xf88] sm:$0xff]
        %v685 = vld [vmem:[%s140 + $0xf90] sm:$0xff]
        %v686 = vld [vmem:[%s140 + $0xf98] sm:$0xff]
        %v687 = vld [vmem:[%s140 + $0xfa0] sm:$0xff]
        %v688 = vld [vmem:[%s140 + $0xfa8] sm:$0xff]
        %v689 = vld [vmem:[%s140 + $0xfb0] sm:$0xff]
        %v690 = vld [vmem:[%s140 + $0xfb8] sm:$0xff]
        %v691 = vld [vmem:[%s140 + $0xfc0] sm:$0xff]
        %v692 = vld [vmem:[%s140 + $0xfc8] sm:$0xff]
        %v693 = vld [vmem:[%s140 + $0xfd0] sm:$0xff]
        %v694 = vld [vmem:[%s140 + $0xfd8] sm:$0xff]
        %v695 = vld [vmem:[%s140 + $0xfe0] sm:$0xff]
        %v696 = vld [vmem:[%s140 + $0xfe8] sm:$0xff]
        %v697 = vld [vmem:[%s140 + $0xff0] sm:$0xff]
        %v698 = vld [vmem:[%s140 + $0xff8] sm:$0xff]
        %v699 = vlaneseq
        %v700 = vshrl.u32 %v699, 7
        %v701 = vadd.s32 %v700, 8
        %v702 = vadd.s32 %v700, 16
        %v703 = vadd.s32 %v700, 24
        %v704 = vadd.s32 %v700, 32
        %v705 = vadd.s32 %v700, 40
        %v706 = vadd.s32 %v700, 48
        %v707 = vadd.s32 %v700, 56
        %v708 = vadd.s32 %v700, 64
        %v709 = vadd.s32 %v700, 72
        %v710 = vadd.s32 %v700, 80
        %v711 = vadd.s32 %v700, 88
        %v712 = vadd.s32 %v700, 96
        %v713 = vadd.s32 %v700, 104
        %v714 = vadd.s32 %v700, 112
        %v715 = vadd.s32 %v700, 120
        %v716 = vadd.s32 %v700, 128
        %v717 = vadd.s32 %v700, 136
        %v718 = vadd.s32 %v700, 144
        %v719 = vadd.s32 %v700, 152
        %v720 = vadd.s32 %v700, 160
        %v721 = vadd.s32 %v700, 168
        %v722 = vadd.s32 %v700, 176
        %v723 = vadd.s32 %v700, 184
        %v724 = vadd.s32 %v700, 192
        %v725 = vadd.s32 %v700, 200
        %v726 = vadd.s32 %v700, 208
        %v727 = vadd.s32 %v700, 216
        %v728 = vadd.s32 %v700, 224
        %v729 = vadd.s32 %v700, 232
        %v730 = vadd.s32 %v700, 240
        %v731 = vadd.s32 %v700, 248
        %v732 = vadd.s32 %v700, 256
        %v733 = vadd.s32 %v700, 264
        %v734 = vadd.s32 %v700, 272
        %v735 = vadd.s32 %v700, 280
        %v736 = vadd.s32 %v700, 288
        %v737 = vadd.s32 %v700, 296
        %v738 = vadd.s32 %v700, 304
        %v739 = vadd.s32 %v700, 312
        %v740 = vadd.s32 %v700, 320
        %v741 = vadd.s32 %v700, 328
        %v742 = vadd.s32 %v700, 336
        %v743 = vadd.s32 %v700, 344
        %v744 = vadd.s32 %v700, 352
        %v745 = vadd.s32 %v700, 360
        %v746 = vadd.s32 %v700, 368
        %v747 = vadd.s32 %v700, 376
        %v748 = vadd.s32 %v700, 384
        %v749 = vadd.s32 %v700, 392
        %v750 = vadd.s32 %v700, 400
        %v751 = vadd.s32 %v700, 408
        %v752 = vadd.s32 %v700, 416
        %v753 = vadd.s32 %v700, 424
        %v754 = vadd.s32 %v700, 432
        %v755 = vadd.s32 %v700, 440
        %v756 = vadd.s32 %v700, 448
        %v757 = vadd.s32 %v700, 456
        %v758 = vadd.s32 %v700, 464
        %v759 = vadd.s32 %v700, 472
        %v760 = vadd.s32 %v700, 480
        %v761 = vadd.s32 %v700, 488
        %v762 = vadd.s32 %v700, 496
        %v763 = vadd.s32 %v700, 504
        %s764 = smul.u32 %s22, 512
        %v765 = vstv %s764
        %v766 = vadd.s32 %v700, %v765
        %v767 = vadd.s32 %v701, %v765
        %v768 = vadd.s32 %v702, %v765
        %v769 = vadd.s32 %v703, %v765
        %v770 = vadd.s32 %v704, %v765
        %v771 = vadd.s32 %v705, %v765
        %v772 = vadd.s32 %v706, %v765
        %v773 = vadd.s32 %v707, %v765
        %v774 = vadd.s32 %v708, %v765
        %v775 = vadd.s32 %v709, %v765
        %v776 = vadd.s32 %v710, %v765
        %v777 = vadd.s32 %v711, %v765
        %v778 = vadd.s32 %v712, %v765
        %v779 = vadd.s32 %v713, %v765
        %v780 = vadd.s32 %v714, %v765
        %v781 = vadd.s32 %v715, %v765
        %v782 = vadd.s32 %v716, %v765
        %v783 = vadd.s32 %v717, %v765
        %v784 = vadd.s32 %v718, %v765
        %v785 = vadd.s32 %v719, %v765
        %v786 = vadd.s32 %v720, %v765
        %v787 = vadd.s32 %v721, %v765
        %v788 = vadd.s32 %v722, %v765
        %v789 = vadd.s32 %v723, %v765
        %v790 = vadd.s32 %v724, %v765
        %v791 = vadd.s32 %v725, %v765
        %v792 = vadd.s32 %v726, %v765
        %v793 = vadd.s32 %v727, %v765
        %v794 = vadd.s32 %v728, %v765
        %v795 = vadd.s32 %v729, %v765
        %v796 = vadd.s32 %v730, %v765
        %v797 = vadd.s32 %v731, %v765
        %v798 = vadd.s32 %v732, %v765
        %v799 = vadd.s32 %v733, %v765
        %v800 = vadd.s32 %v734, %v765
        %v801 = vadd.s32 %v735, %v765
        %v802 = vadd.s32 %v736, %v765
        %v803 = vadd.s32 %v737, %v765
        %v804 = vadd.s32 %v738, %v765
        %v805 = vadd.s32 %v739, %v765
        %v806 = vadd.s32 %v740, %v765
        %v807 = vadd.s32 %v741, %v765
        %v808 = vadd.s32 %v742, %v765
        %v809 = vadd.s32 %v743, %v765
        %v810 = vadd.s32 %v744, %v765
        %v811 = vadd.s32 %v745, %v765
        %v812 = vadd.s32 %v746, %v765
        %v813 = vadd.s32 %v747, %v765
        %v814 = vadd.s32 %v748, %v765
        %v815 = vadd.s32 %v749, %v765
        %v816 = vadd.s32 %v750, %v765
        %v817 = vadd.s32 %v751, %v765
        %v818 = vadd.s32 %v752, %v765
        %v819 = vadd.s32 %v753, %v765
        %v820 = vadd.s32 %v754, %v765
        %v821 = vadd.s32 %v755, %v765
        %v822 = vadd.s32 %v756, %v765
        %v823 = vadd.s32 %v757, %v765
        %v824 = vadd.s32 %v758, %v765
        %v825 = vadd.s32 %v759, %v765
        %v826 = vadd.s32 %v760, %v765
        %v827 = vadd.s32 %v761, %v765
        %v828 = vadd.s32 %v762, %v765
        %v829 = vadd.s32 %v763, %v765
        %vm830 = vcmp.lt.s32.totalorder %v766, 520
        %vm831 = vcmp.lt.s32.totalorder %v767, 520
        %vm832 = vcmp.lt.s32.totalorder %v768, 520
        %vm833 = vcmp.lt.s32.totalorder %v769, 520
        %vm834 = vcmp.lt.s32.totalorder %v770, 520
        %vm835 = vcmp.lt.s32.totalorder %v771, 520
        %vm836 = vcmp.lt.s32.totalorder %v772, 520
        %vm837 = vcmp.lt.s32.totalorder %v773, 520
        %vm838 = vcmp.lt.s32.totalorder %v774, 520
        %vm839 = vcmp.lt.s32.totalorder %v775, 520
        %vm840 = vcmp.lt.s32.totalorder %v776, 520
        %vm841 = vcmp.lt.s32.totalorder %v777, 520
        %vm842 = vcmp.lt.s32.totalorder %v778, 520
        %vm843 = vcmp.lt.s32.totalorder %v779, 520
        %vm844 = vcmp.lt.s32.totalorder %v780, 520
        %vm845 = vcmp.lt.s32.totalorder %v781, 520
        %vm846 = vcmp.lt.s32.totalorder %v782, 520
        %vm847 = vcmp.lt.s32.totalorder %v783, 520
        %vm848 = vcmp.lt.s32.totalorder %v784, 520
        %vm849 = vcmp.lt.s32.totalorder %v785, 520
        %vm850 = vcmp.lt.s32.totalorder %v786, 520
        %vm851 = vcmp.lt.s32.totalorder %v787, 520
        %vm852 = vcmp.lt.s32.totalorder %v788, 520
        %vm853 = vcmp.lt.s32.totalorder %v789, 520
        %vm854 = vcmp.lt.s32.totalorder %v790, 520
        %vm855 = vcmp.lt.s32.totalorder %v791, 520
        %vm856 = vcmp.lt.s32.totalorder %v792, 520
        %vm857 = vcmp.lt.s32.totalorder %v793, 520
        %vm858 = vcmp.lt.s32.totalorder %v794, 520
        %vm859 = vcmp.lt.s32.totalorder %v795, 520
        %vm860 = vcmp.lt.s32.totalorder %v796, 520
        %vm861 = vcmp.lt.s32.totalorder %v797, 520
        %vm862 = vcmp.lt.s32.totalorder %v798, 520
        %vm863 = vcmp.lt.s32.totalorder %v799, 520
        %vm864 = vcmp.lt.s32.totalorder %v800, 520
        %vm865 = vcmp.lt.s32.totalorder %v801, 520
        %vm866 = vcmp.lt.s32.totalorder %v802, 520
        %vm867 = vcmp.lt.s32.totalorder %v803, 520
        %vm868 = vcmp.lt.s32.totalorder %v804, 520
        %vm869 = vcmp.lt.s32.totalorder %v805, 520
        %vm870 = vcmp.lt.s32.totalorder %v806, 520
        %vm871 = vcmp.lt.s32.totalorder %v807, 520
        %vm872 = vcmp.lt.s32.totalorder %v808, 520
        %vm873 = vcmp.lt.s32.totalorder %v809, 520
        %vm874 = vcmp.lt.s32.totalorder %v810, 520
        %vm875 = vcmp.lt.s32.totalorder %v811, 520
        %vm876 = vcmp.lt.s32.totalorder %v812, 520
        %vm877 = vcmp.lt.s32.totalorder %v813, 520
        %vm878 = vcmp.lt.s32.totalorder %v814, 520
        %vm879 = vcmp.lt.s32.totalorder %v815, 520
        %vm880 = vcmp.lt.s32.totalorder %v816, 520
        %vm881 = vcmp.lt.s32.totalorder %v817, 520
        %vm882 = vcmp.lt.s32.totalorder %v818, 520
        %vm883 = vcmp.lt.s32.totalorder %v819, 520
        %vm884 = vcmp.lt.s32.totalorder %v820, 520
        %vm885 = vcmp.lt.s32.totalorder %v821, 520
        %vm886 = vcmp.lt.s32.totalorder %v822, 520
        %vm887 = vcmp.lt.s32.totalorder %v823, 520
        %vm888 = vcmp.lt.s32.totalorder %v824, 520
        %vm889 = vcmp.lt.s32.totalorder %v825, 520
        %vm890 = vcmp.lt.s32.totalorder %v826, 520
        %vm891 = vcmp.lt.s32.totalorder %v827, 520
        %vm892 = vcmp.lt.s32.totalorder %v828, 520
        %vm893 = vcmp.lt.s32.totalorder %v829, 520
        %v894 = vsel %vm830, 1, 0
        %v895 = vsel %vm831, 1, 0
        %v896 = vsel %vm832, 1, 0
        %v897 = vsel %vm833, 1, 0
        %v898 = vsel %vm834, 1, 0
        %v899 = vsel %vm835, 1, 0
        %v900 = vsel %vm836, 1, 0
        %v901 = vsel %vm837, 1, 0
        %v902 = vsel %vm838, 1, 0
        %v903 = vsel %vm839, 1, 0
        %v904 = vsel %vm840, 1, 0
        %v905 = vsel %vm841, 1, 0
        %v906 = vsel %vm842, 1, 0
        %v907 = vsel %vm843, 1, 0
        %v908 = vsel %vm844, 1, 0
        %v909 = vsel %vm845, 1, 0
        %v910 = vsel %vm846, 1, 0
        %v911 = vsel %vm847, 1, 0
        %v912 = vsel %vm848, 1, 0
        %v913 = vsel %vm849, 1, 0
        %v914 = vsel %vm850, 1, 0
        %v915 = vsel %vm851, 1, 0
        %v916 = vsel %vm852, 1, 0
        %v917 = vsel %vm853, 1, 0
        %v918 = vsel %vm854, 1, 0
        %v919 = vsel %vm855, 1, 0
        %v920 = vsel %vm856, 1, 0
        %v921 = vsel %vm857, 1, 0
        %v922 = vsel %vm858, 1, 0
        %v923 = vsel %vm859, 1, 0
        %v924 = vsel %vm860, 1, 0
        %v925 = vsel %vm861, 1, 0
        %v926 = vsel %vm862, 1, 0
        %v927 = vsel %vm863, 1, 0
        %v928 = vsel %vm864, 1, 0
        %v929 = vsel %vm865, 1, 0
        %v930 = vsel %vm866, 1, 0
        %v931 = vsel %vm867, 1, 0
        %v932 = vsel %vm868, 1, 0
        %v933 = vsel %vm869, 1, 0
        %v934 = vsel %vm870, 1, 0
        %v935 = vsel %vm871, 1, 0
        %v936 = vsel %vm872, 1, 0
        %v937 = vsel %vm873, 1, 0
        %v938 = vsel %vm874, 1, 0
        %v939 = vsel %vm875, 1, 0
        %v940 = vsel %vm876, 1, 0
        %v941 = vsel %vm877, 1, 0
        %v942 = vsel %vm878, 1, 0
        %v943 = vsel %vm879, 1, 0
        %v944 = vsel %vm880, 1, 0
        %v945 = vsel %vm881, 1, 0
        %v946 = vsel %vm882, 1, 0
        %v947 = vsel %vm883, 1, 0
        %v948 = vsel %vm884, 1, 0
        %v949 = vsel %vm885, 1, 0
        %v950 = vsel %vm886, 1, 0
        %v951 = vsel %vm887, 1, 0
        %v952 = vsel %vm888, 1, 0
        %v953 = vsel %vm889, 1, 0
        %v954 = vsel %vm890, 1, 0
        %v955 = vsel %vm891, 1, 0
        %v956 = vsel %vm892, 1, 0
        %v957 = vsel %vm893, 1, 0
        %vm958 = vcmp.eq.s32.totalorder %v894, 1
        %vm959 = vcmp.eq.s32.totalorder %v895, 1
        %vm960 = vcmp.eq.s32.totalorder %v896, 1
        %vm961 = vcmp.eq.s32.totalorder %v897, 1
        %vm962 = vcmp.eq.s32.totalorder %v898, 1
        %vm963 = vcmp.eq.s32.totalorder %v899, 1
        %vm964 = vcmp.eq.s32.totalorder %v900, 1
        %vm965 = vcmp.eq.s32.totalorder %v901, 1
        %vm966 = vcmp.eq.s32.totalorder %v902, 1
        %vm967 = vcmp.eq.s32.totalorder %v903, 1
        %vm968 = vcmp.eq.s32.totalorder %v904, 1
        %vm969 = vcmp.eq.s32.totalorder %v905, 1
        %vm970 = vcmp.eq.s32.totalorder %v906, 1
        %vm971 = vcmp.eq.s32.totalorder %v907, 1
        %vm972 = vcmp.eq.s32.totalorder %v908, 1
        %vm973 = vcmp.eq.s32.totalorder %v909, 1
        %vm974 = vcmp.eq.s32.totalorder %v910, 1
        %vm975 = vcmp.eq.s32.totalorder %v911, 1
        %vm976 = vcmp.eq.s32.totalorder %v912, 1
        %vm977 = vcmp.eq.s32.totalorder %v913, 1
        %vm978 = vcmp.eq.s32.totalorder %v914, 1
        %vm979 = vcmp.eq.s32.totalorder %v915, 1
        %vm980 = vcmp.eq.s32.totalorder %v916, 1
        %vm981 = vcmp.eq.s32.totalorder %v917, 1
        %vm982 = vcmp.eq.s32.totalorder %v918, 1
        %vm983 = vcmp.eq.s32.totalorder %v919, 1
        %vm984 = vcmp.eq.s32.totalorder %v920, 1
        %vm985 = vcmp.eq.s32.totalorder %v921, 1
        %vm986 = vcmp.eq.s32.totalorder %v922, 1
        %vm987 = vcmp.eq.s32.totalorder %v923, 1
        %vm988 = vcmp.eq.s32.totalorder %v924, 1
        %vm989 = vcmp.eq.s32.totalorder %v925, 1
        %vm990 = vcmp.eq.s32.totalorder %v926, 1
        %vm991 = vcmp.eq.s32.totalorder %v927, 1
        %vm992 = vcmp.eq.s32.totalorder %v928, 1
        %vm993 = vcmp.eq.s32.totalorder %v929, 1
        %vm994 = vcmp.eq.s32.totalorder %v930, 1
        %vm995 = vcmp.eq.s32.totalorder %v931, 1
        %vm996 = vcmp.eq.s32.totalorder %v932, 1
        %vm997 = vcmp.eq.s32.totalorder %v933, 1
        %vm998 = vcmp.eq.s32.totalorder %v934, 1
        %vm999 = vcmp.eq.s32.totalorder %v935, 1
        %vm1000 = vcmp.eq.s32.totalorder %v936, 1
        %vm1001 = vcmp.eq.s32.totalorder %v937, 1
        %vm1002 = vcmp.eq.s32.totalorder %v938, 1
        %vm1003 = vcmp.eq.s32.totalorder %v939, 1
        %vm1004 = vcmp.eq.s32.totalorder %v940, 1
        %vm1005 = vcmp.eq.s32.totalorder %v941, 1
        %vm1006 = vcmp.eq.s32.totalorder %v942, 1
        %vm1007 = vcmp.eq.s32.totalorder %v943, 1
        %vm1008 = vcmp.eq.s32.totalorder %v944, 1
        %vm1009 = vcmp.eq.s32.totalorder %v945, 1
        %vm1010 = vcmp.eq.s32.totalorder %v946, 1
        %vm1011 = vcmp.eq.s32.totalorder %v947, 1
        %vm1012 = vcmp.eq.s32.totalorder %v948, 1
        %vm1013 = vcmp.eq.s32.totalorder %v949, 1
        %vm1014 = vcmp.eq.s32.totalorder %v950, 1
        %vm1015 = vcmp.eq.s32.totalorder %v951, 1
        %vm1016 = vcmp.eq.s32.totalorder %v952, 1
        %vm1017 = vcmp.eq.s32.totalorder %v953, 1
        %vm1018 = vcmp.eq.s32.totalorder %v954, 1
        %vm1019 = vcmp.eq.s32.totalorder %v955, 1
        %vm1020 = vcmp.eq.s32.totalorder %v956, 1
        %vm1021 = vcmp.eq.s32.totalorder %v957, 1
        %v1022 = vsel %vm958, %v187, -3.4028235e+38
        %v1023 = vsel %vm958, %v188, -3.4028235e+38
        %v1024 = vsel %vm958, %v189, -3.4028235e+38
        %v1025 = vsel %vm958, %v190, -3.4028235e+38
        %v1026 = vsel %vm958, %v191, -3.4028235e+38
        %v1027 = vsel %vm958, %v192, -3.4028235e+38
        %v1028 = vsel %vm958, %v193, -3.4028235e+38
        %v1029 = vsel %vm958, %v194, -3.4028235e+38
        %v1030 = vsel %vm959, %v195, -3.4028235e+38
        %v1031 = vsel %vm959, %v196, -3.4028235e+38
        %v1032 = vsel %vm959, %v197, -3.4028235e+38
        %v1033 = vsel %vm959, %v198, -3.4028235e+38
        %v1034 = vsel %vm959, %v199, -3.4028235e+38
        %v1035 = vsel %vm959, %v200, -3.4028235e+38
        %v1036 = vsel %vm959, %v201, -3.4028235e+38
        %v1037 = vsel %vm959, %v202, -3.4028235e+38
        %v1038 = vsel %vm960, %v203, -3.4028235e+38
        %v1039 = vsel %vm960, %v204, -3.4028235e+38
        %v1040 = vsel %vm960, %v205, -3.4028235e+38
        %v1041 = vsel %vm960, %v206, -3.4028235e+38
        %v1042 = vsel %vm960, %v207, -3.4028235e+38
        %v1043 = vsel %vm960, %v208, -3.4028235e+38
        %v1044 = vsel %vm960, %v209, -3.4028235e+38
        %v1045 = vsel %vm960, %v210, -3.4028235e+38
        %v1046 = vsel %vm961, %v211, -3.4028235e+38
        %v1047 = vsel %vm961, %v212, -3.4028235e+38
        %v1048 = vsel %vm961, %v213, -3.4028235e+38
        %v1049 = vsel %vm961, %v214, -3.4028235e+38
        %v1050 = vsel %vm961, %v215, -3.4028235e+38
        %v1051 = vsel %vm961, %v216, -3.4028235e+38
        %v1052 = vsel %vm961, %v217, -3.4028235e+38
        %v1053 = vsel %vm961, %v218, -3.4028235e+38
        %v1054 = vsel %vm962, %v219, -3.4028235e+38
        %v1055 = vsel %vm962, %v220, -3.4028235e+38
        %v1056 = vsel %vm962, %v221, -3.4028235e+38
        %v1057 = vsel %vm962, %v222, -3.4028235e+38
        %v1058 = vsel %vm962, %v223, -3.4028235e+38
        %v1059 = vsel %vm962, %v224, -3.4028235e+38
        %v1060 = vsel %vm962, %v225, -3.4028235e+38
        %v1061 = vsel %vm962, %v226, -3.4028235e+38
        %v1062 = vsel %vm963, %v227, -3.4028235e+38
        %v1063 = vsel %vm963, %v228, -3.4028235e+38
        %v1064 = vsel %vm963, %v229, -3.4028235e+38
        %v1065 = vsel %vm963, %v230, -3.4028235e+38
        %v1066 = vsel %vm963, %v231, -3.4028235e+38
        %v1067 = vsel %vm963, %v232, -3.4028235e+38
        %v1068 = vsel %vm963, %v233, -3.4028235e+38
        %v1069 = vsel %vm963, %v234, -3.4028235e+38
        %v1070 = vsel %vm964, %v235, -3.4028235e+38
        %v1071 = vsel %vm964, %v236, -3.4028235e+38
        %v1072 = vsel %vm964, %v237, -3.4028235e+38
        %v1073 = vsel %vm964, %v238, -3.4028235e+38
        %v1074 = vsel %vm964, %v239, -3.4028235e+38
        %v1075 = vsel %vm964, %v240, -3.4028235e+38
        %v1076 = vsel %vm964, %v241, -3.4028235e+38
        %v1077 = vsel %vm964, %v242, -3.4028235e+38
        %v1078 = vsel %vm965, %v243, -3.4028235e+38
        %v1079 = vsel %vm965, %v244, -3.4028235e+38
        %v1080 = vsel %vm965, %v245, -3.4028235e+38
        %v1081 = vsel %vm965, %v246, -3.4028235e+38
        %v1082 = vsel %vm965, %v247, -3.4028235e+38
        %v1083 = vsel %vm965, %v248, -3.4028235e+38
        %v1084 = vsel %vm965, %v249, -3.4028235e+38
        %v1085 = vsel %vm965, %v250, -3.4028235e+38
        %v1086 = vsel %vm966, %v251, -3.4028235e+38
        %v1087 = vsel %vm966, %v252, -3.4028235e+38
        %v1088 = vsel %vm966, %v253, -3.4028235e+38
        %v1089 = vsel %vm966, %v254, -3.4028235e+38
        %v1090 = vsel %vm966, %v255, -3.4028235e+38
        %v1091 = vsel %vm966, %v256, -3.4028235e+38
        %v1092 = vsel %vm966, %v257, -3.4028235e+38
        %v1093 = vsel %vm966, %v258, -3.4028235e+38
        %v1094 = vsel %vm967, %v259, -3.4028235e+38
        %v1095 = vsel %vm967, %v260, -3.4028235e+38
        %v1096 = vsel %vm967, %v261, -3.4028235e+38
        %v1097 = vsel %vm967, %v262, -3.4028235e+38
        %v1098 = vsel %vm967, %v263, -3.4028235e+38
        %v1099 = vsel %vm967, %v264, -3.4028235e+38
        %v1100 = vsel %vm967, %v265, -3.4028235e+38
        %v1101 = vsel %vm967, %v266, -3.4028235e+38
        %v1102 = vsel %vm968, %v267, -3.4028235e+38
        %v1103 = vsel %vm968, %v268, -3.4028235e+38
        %v1104 = vsel %vm968, %v269, -3.4028235e+38
        %v1105 = vsel %vm968, %v270, -3.4028235e+38
        %v1106 = vsel %vm968, %v271, -3.4028235e+38
        %v1107 = vsel %vm968, %v272, -3.4028235e+38
        %v1108 = vsel %vm968, %v273, -3.4028235e+38
        %v1109 = vsel %vm968, %v274, -3.4028235e+38
        %v1110 = vsel %vm969, %v275, -3.4028235e+38
        %v1111 = vsel %vm969, %v276, -3.4028235e+38
        %v1112 = vsel %vm969, %v277, -3.4028235e+38
        %v1113 = vsel %vm969, %v278, -3.4028235e+38
        %v1114 = vsel %vm969, %v279, -3.4028235e+38
        %v1115 = vsel %vm969, %v280, -3.4028235e+38
        %v1116 = vsel %vm969, %v281, -3.4028235e+38
        %v1117 = vsel %vm969, %v282, -3.4028235e+38
        %v1118 = vsel %vm970, %v283, -3.4028235e+38
        %v1119 = vsel %vm970, %v284, -3.4028235e+38
        %v1120 = vsel %vm970, %v285, -3.4028235e+38
        %v1121 = vsel %vm970, %v286, -3.4028235e+38
        %v1122 = vsel %vm970, %v287, -3.4028235e+38
        %v1123 = vsel %vm970, %v288, -3.4028235e+38
        %v1124 = vsel %vm970, %v289, -3.4028235e+38
        %v1125 = vsel %vm970, %v290, -3.4028235e+38
        %v1126 = vsel %vm971, %v291, -3.4028235e+38
        %v1127 = vsel %vm971, %v292, -3.4028235e+38
        %v1128 = vsel %vm971, %v293, -3.4028235e+38
        %v1129 = vsel %vm971, %v294, -3.4028235e+38
        %v1130 = vsel %vm971, %v295, -3.4028235e+38
        %v1131 = vsel %vm971, %v296, -3.4028235e+38
        %v1132 = vsel %vm971, %v297, -3.4028235e+38
        %v1133 = vsel %vm971, %v298, -3.4028235e+38
        %v1134 = vsel %vm972, %v299, -3.4028235e+38
        %v1135 = vsel %vm972, %v300, -3.4028235e+38
        %v1136 = vsel %vm972, %v301, -3.4028235e+38
        %v1137 = vsel %vm972, %v302, -3.4028235e+38
        %v1138 = vsel %vm972, %v303, -3.4028235e+38
        %v1139 = vsel %vm972, %v304, -3.4028235e+38
        %v1140 = vsel %vm972, %v305, -3.4028235e+38
        %v1141 = vsel %vm972, %v306, -3.4028235e+38
        %v1142 = vsel %vm973, %v307, -3.4028235e+38
        %v1143 = vsel %vm973, %v308, -3.4028235e+38
        %v1144 = vsel %vm973, %v309, -3.4028235e+38
        %v1145 = vsel %vm973, %v310, -3.4028235e+38
        %v1146 = vsel %vm973, %v311, -3.4028235e+38
        %v1147 = vsel %vm973, %v312, -3.4028235e+38
        %v1148 = vsel %vm973, %v313, -3.4028235e+38
        %v1149 = vsel %vm973, %v314, -3.4028235e+38
        %v1150 = vsel %vm974, %v315, -3.4028235e+38
        %v1151 = vsel %vm974, %v316, -3.4028235e+38
        %v1152 = vsel %vm974, %v317, -3.4028235e+38
        %v1153 = vsel %vm974, %v318, -3.4028235e+38
        %v1154 = vsel %vm974, %v319, -3.4028235e+38
        %v1155 = vsel %vm974, %v320, -3.4028235e+38
        %v1156 = vsel %vm974, %v321, -3.4028235e+38
        %v1157 = vsel %vm974, %v322, -3.4028235e+38
        %v1158 = vsel %vm975, %v323, -3.4028235e+38
        %v1159 = vsel %vm975, %v324, -3.4028235e+38
        %v1160 = vsel %vm975, %v325, -3.4028235e+38
        %v1161 = vsel %vm975, %v326, -3.4028235e+38
        %v1162 = vsel %vm975, %v327, -3.4028235e+38
        %v1163 = vsel %vm975, %v328, -3.4028235e+38
        %v1164 = vsel %vm975, %v329, -3.4028235e+38
        %v1165 = vsel %vm975, %v330, -3.4028235e+38
        %v1166 = vsel %vm976, %v331, -3.4028235e+38
        %v1167 = vsel %vm976, %v332, -3.4028235e+38
        %v1168 = vsel %vm976, %v333, -3.4028235e+38
        %v1169 = vsel %vm976, %v334, -3.4028235e+38
        %v1170 = vsel %vm976, %v335, -3.4028235e+38
        %v1171 = vsel %vm976, %v336, -3.4028235e+38
        %v1172 = vsel %vm976, %v337, -3.4028235e+38
        %v1173 = vsel %vm976, %v338, -3.4028235e+38
        %v1174 = vsel %vm977, %v339, -3.4028235e+38
        %v1175 = vsel %vm977, %v340, -3.4028235e+38
        %v1176 = vsel %vm977, %v341, -3.4028235e+38
        %v1177 = vsel %vm977, %v342, -3.4028235e+38
        %v1178 = vsel %vm977, %v343, -3.4028235e+38
        %v1179 = vsel %vm977, %v344, -3.4028235e+38
        %v1180 = vsel %vm977, %v345, -3.4028235e+38
        %v1181 = vsel %vm977, %v346, -3.4028235e+38
        %v1182 = vsel %vm978, %v347, -3.4028235e+38
        %v1183 = vsel %vm978, %v348, -3.4028235e+38
        %v1184 = vsel %vm978, %v349, -3.4028235e+38
        %v1185 = vsel %vm978, %v350, -3.4028235e+38
        %v1186 = vsel %vm978, %v351, -3.4028235e+38
        %v1187 = vsel %vm978, %v352, -3.4028235e+38
        %v1188 = vsel %vm978, %v353, -3.4028235e+38
        %v1189 = vsel %vm978, %v354, -3.4028235e+38
        %v1190 = vsel %vm979, %v355, -3.4028235e+38
        %v1191 = vsel %vm979, %v356, -3.4028235e+38
        %v1192 = vsel %vm979, %v357, -3.4028235e+38
        %v1193 = vsel %vm979, %v358, -3.4028235e+38
        %v1194 = vsel %vm979, %v359, -3.4028235e+38
        %v1195 = vsel %vm979, %v360, -3.4028235e+38
        %v1196 = vsel %vm979, %v361, -3.4028235e+38
        %v1197 = vsel %vm979, %v362, -3.4028235e+38
        %v1198 = vsel %vm980, %v363, -3.4028235e+38
        %v1199 = vsel %vm980, %v364, -3.4028235e+38
        %v1200 = vsel %vm980, %v365, -3.4028235e+38
        %v1201 = vsel %vm980, %v366, -3.4028235e+38
        %v1202 = vsel %vm980, %v367, -3.4028235e+38
        %v1203 = vsel %vm980, %v368, -3.4028235e+38
        %v1204 = vsel %vm980, %v369, -3.4028235e+38
        %v1205 = vsel %vm980, %v370, -3.4028235e+38
        %v1206 = vsel %vm981, %v371, -3.4028235e+38
        %v1207 = vsel %vm981, %v372, -3.4028235e+38
        %v1208 = vsel %vm981, %v373, -3.4028235e+38
        %v1209 = vsel %vm981, %v374, -3.4028235e+38
        %v1210 = vsel %vm981, %v375, -3.4028235e+38
        %v1211 = vsel %vm981, %v376, -3.4028235e+38
        %v1212 = vsel %vm981, %v377, -3.4028235e+38
        %v1213 = vsel %vm981, %v378, -3.4028235e+38
        %v1214 = vsel %vm982, %v379, -3.4028235e+38
        %v1215 = vsel %vm982, %v380, -3.4028235e+38
        %v1216 = vsel %vm982, %v381, -3.4028235e+38
        %v1217 = vsel %vm982, %v382, -3.4028235e+38
        %v1218 = vsel %vm982, %v383, -3.4028235e+38
        %v1219 = vsel %vm982, %v384, -3.4028235e+38
        %v1220 = vsel %vm982, %v385, -3.4028235e+38
        %v1221 = vsel %vm982, %v386, -3.4028235e+38
        %v1222 = vsel %vm983, %v387, -3.4028235e+38
        %v1223 = vsel %vm983, %v388, -3.4028235e+38
        %v1224 = vsel %vm983, %v389, -3.4028235e+38
        %v1225 = vsel %vm983, %v390, -3.4028235e+38
        %v1226 = vsel %vm983, %v391, -3.4028235e+38
        %v1227 = vsel %vm983, %v392, -3.4028235e+38
        %v1228 = vsel %vm983, %v393, -3.4028235e+38
        %v1229 = vsel %vm983, %v394, -3.4028235e+38
        %v1230 = vsel %vm984, %v395, -3.4028235e+38
        %v1231 = vsel %vm984, %v396, -3.4028235e+38
        %v1232 = vsel %vm984, %v397, -3.4028235e+38
        %v1233 = vsel %vm984, %v398, -3.4028235e+38
        %v1234 = vsel %vm984, %v399, -3.4028235e+38
        %v1235 = vsel %vm984, %v400, -3.4028235e+38
        %v1236 = vsel %vm984, %v401, -3.4028235e+38
        %v1237 = vsel %vm984, %v402, -3.4028235e+38
        %v1238 = vsel %vm985, %v403, -3.4028235e+38
        %v1239 = vsel %vm985, %v404, -3.4028235e+38
        %v1240 = vsel %vm985, %v405, -3.4028235e+38
        %v1241 = vsel %vm985, %v406, -3.4028235e+38
        %v1242 = vsel %vm985, %v407, -3.4028235e+38
        %v1243 = vsel %vm985, %v408, -3.4028235e+38
        %v1244 = vsel %vm985, %v409, -3.4028235e+38
        %v1245 = vsel %vm985, %v410, -3.4028235e+38
        %v1246 = vsel %vm986, %v411, -3.4028235e+38
        %v1247 = vsel %vm986, %v412, -3.4028235e+38
        %v1248 = vsel %vm986, %v413, -3.4028235e+38
        %v1249 = vsel %vm986, %v414, -3.4028235e+38
        %v1250 = vsel %vm986, %v415, -3.4028235e+38
        %v1251 = vsel %vm986, %v416, -3.4028235e+38
        %v1252 = vsel %vm986, %v417, -3.4028235e+38
        %v1253 = vsel %vm986, %v418, -3.4028235e+38
        %v1254 = vsel %vm987, %v419, -3.4028235e+38
        %v1255 = vsel %vm987, %v420, -3.4028235e+38
        %v1256 = vsel %vm987, %v421, -3.4028235e+38
        %v1257 = vsel %vm987, %v422, -3.4028235e+38
        %v1258 = vsel %vm987, %v423, -3.4028235e+38
        %v1259 = vsel %vm987, %v424, -3.4028235e+38
        %v1260 = vsel %vm987, %v425, -3.4028235e+38
        %v1261 = vsel %vm987, %v426, -3.4028235e+38
        %v1262 = vsel %vm988, %v427, -3.4028235e+38
        %v1263 = vsel %vm988, %v428, -3.4028235e+38
        %v1264 = vsel %vm988, %v429, -3.4028235e+38
        %v1265 = vsel %vm988, %v430, -3.4028235e+38
        %v1266 = vsel %vm988, %v431, -3.4028235e+38
        %v1267 = vsel %vm988, %v432, -3.4028235e+38
        %v1268 = vsel %vm988, %v433, -3.4028235e+38
        %v1269 = vsel %vm988, %v434, -3.4028235e+38
        %v1270 = vsel %vm989, %v435, -3.4028235e+38
        %v1271 = vsel %vm989, %v436, -3.4028235e+38
        %v1272 = vsel %vm989, %v437, -3.4028235e+38
        %v1273 = vsel %vm989, %v438, -3.4028235e+38
        %v1274 = vsel %vm989, %v439, -3.4028235e+38
        %v1275 = vsel %vm989, %v440, -3.4028235e+38
        %v1276 = vsel %vm989, %v441, -3.4028235e+38
        %v1277 = vsel %vm989, %v442, -3.4028235e+38
        %v1278 = vsel %vm990, %v443, -3.4028235e+38
        %v1279 = vsel %vm990, %v444, -3.4028235e+38
        %v1280 = vsel %vm990, %v445, -3.4028235e+38
        %v1281 = vsel %vm990, %v446, -3.4028235e+38
        %v1282 = vsel %vm990, %v447, -3.4028235e+38
        %v1283 = vsel %vm990, %v448, -3.4028235e+38
        %v1284 = vsel %vm990, %v449, -3.4028235e+38
        %v1285 = vsel %vm990, %v450, -3.4028235e+38
        %v1286 = vsel %vm991, %v451, -3.4028235e+38
        %v1287 = vsel %vm991, %v452, -3.4028235e+38
        %v1288 = vsel %vm991, %v453, -3.4028235e+38
        %v1289 = vsel %vm991, %v454, -3.4028235e+38
        %v1290 = vsel %vm991, %v455, -3.4028235e+38
        %v1291 = vsel %vm991, %v456, -3.4028235e+38
        %v1292 = vsel %vm991, %v457, -3.4028235e+38
        %v1293 = vsel %vm991, %v458, -3.4028235e+38
        %v1294 = vsel %vm992, %v459, -3.4028235e+38
        %v1295 = vsel %vm992, %v460, -3.4028235e+38
        %v1296 = vsel %vm992, %v461, -3.4028235e+38
        %v1297 = vsel %vm992, %v462, -3.4028235e+38
        %v1298 = vsel %vm992, %v463, -3.4028235e+38
        %v1299 = vsel %vm992, %v464, -3.4028235e+38
        %v1300 = vsel %vm992, %v465, -3.4028235e+38
        %v1301 = vsel %vm992, %v466, -3.4028235e+38
        %v1302 = vsel %vm993, %v467, -3.4028235e+38
        %v1303 = vsel %vm993, %v468, -3.4028235e+38
        %v1304 = vsel %vm993, %v469, -3.4028235e+38
        %v1305 = vsel %vm993, %v470, -3.4028235e+38
        %v1306 = vsel %vm993, %v471, -3.4028235e+38
        %v1307 = vsel %vm993, %v472, -3.4028235e+38
        %v1308 = vsel %vm993, %v473, -3.4028235e+38
        %v1309 = vsel %vm993, %v474, -3.4028235e+38
        %v1310 = vsel %vm994, %v475, -3.4028235e+38
        %v1311 = vsel %vm994, %v476, -3.4028235e+38
        %v1312 = vsel %vm994, %v477, -3.4028235e+38
        %v1313 = vsel %vm994, %v478, -3.4028235e+38
        %v1314 = vsel %vm994, %v479, -3.4028235e+38
        %v1315 = vsel %vm994, %v480, -3.4028235e+38
        %v1316 = vsel %vm994, %v481, -3.4028235e+38
        %v1317 = vsel %vm994, %v482, -3.4028235e+38
        %v1318 = vsel %vm995, %v483, -3.4028235e+38
        %v1319 = vsel %vm995, %v484, -3.4028235e+38
        %v1320 = vsel %vm995, %v485, -3.4028235e+38
        %v1321 = vsel %vm995, %v486, -3.4028235e+38
        %v1322 = vsel %vm995, %v487, -3.4028235e+38
        %v1323 = vsel %vm995, %v488, -3.4028235e+38
        %v1324 = vsel %vm995, %v489, -3.4028235e+38
        %v1325 = vsel %vm995, %v490, -3.4028235e+38
        %v1326 = vsel %vm996, %v491, -3.4028235e+38
        %v1327 = vsel %vm996, %v492, -3.4028235e+38
        %v1328 = vsel %vm996, %v493, -3.4028235e+38
        %v1329 = vsel %vm996, %v494, -3.4028235e+38
        %v1330 = vsel %vm996, %v495, -3.4028235e+38
        %v1331 = vsel %vm996, %v496, -3.4028235e+38
        %v1332 = vsel %vm996, %v497, -3.4028235e+38
        %v1333 = vsel %vm996, %v498, -3.4028235e+38
        %v1334 = vsel %vm997, %v499, -3.4028235e+38
        %v1335 = vsel %vm997, %v500, -3.4028235e+38
        %v1336 = vsel %vm997, %v501, -3.4028235e+38
        %v1337 = vsel %vm997, %v502, -3.4028235e+38
        %v1338 = vsel %vm997, %v503, -3.4028235e+38
        %v1339 = vsel %vm997, %v504, -3.4028235e+38
        %v1340 = vsel %vm997, %v505, -3.4028235e+38
        %v1341 = vsel %vm997, %v506, -3.4028235e+38
        %v1342 = vsel %vm998, %v507, -3.4028235e+38
        %v1343 = vsel %vm998, %v508, -3.4028235e+38
        %v1344 = vsel %vm998, %v509, -3.4028235e+38
        %v1345 = vsel %vm998, %v510, -3.4028235e+38
        %v1346 = vsel %vm998, %v511, -3.4028235e+38
        %v1347 = vsel %vm998, %v512, -3.4028235e+38
        %v1348 = vsel %vm998, %v513, -3.4028235e+38
        %v1349 = vsel %vm998, %v514, -3.4028235e+38
        %v1350 = vsel %vm999, %v515, -3.4028235e+38
        %v1351 = vsel %vm999, %v516, -3.4028235e+38
        %v1352 = vsel %vm999, %v517, -3.4028235e+38
        %v1353 = vsel %vm999, %v518, -3.4028235e+38
        %v1354 = vsel %vm999, %v519, -3.4028235e+38
        %v1355 = vsel %vm999, %v520, -3.4028235e+38
        %v1356 = vsel %vm999, %v521, -3.4028235e+38
        %v1357 = vsel %vm999, %v522, -3.4028235e+38
        %v1358 = vsel %vm1000, %v523, -3.4028235e+38
        %v1359 = vsel %vm1000, %v524, -3.4028235e+38
        %v1360 = vsel %vm1000, %v525, -3.4028235e+38
        %v1361 = vsel %vm1000, %v526, -3.4028235e+38
        %v1362 = vsel %vm1000, %v527, -3.4028235e+38
        %v1363 = vsel %vm1000, %v528, -3.4028235e+38
        %v1364 = vsel %vm1000, %v529, -3.4028235e+38
        %v1365 = vsel %vm1000, %v530, -3.4028235e+38
        %v1366 = vsel %vm1001, %v531, -3.4028235e+38
        %v1367 = vsel %vm1001, %v532, -3.4028235e+38
        %v1368 = vsel %vm1001, %v533, -3.4028235e+38
        %v1369 = vsel %vm1001, %v534, -3.4028235e+38
        %v1370 = vsel %vm1001, %v535, -3.4028235e+38
        %v1371 = vsel %vm1001, %v536, -3.4028235e+38
        %v1372 = vsel %vm1001, %v537, -3.4028235e+38
        %v1373 = vsel %vm1001, %v538, -3.4028235e+38
        %v1374 = vsel %vm1002, %v539, -3.4028235e+38
        %v1375 = vsel %vm1002, %v540, -3.4028235e+38
        %v1376 = vsel %vm1002, %v541, -3.4028235e+38
        %v1377 = vsel %vm1002, %v542, -3.4028235e+38
        %v1378 = vsel %vm1002, %v543, -3.4028235e+38
        %v1379 = vsel %vm1002, %v544, -3.4028235e+38
        %v1380 = vsel %vm1002, %v545, -3.4028235e+38
        %v1381 = vsel %vm1002, %v546, -3.4028235e+38
        %v1382 = vsel %vm1003, %v547, -3.4028235e+38
        %v1383 = vsel %vm1003, %v548, -3.4028235e+38
        %v1384 = vsel %vm1003, %v549, -3.4028235e+38
        %v1385 = vsel %vm1003, %v550, -3.4028235e+38
        %v1386 = vsel %vm1003, %v551, -3.4028235e+38
        %v1387 = vsel %vm1003, %v552, -3.4028235e+38
        %v1388 = vsel %vm1003, %v553, -3.4028235e+38
        %v1389 = vsel %vm1003, %v554, -3.4028235e+38
        %v1390 = vsel %vm1004, %v555, -3.4028235e+38
        %v1391 = vsel %vm1004, %v556, -3.4028235e+38
        %v1392 = vsel %vm1004, %v557, -3.4028235e+38
        %v1393 = vsel %vm1004, %v558, -3.4028235e+38
        %v1394 = vsel %vm1004, %v559, -3.4028235e+38
        %v1395 = vsel %vm1004, %v560, -3.4028235e+38
        %v1396 = vsel %vm1004, %v561, -3.4028235e+38
        %v1397 = vsel %vm1004, %v562, -3.4028235e+38
        %v1398 = vsel %vm1005, %v563, -3.4028235e+38
        %v1399 = vsel %vm1005, %v564, -3.4028235e+38
        %v1400 = vsel %vm1005, %v565, -3.4028235e+38
        %v1401 = vsel %vm1005, %v566, -3.4028235e+38
        %v1402 = vsel %vm1005, %v567, -3.4028235e+38
        %v1403 = vsel %vm1005, %v568, -3.4028235e+38
        %v1404 = vsel %vm1005, %v569, -3.4028235e+38
        %v1405 = vsel %vm1005, %v570, -3.4028235e+38
        %v1406 = vsel %vm1006, %v571, -3.4028235e+38
        %v1407 = vsel %vm1006, %v572, -3.4028235e+38
        %v1408 = vsel %vm1006, %v573, -3.4028235e+38
        %v1409 = vsel %vm1006, %v574, -3.4028235e+38
        %v1410 = vsel %vm1006, %v575, -3.4028235e+38
        %v1411 = vsel %vm1006, %v576, -3.4028235e+38
        %v1412 = vsel %vm1006, %v577, -3.4028235e+38
        %v1413 = vsel %vm1006, %v578, -3.4028235e+38
        %v1414 = vsel %vm1007, %v579, -3.4028235e+38
        %v1415 = vsel %vm1007, %v580, -3.4028235e+38
        %v1416 = vsel %vm1007, %v581, -3.4028235e+38
        %v1417 = vsel %vm1007, %v582, -3.4028235e+38
        %v1418 = vsel %vm1007, %v583, -3.4028235e+38
        %v1419 = vsel %vm1007, %v584, -3.4028235e+38
        %v1420 = vsel %vm1007, %v585, -3.4028235e+38
        %v1421 = vsel %vm1007, %v586, -3.4028235e+38
        %v1422 = vsel %vm1008, %v587, -3.4028235e+38
        %v1423 = vsel %vm1008, %v588, -3.4028235e+38
        %v1424 = vsel %vm1008, %v589, -3.4028235e+38
        %v1425 = vsel %vm1008, %v590, -3.4028235e+38
        %v1426 = vsel %vm1008, %v591, -3.4028235e+38
        %v1427 = vsel %vm1008, %v592, -3.4028235e+38
        %v1428 = vsel %vm1008, %v593, -3.4028235e+38
        %v1429 = vsel %vm1008, %v594, -3.4028235e+38
        %v1430 = vsel %vm1009, %v595, -3.4028235e+38
        %v1431 = vsel %vm1009, %v596, -3.4028235e+38
        %v1432 = vsel %vm1009, %v597, -3.4028235e+38
        %v1433 = vsel %vm1009, %v598, -3.4028235e+38
        %v1434 = vsel %vm1009, %v599, -3.4028235e+38
        %v1435 = vsel %vm1009, %v600, -3.4028235e+38
        %v1436 = vsel %vm1009, %v601, -3.4028235e+38
        %v1437 = vsel %vm1009, %v602, -3.4028235e+38
        %v1438 = vsel %vm1010, %v603, -3.4028235e+38
        %v1439 = vsel %vm1010, %v604, -3.4028235e+38
        %v1440 = vsel %vm1010, %v605, -3.4028235e+38
        %v1441 = vsel %vm1010, %v606, -3.4028235e+38
        %v1442 = vsel %vm1010, %v607, -3.4028235e+38
        %v1443 = vsel %vm1010, %v608, -3.4028235e+38
        %v1444 = vsel %vm1010, %v609, -3.4028235e+38
        %v1445 = vsel %vm1010, %v610, -3.4028235e+38
        %v1446 = vsel %vm1011, %v611, -3.4028235e+38
        %v1447 = vsel %vm1011, %v612, -3.4028235e+38
        %v1448 = vsel %vm1011, %v613, -3.4028235e+38
        %v1449 = vsel %vm1011, %v614, -3.4028235e+38
        %v1450 = vsel %vm1011, %v615, -3.4028235e+38
        %v1451 = vsel %vm1011, %v616, -3.4028235e+38
        %v1452 = vsel %vm1011, %v617, -3.4028235e+38
        %v1453 = vsel %vm1011, %v618, -3.4028235e+38
        %v1454 = vsel %vm1012, %v619, -3.4028235e+38
        %v1455 = vsel %vm1012, %v620, -3.4028235e+38
        %v1456 = vsel %vm1012, %v621, -3.4028235e+38
        %v1457 = vsel %vm1012, %v622, -3.4028235e+38
        %v1458 = vsel %vm1012, %v623, -3.4028235e+38
        %v1459 = vsel %vm1012, %v624, -3.4028235e+38
        %v1460 = vsel %vm1012, %v625, -3.4028235e+38
        %v1461 = vsel %vm1012, %v626, -3.4028235e+38
        %v1462 = vsel %vm1013, %v627, -3.4028235e+38
        %v1463 = vsel %vm1013, %v628, -3.4028235e+38
        %v1464 = vsel %vm1013, %v629, -3.4028235e+38
        %v1465 = vsel %vm1013, %v630, -3.4028235e+38
        %v1466 = vsel %vm1013, %v631, -3.4028235e+38
        %v1467 = vsel %vm1013, %v632, -3.4028235e+38
        %v1468 = vsel %vm1013, %v633, -3.4028235e+38
        %v1469 = vsel %vm1013, %v634, -3.4028235e+38
        %v1470 = vsel %vm1014, %v635, -3.4028235e+38
        %v1471 = vsel %vm1014, %v636, -3.4028235e+38
        %v1472 = vsel %vm1014, %v637, -3.4028235e+38
        %v1473 = vsel %vm1014, %v638, -3.4028235e+38
        %v1474 = vsel %vm1014, %v639, -3.4028235e+38
        %v1475 = vsel %vm1014, %v640, -3.4028235e+38
        %v1476 = vsel %vm1014, %v641, -3.4028235e+38
        %v1477 = vsel %vm1014, %v642, -3.4028235e+38
        %v1478 = vsel %vm1015, %v643, -3.4028235e+38
        %v1479 = vsel %vm1015, %v644, -3.4028235e+38
        %v1480 = vsel %vm1015, %v645, -3.4028235e+38
        %v1481 = vsel %vm1015, %v646, -3.4028235e+38
        %v1482 = vsel %vm1015, %v647, -3.4028235e+38
        %v1483 = vsel %vm1015, %v648, -3.4028235e+38
        %v1484 = vsel %vm1015, %v649, -3.4028235e+38
        %v1485 = vsel %vm1015, %v650, -3.4028235e+38
        %v1486 = vsel %vm1016, %v651, -3.4028235e+38
        %v1487 = vsel %vm1016, %v652, -3.4028235e+38
        %v1488 = vsel %vm1016, %v653, -3.4028235e+38
        %v1489 = vsel %vm1016, %v654, -3.4028235e+38
        %v1490 = vsel %vm1016, %v655, -3.4028235e+38
        %v1491 = vsel %vm1016, %v656, -3.4028235e+38
        %v1492 = vsel %vm1016, %v657, -3.4028235e+38
        %v1493 = vsel %vm1016, %v658, -3.4028235e+38
        %v1494 = vsel %vm1017, %v659, -3.4028235e+38
        %v1495 = vsel %vm1017, %v660, -3.4028235e+38
        %v1496 = vsel %vm1017, %v661, -3.4028235e+38
        %v1497 = vsel %vm1017, %v662, -3.4028235e+38
        %v1498 = vsel %vm1017, %v663, -3.4028235e+38
        %v1499 = vsel %vm1017, %v664, -3.4028235e+38
        %v1500 = vsel %vm1017, %v665, -3.4028235e+38
        %v1501 = vsel %vm1017, %v666, -3.4028235e+38
        %v1502 = vsel %vm1018, %v667, -3.4028235e+38
        %v1503 = vsel %vm1018, %v668, -3.4028235e+38
        %v1504 = vsel %vm1018, %v669, -3.4028235e+38
        %v1505 = vsel %vm1018, %v670, -3.4028235e+38
        %v1506 = vsel %vm1018, %v671, -3.4028235e+38
        %v1507 = vsel %vm1018, %v672, -3.4028235e+38
        %v1508 = vsel %vm1018, %v673, -3.4028235e+38
        %v1509 = vsel %vm1018, %v674, -3.4028235e+38
        %v1510 = vsel %vm1019, %v675, -3.4028235e+38
        %v1511 = vsel %vm1019, %v676, -3.4028235e+38
        %v1512 = vsel %vm1019, %v677, -3.4028235e+38
        %v1513 = vsel %vm1019, %v678, -3.4028235e+38
        %v1514 = vsel %vm1019, %v679, -3.4028235e+38
        %v1515 = vsel %vm1019, %v680, -3.4028235e+38
        %v1516 = vsel %vm1019, %v681, -3.4028235e+38
        %v1517 = vsel %vm1019, %v682, -3.4028235e+38
        %v1518 = vsel %vm1020, %v683, -3.4028235e+38
        %v1519 = vsel %vm1020, %v684, -3.4028235e+38
        %v1520 = vsel %vm1020, %v685, -3.4028235e+38
        %v1521 = vsel %vm1020, %v686, -3.4028235e+38
        %v1522 = vsel %vm1020, %v687, -3.4028235e+38
        %v1523 = vsel %vm1020, %v688, -3.4028235e+38
        %v1524 = vsel %vm1020, %v689, -3.4028235e+38
        %v1525 = vsel %vm1020, %v690, -3.4028235e+38
        %v1526 = vsel %vm1021, %v691, -3.4028235e+38
        %v1527 = vsel %vm1021, %v692, -3.4028235e+38
        %v1528 = vsel %vm1021, %v693, -3.4028235e+38
        %v1529 = vsel %vm1021, %v694, -3.4028235e+38
        %v1530 = vsel %vm1021, %v695, -3.4028235e+38
        %v1531 = vsel %vm1021, %v696, -3.4028235e+38
        %v1532 = vsel %vm1021, %v697, -3.4028235e+38
        %v1533 = vsel %vm1021, %v698, -3.4028235e+38
        %v1534 = vmax.f32 %v1022, %v1030
        %v1535 = vmax.f32 %v1534, %v1038
        %v1536 = vmax.f32 %v1535, %v1046
        %v1537 = vmax.f32 %v1536, %v1054
        %v1538 = vmax.f32 %v1537, %v1062
        %v1539 = vmax.f32 %v1538, %v1070
        %v1540 = vmax.f32 %v1539, %v1078
        %v1541 = vmax.f32 %v1540, %v1086
        %v1542 = vmax.f32 %v1541, %v1094
        %v1543 = vmax.f32 %v1542, %v1102
        %v1544 = vmax.f32 %v1543, %v1110
        %v1545 = vmax.f32 %v1544, %v1118
        %v1546 = vmax.f32 %v1545, %v1126
        %v1547 = vmax.f32 %v1546, %v1134
        %v1548 = vmax.f32 %v1547, %v1142
        %v1549 = vmax.f32 %v1548, %v1150
        %v1550 = vmax.f32 %v1549, %v1158
        %v1551 = vmax.f32 %v1550, %v1166
        %v1552 = vmax.f32 %v1551, %v1174
        %v1553 = vmax.f32 %v1552, %v1182
        %v1554 = vmax.f32 %v1553, %v1190
        %v1555 = vmax.f32 %v1554, %v1198
        %v1556 = vmax.f32 %v1555, %v1206
        %v1557 = vmax.f32 %v1556, %v1214
        %v1558 = vmax.f32 %v1557, %v1222
        %v1559 = vmax.f32 %v1558, %v1230
        %v1560 = vmax.f32 %v1559, %v1238
        %v1561 = vmax.f32 %v1560, %v1246
        %v1562 = vmax.f32 %v1561, %v1254
        %v1563 = vmax.f32 %v1562, %v1262
        %v1564 = vmax.f32 %v1563, %v1270
        %v1565 = vmax.f32 %v1564, %v1278
        %v1566 = vmax.f32 %v1565, %v1286
        %v1567 = vmax.f32 %v1566, %v1294
        %v1568 = vmax.f32 %v1567, %v1302
        %v1569 = vmax.f32 %v1568, %v1310
        %v1570 = vmax.f32 %v1569, %v1318
        %v1571 = vmax.f32 %v1570, %v1326
        %v1572 = vmax.f32 %v1571, %v1334
        %v1573 = vmax.f32 %v1572, %v1342
        %v1574 = vmax.f32 %v1573, %v1350
        %v1575 = vmax.f32 %v1574, %v1358
        %v1576 = vmax.f32 %v1575, %v1366
        %v1577 = vmax.f32 %v1576, %v1374
        %v1578 = vmax.f32 %v1577, %v1382
        %v1579 = vmax.f32 %v1578, %v1390
        %v1580 = vmax.f32 %v1579, %v1398
        %v1581 = vmax.f32 %v1580, %v1406
        %v1582 = vmax.f32 %v1581, %v1414
        %v1583 = vmax.f32 %v1582, %v1422
        %v1584 = vmax.f32 %v1583, %v1430
        %v1585 = vmax.f32 %v1584, %v1438
        %v1586 = vmax.f32 %v1585, %v1446
        %v1587 = vmax.f32 %v1586, %v1454
        %v1588 = vmax.f32 %v1587, %v1462
        %v1589 = vmax.f32 %v1588, %v1470
        %v1590 = vmax.f32 %v1589, %v1478
        %v1591 = vmax.f32 %v1590, %v1486
        %v1592 = vmax.f32 %v1591, %v1494
        %v1593 = vmax.f32 %v1592, %v1502
        %v1594 = vmax.f32 %v1593, %v1510
        %v1595 = vmax.f32 %v1594, %v1518
        %v1596 = vmax.f32 %v1595, %v1526
        %v1597 = vmax.f32 %v1023, %v1031
        %v1598 = vmax.f32 %v1597, %v1039
        %v1599 = vmax.f32 %v1598, %v1047
        %v1600 = vmax.f32 %v1599, %v1055
        %v1601 = vmax.f32 %v1600, %v1063
        %v1602 = vmax.f32 %v1601, %v1071
        %v1603 = vmax.f32 %v1602, %v1079
        %v1604 = vmax.f32 %v1603, %v1087
        %v1605 = vmax.f32 %v1604, %v1095
        %v1606 = vmax.f32 %v1605, %v1103
        %v1607 = vmax.f32 %v1606, %v1111
        %v1608 = vmax.f32 %v1607, %v1119
        %v1609 = vmax.f32 %v1608, %v1127
        %v1610 = vmax.f32 %v1609, %v1135
        %v1611 = vmax.f32 %v1610, %v1143
        %v1612 = vmax.f32 %v1611, %v1151
        %v1613 = vmax.f32 %v1612, %v1159
        %v1614 = vmax.f32 %v1613, %v1167
        %v1615 = vmax.f32 %v1614, %v1175
        %v1616 = vmax.f32 %v1615, %v1183
        %v1617 = vmax.f32 %v1616, %v1191
        %v1618 = vmax.f32 %v1617, %v1199
        %v1619 = vmax.f32 %v1618, %v1207
        %v1620 = vmax.f32 %v1619, %v1215
        %v1621 = vmax.f32 %v1620, %v1223
        %v1622 = vmax.f32 %v1621, %v1231
        %v1623 = vmax.f32 %v1622, %v1239
        %v1624 = vmax.f32 %v1623, %v1247
        %v1625 = vmax.f32 %v1624, %v1255
        %v1626 = vmax.f32 %v1625, %v1263
        %v1627 = vmax.f32 %v1626, %v1271
        %v1628 = vmax.f32 %v1627, %v1279
        %v1629 = vmax.f32 %v1628, %v1287
        %v1630 = vmax.f32 %v1629, %v1295
        %v1631 = vmax.f32 %v1630, %v1303
        %v1632 = vmax.f32 %v1631, %v1311
        %v1633 = vmax.f32 %v1632, %v1319
        %v1634 = vmax.f32 %v1633, %v1327
        %v1635 = vmax.f32 %v1634, %v1335
        %v1636 = vmax.f32 %v1635, %v1343
        %v1637 = vmax.f32 %v1636, %v1351
        %v1638 = vmax.f32 %v1637, %v1359
        %v1639 = vmax.f32 %v1638, %v1367
        %v1640 = vmax.f32 %v1639, %v1375
        %v1641 = vmax.f32 %v1640, %v1383
        %v1642 = vmax.f32 %v1641, %v1391
        %v1643 = vmax.f32 %v1642, %v1399
        %v1644 = vmax.f32 %v1643, %v1407
        %v1645 = vmax.f32 %v1644, %v1415
        %v1646 = vmax.f32 %v1645, %v1423
        %v1647 = vmax.f32 %v1646, %v1431
        %v1648 = vmax.f32 %v1647, %v1439
        %v1649 = vmax.f32 %v1648, %v1447
        %v1650 = vmax.f32 %v1649, %v1455
        %v1651 = vmax.f32 %v1650, %v1463
        %v1652 = vmax.f32 %v1651, %v1471
        %v1653 = vmax.f32 %v1652, %v1479
        %v1654 = vmax.f32 %v1653, %v1487
        %v1655 = vmax.f32 %v1654, %v1495
        %v1656 = vmax.f32 %v1655, %v1503
        %v1657 = vmax.f32 %v1656, %v1511
        %v1658 = vmax.f32 %v1657, %v1519
        %v1659 = vmax.f32 %v1658, %v1527
        %v1660 = vmax.f32 %v1024, %v1032
        %v1661 = vmax.f32 %v1660, %v1040
        %v1662 = vmax.f32 %v1661, %v1048
        %v1663 = vmax.f32 %v1662, %v1056
        %v1664 = vmax.f32 %v1663, %v1064
        %v1665 = vmax.f32 %v1664, %v1072
        %v1666 = vmax.f32 %v1665, %v1080
        %v1667 = vmax.f32 %v1666, %v1088
        %v1668 = vmax.f32 %v1667, %v1096
        %v1669 = vmax.f32 %v1668, %v1104
        %v1670 = vmax.f32 %v1669, %v1112
        %v1671 = vmax.f32 %v1670, %v1120
        %v1672 = vmax.f32 %v1671, %v1128
        %v1673 = vmax.f32 %v1672, %v1136
        %v1674 = vmax.f32 %v1673, %v1144
        %v1675 = vmax.f32 %v1674, %v1152
        %v1676 = vmax.f32 %v1675, %v1160
        %v1677 = vmax.f32 %v1676, %v1168
        %v1678 = vmax.f32 %v1677, %v1176
        %v1679 = vmax.f32 %v1678, %v1184
        %v1680 = vmax.f32 %v1679, %v1192
        %v1681 = vmax.f32 %v1680, %v1200
        %v1682 = vmax.f32 %v1681, %v1208
        %v1683 = vmax.f32 %v1682, %v1216
        %v1684 = vmax.f32 %v1683, %v1224
        %v1685 = vmax.f32 %v1684, %v1232
        %v1686 = vmax.f32 %v1685, %v1240
        %v1687 = vmax.f32 %v1686, %v1248
        %v1688 = vmax.f32 %v1687, %v1256
        %v1689 = vmax.f32 %v1688, %v1264
        %v1690 = vmax.f32 %v1689, %v1272
        %v1691 = vmax.f32 %v1690, %v1280
        %v1692 = vmax.f32 %v1691, %v1288
        %v1693 = vmax.f32 %v1692, %v1296
        %v1694 = vmax.f32 %v1693, %v1304
        %v1695 = vmax.f32 %v1694, %v1312
        %v1696 = vmax.f32 %v1695, %v1320
        %v1697 = vmax.f32 %v1696, %v1328
        %v1698 = vmax.f32 %v1697, %v1336
        %v1699 = vmax.f32 %v1698, %v1344
        %v1700 = vmax.f32 %v1699, %v1352
        %v1701 = vmax.f32 %v1700, %v1360
        %v1702 = vmax.f32 %v1701, %v1368
        %v1703 = vmax.f32 %v1702, %v1376
        %v1704 = vmax.f32 %v1703, %v1384
        %v1705 = vmax.f32 %v1704, %v1392
        %v1706 = vmax.f32 %v1705, %v1400
        %v1707 = vmax.f32 %v1706, %v1408
        %v1708 = vmax.f32 %v1707, %v1416
        %v1709 = vmax.f32 %v1708, %v1424
        %v1710 = vmax.f32 %v1709, %v1432
        %v1711 = vmax.f32 %v1710, %v1440
        %v1712 = vmax.f32 %v1711, %v1448
        %v1713 = vmax.f32 %v1712, %v1456
        %v1714 = vmax.f32 %v1713, %v1464
        %v1715 = vmax.f32 %v1714, %v1472
        %v1716 = vmax.f32 %v1715, %v1480
        %v1717 = vmax.f32 %v1716, %v1488
        %v1718 = vmax.f32 %v1717, %v1496
        %v1719 = vmax.f32 %v1718, %v1504
        %v1720 = vmax.f32 %v1719, %v1512
        %v1721 = vmax.f32 %v1720, %v1520
        %v1722 = vmax.f32 %v1721, %v1528
        %v1723 = vmax.f32 %v1025, %v1033
        %v1724 = vmax.f32 %v1723, %v1041
        %v1725 = vmax.f32 %v1724, %v1049
        %v1726 = vmax.f32 %v1725, %v1057
        %v1727 = vmax.f32 %v1726, %v1065
        %v1728 = vmax.f32 %v1727, %v1073
        %v1729 = vmax.f32 %v1728, %v1081
        %v1730 = vmax.f32 %v1729, %v1089
        %v1731 = vmax.f32 %v1730, %v1097
        %v1732 = vmax.f32 %v1731, %v1105
        %v1733 = vmax.f32 %v1732, %v1113
        %v1734 = vmax.f32 %v1733, %v1121
        %v1735 = vmax.f32 %v1734, %v1129
        %v1736 = vmax.f32 %v1735, %v1137
        %v1737 = vmax.f32 %v1736, %v1145
        %v1738 = vmax.f32 %v1737, %v1153
        %v1739 = vmax.f32 %v1738, %v1161
        %v1740 = vmax.f32 %v1739, %v1169
        %v1741 = vmax.f32 %v1740, %v1177
        %v1742 = vmax.f32 %v1741, %v1185
        %v1743 = vmax.f32 %v1742, %v1193
        %v1744 = vmax.f32 %v1743, %v1201
        %v1745 = vmax.f32 %v1744, %v1209
        %v1746 = vmax.f32 %v1745, %v1217
        %v1747 = vmax.f32 %v1746, %v1225
        %v1748 = vmax.f32 %v1747, %v1233
        %v1749 = vmax.f32 %v1748, %v1241
        %v1750 = vmax.f32 %v1749, %v1249
        %v1751 = vmax.f32 %v1750, %v1257
        %v1752 = vmax.f32 %v1751, %v1265
        %v1753 = vmax.f32 %v1752, %v1273
        %v1754 = vmax.f32 %v1753, %v1281
        %v1755 = vmax.f32 %v1754, %v1289
        %v1756 = vmax.f32 %v1755, %v1297
        %v1757 = vmax.f32 %v1756, %v1305
        %v1758 = vmax.f32 %v1757, %v1313
        %v1759 = vmax.f32 %v1758, %v1321
        %v1760 = vmax.f32 %v1759, %v1329
        %v1761 = vmax.f32 %v1760, %v1337
        %v1762 = vmax.f32 %v1761, %v1345
        %v1763 = vmax.f32 %v1762, %v1353
        %v1764 = vmax.f32 %v1763, %v1361
        %v1765 = vmax.f32 %v1764, %v1369
        %v1766 = vmax.f32 %v1765, %v1377
        %v1767 = vmax.f32 %v1766, %v1385
        %v1768 = vmax.f32 %v1767, %v1393
        %v1769 = vmax.f32 %v1768, %v1401
        %v1770 = vmax.f32 %v1769, %v1409
        %v1771 = vmax.f32 %v1770, %v1417
        %v1772 = vmax.f32 %v1771, %v1425
        %v1773 = vmax.f32 %v1772, %v1433
        %v1774 = vmax.f32 %v1773, %v1441
        %v1775 = vmax.f32 %v1774, %v1449
        %v1776 = vmax.f32 %v1775, %v1457
        %v1777 = vmax.f32 %v1776, %v1465
        %v1778 = vmax.f32 %v1777, %v1473
        %v1779 = vmax.f32 %v1778, %v1481
        %v1780 = vmax.f32 %v1779, %v1489
        %v1781 = vmax.f32 %v1780, %v1497
        %v1782 = vmax.f32 %v1781, %v1505
        %v1783 = vmax.f32 %v1782, %v1513
        %v1784 = vmax.f32 %v1783, %v1521
        %v1785 = vmax.f32 %v1784, %v1529
        %v1786 = vmax.f32 %v1026, %v1034
        %v1787 = vmax.f32 %v1786, %v1042
        %v1788 = vmax.f32 %v1787, %v1050
        %v1789 = vmax.f32 %v1788, %v1058
        %v1790 = vmax.f32 %v1789, %v1066
        %v1791 = vmax.f32 %v1790, %v1074
        %v1792 = vmax.f32 %v1791, %v1082
        %v1793 = vmax.f32 %v1792, %v1090
        %v1794 = vmax.f32 %v1793, %v1098
        %v1795 = vmax.f32 %v1794, %v1106
        %v1796 = vmax.f32 %v1795, %v1114
        %v1797 = vmax.f32 %v1796, %v1122
        %v1798 = vmax.f32 %v1797, %v1130
        %v1799 = vmax.f32 %v1798, %v1138
        %v1800 = vmax.f32 %v1799, %v1146
        %v1801 = vmax.f32 %v1800, %v1154
        %v1802 = vmax.f32 %v1801, %v1162
        %v1803 = vmax.f32 %v1802, %v1170
        %v1804 = vmax.f32 %v1803, %v1178
        %v1805 = vmax.f32 %v1804, %v1186
        %v1806 = vmax.f32 %v1805, %v1194
        %v1807 = vmax.f32 %v1806, %v1202
        %v1808 = vmax.f32 %v1807, %v1210
        %v1809 = vmax.f32 %v1808, %v1218
        %v1810 = vmax.f32 %v1809, %v1226
        %v1811 = vmax.f32 %v1810, %v1234
        %v1812 = vmax.f32 %v1811, %v1242
        %v1813 = vmax.f32 %v1812, %v1250
        %v1814 = vmax.f32 %v1813, %v1258
        %v1815 = vmax.f32 %v1814, %v1266
        %v1816 = vmax.f32 %v1815, %v1274
        %v1817 = vmax.f32 %v1816, %v1282
        %v1818 = vmax.f32 %v1817, %v1290
        %v1819 = vmax.f32 %v1818, %v1298
        %v1820 = vmax.f32 %v1819, %v1306
        %v1821 = vmax.f32 %v1820, %v1314
        %v1822 = vmax.f32 %v1821, %v1322
        %v1823 = vmax.f32 %v1822, %v1330
        %v1824 = vmax.f32 %v1823, %v1338
        %v1825 = vmax.f32 %v1824, %v1346
        %v1826 = vmax.f32 %v1825, %v1354
        %v1827 = vmax.f32 %v1826, %v1362
        %v1828 = vmax.f32 %v1827, %v1370
        %v1829 = vmax.f32 %v1828, %v1378
        %v1830 = vmax.f32 %v1829, %v1386
        %v1831 = vmax.f32 %v1830, %v1394
        %v1832 = vmax.f32 %v1831, %v1402
        %v1833 = vmax.f32 %v1832, %v1410
        %v1834 = vmax.f32 %v1833, %v1418
        %v1835 = vmax.f32 %v1834, %v1426
        %v1836 = vmax.f32 %v1835, %v1434
        %v1837 = vmax.f32 %v1836, %v1442
        %v1838 = vmax.f32 %v1837, %v1450
        %v1839 = vmax.f32 %v1838, %v1458
        %v1840 = vmax.f32 %v1839, %v1466
        %v1841 = vmax.f32 %v1840, %v1474
        %v1842 = vmax.f32 %v1841, %v1482
        %v1843 = vmax.f32 %v1842, %v1490
        %v1844 = vmax.f32 %v1843, %v1498
        %v1845 = vmax.f32 %v1844, %v1506
        %v1846 = vmax.f32 %v1845, %v1514
        %v1847 = vmax.f32 %v1846, %v1522
        %v1848 = vmax.f32 %v1847, %v1530
        %v1849 = vmax.f32 %v1027, %v1035
        %v1850 = vmax.f32 %v1849, %v1043
        %v1851 = vmax.f32 %v1850, %v1051
        %v1852 = vmax.f32 %v1851, %v1059
        %v1853 = vmax.f32 %v1852, %v1067
        %v1854 = vmax.f32 %v1853, %v1075
        %v1855 = vmax.f32 %v1854, %v1083
        %v1856 = vmax.f32 %v1855, %v1091
        %v1857 = vmax.f32 %v1856, %v1099
        %v1858 = vmax.f32 %v1857, %v1107
        %v1859 = vmax.f32 %v1858, %v1115
        %v1860 = vmax.f32 %v1859, %v1123
        %v1861 = vmax.f32 %v1860, %v1131
        %v1862 = vmax.f32 %v1861, %v1139
        %v1863 = vmax.f32 %v1862, %v1147
        %v1864 = vmax.f32 %v1863, %v1155
        %v1865 = vmax.f32 %v1864, %v1163
        %v1866 = vmax.f32 %v1865, %v1171
        %v1867 = vmax.f32 %v1866, %v1179
        %v1868 = vmax.f32 %v1867, %v1187
        %v1869 = vmax.f32 %v1868, %v1195
        %v1870 = vmax.f32 %v1869, %v1203
        %v1871 = vmax.f32 %v1870, %v1211
        %v1872 = vmax.f32 %v1871, %v1219
        %v1873 = vmax.f32 %v1872, %v1227
        %v1874 = vmax.f32 %v1873, %v1235
        %v1875 = vmax.f32 %v1874, %v1243
        %v1876 = vmax.f32 %v1875, %v1251
        %v1877 = vmax.f32 %v1876, %v1259
        %v1878 = vmax.f32 %v1877, %v1267
        %v1879 = vmax.f32 %v1878, %v1275
        %v1880 = vmax.f32 %v1879, %v1283
        %v1881 = vmax.f32 %v1880, %v1291
        %v1882 = vmax.f32 %v1881, %v1299
        %v1883 = vmax.f32 %v1882, %v1307
        %v1884 = vmax.f32 %v1883, %v1315
        %v1885 = vmax.f32 %v1884, %v1323
        %v1886 = vmax.f32 %v1885, %v1331
        %v1887 = vmax.f32 %v1886, %v1339
        %v1888 = vmax.f32 %v1887, %v1347
        %v1889 = vmax.f32 %v1888, %v1355
        %v1890 = vmax.f32 %v1889, %v1363
        %v1891 = vmax.f32 %v1890, %v1371
        %v1892 = vmax.f32 %v1891, %v1379
        %v1893 = vmax.f32 %v1892, %v1387
        %v1894 = vmax.f32 %v1893, %v1395
        %v1895 = vmax.f32 %v1894, %v1403
        %v1896 = vmax.f32 %v1895, %v1411
        %v1897 = vmax.f32 %v1896, %v1419
        %v1898 = vmax.f32 %v1897, %v1427
        %v1899 = vmax.f32 %v1898, %v1435
        %v1900 = vmax.f32 %v1899, %v1443
        %v1901 = vmax.f32 %v1900, %v1451
        %v1902 = vmax.f32 %v1901, %v1459
        %v1903 = vmax.f32 %v1902, %v1467
        %v1904 = vmax.f32 %v1903, %v1475
        %v1905 = vmax.f32 %v1904, %v1483
        %v1906 = vmax.f32 %v1905, %v1491
        %v1907 = vmax.f32 %v1906, %v1499
        %v1908 = vmax.f32 %v1907, %v1507
        %v1909 = vmax.f32 %v1908, %v1515
        %v1910 = vmax.f32 %v1909, %v1523
        %v1911 = vmax.f32 %v1910, %v1531
        %v1912 = vmax.f32 %v1028, %v1036
        %v1913 = vmax.f32 %v1912, %v1044
        %v1914 = vmax.f32 %v1913, %v1052
        %v1915 = vmax.f32 %v1914, %v1060
        %v1916 = vmax.f32 %v1915, %v1068
        %v1917 = vmax.f32 %v1916, %v1076
        %v1918 = vmax.f32 %v1917, %v1084
        %v1919 = vmax.f32 %v1918, %v1092
        %v1920 = vmax.f32 %v1919, %v1100
        %v1921 = vmax.f32 %v1920, %v1108
        %v1922 = vmax.f32 %v1921, %v1116
        %v1923 = vmax.f32 %v1922, %v1124
        %v1924 = vmax.f32 %v1923, %v1132
        %v1925 = vmax.f32 %v1924, %v1140
        %v1926 = vmax.f32 %v1925, %v1148
        %v1927 = vmax.f32 %v1926, %v1156
        %v1928 = vmax.f32 %v1927, %v1164
        %v1929 = vmax.f32 %v1928, %v1172
        %v1930 = vmax.f32 %v1929, %v1180
        %v1931 = vmax.f32 %v1930, %v1188
        %v1932 = vmax.f32 %v1931, %v1196
        %v1933 = vmax.f32 %v1932, %v1204
        %v1934 = vmax.f32 %v1933, %v1212
        %v1935 = vmax.f32 %v1934, %v1220
        %v1936 = vmax.f32 %v1935, %v1228
        %v1937 = vmax.f32 %v1936, %v1236
        %v1938 = vmax.f32 %v1937, %v1244
        %v1939 = vmax.f32 %v1938, %v1252
        %v1940 = vmax.f32 %v1939, %v1260
        %v1941 = vmax.f32 %v1940, %v1268
        %v1942 = vmax.f32 %v1941, %v1276
        %v1943 = vmax.f32 %v1942, %v1284
        %v1944 = vmax.f32 %v1943, %v1292
        %v1945 = vmax.f32 %v1944, %v1300
        %v1946 = vmax.f32 %v1945, %v1308
        %v1947 = vmax.f32 %v1946, %v1316
        %v1948 = vmax.f32 %v1947, %v1324
        %v1949 = vmax.f32 %v1948, %v1332
        %v1950 = vmax.f32 %v1949, %v1340
        %v1951 = vmax.f32 %v1950, %v1348
        %v1952 = vmax.f32 %v1951, %v1356
        %v1953 = vmax.f32 %v1952, %v1364
        %v1954 = vmax.f32 %v1953, %v1372
        %v1955 = vmax.f32 %v1954, %v1380
        %v1956 = vmax.f32 %v1955, %v1388
        %v1957 = vmax.f32 %v1956, %v1396
        %v1958 = vmax.f32 %v1957, %v1404
        %v1959 = vmax.f32 %v1958, %v1412
        %v1960 = vmax.f32 %v1959, %v1420
        %v1961 = vmax.f32 %v1960, %v1428
        %v1962 = vmax.f32 %v1961, %v1436
        %v1963 = vmax.f32 %v1962, %v1444
        %v1964 = vmax.f32 %v1963, %v1452
        %v1965 = vmax.f32 %v1964, %v1460
        %v1966 = vmax.f32 %v1965, %v1468
        %v1967 = vmax.f32 %v1966, %v1476
        %v1968 = vmax.f32 %v1967, %v1484
        %v1969 = vmax.f32 %v1968, %v1492
        %v1970 = vmax.f32 %v1969, %v1500
        %v1971 = vmax.f32 %v1970, %v1508
        %v1972 = vmax.f32 %v1971, %v1516
        %v1973 = vmax.f32 %v1972, %v1524
        %v1974 = vmax.f32 %v1973, %v1532
        %vm1975 = vcmask 850944
        %v1976 = vsel %vm1975, %v1029, -inf
        %v1977 = vsel %vm1975, %v1037, -inf
        %v1978 = vmax.f32 %v1976, %v1977
        %v1979 = vsel %vm1975, %v1045, -inf
        %v1980 = vmax.f32 %v1978, %v1979
        %v1981 = vsel %vm1975, %v1053, -inf
        %v1982 = vmax.f32 %v1980, %v1981
        %v1983 = vsel %vm1975, %v1061, -inf
        %v1984 = vmax.f32 %v1982, %v1983
        %v1985 = vsel %vm1975, %v1069, -inf
        %v1986 = vmax.f32 %v1984, %v1985
        %v1987 = vsel %vm1975, %v1077, -inf
        %v1988 = vmax.f32 %v1986, %v1987
        %v1989 = vsel %vm1975, %v1085, -inf
        %v1990 = vmax.f32 %v1988, %v1989
        %v1991 = vsel %vm1975, %v1093, -inf
        %v1992 = vmax.f32 %v1990, %v1991
        %v1993 = vsel %vm1975, %v1101, -inf
        %v1994 = vmax.f32 %v1992, %v1993
        %v1995 = vsel %vm1975, %v1109, -inf
        %v1996 = vmax.f32 %v1994, %v1995
        %v1997 = vsel %vm1975, %v1117, -inf
        %v1998 = vmax.f32 %v1996, %v1997
        %v1999 = vsel %vm1975, %v1125, -inf
        %v2000 = vmax.f32 %v1998, %v1999
        %v2001 = vsel %vm1975, %v1133, -inf
        %v2002 = vmax.f32 %v2000, %v2001
        %v2003 = vsel %vm1975, %v1141, -inf
        %v2004 = vmax.f32 %v2002, %v2003
        %v2005 = vsel %vm1975, %v1149, -inf
        %v2006 = vmax.f32 %v2004, %v2005
        %v2007 = vsel %vm1975, %v1157, -inf
        %v2008 = vmax.f32 %v2006, %v2007
        %v2009 = vsel %vm1975, %v1165, -inf
        %v2010 = vmax.f32 %v2008, %v2009
        %v2011 = vsel %vm1975, %v1173, -inf
        %v2012 = vmax.f32 %v2010, %v2011
        %v2013 = vsel %vm1975, %v1181, -inf
        %v2014 = vmax.f32 %v2012, %v2013
        %v2015 = vsel %vm1975, %v1189, -inf
        %v2016 = vmax.f32 %v2014, %v2015
        %v2017 = vsel %vm1975, %v1197, -inf
        %v2018 = vmax.f32 %v2016, %v2017
        %v2019 = vsel %vm1975, %v1205, -inf
        %v2020 = vmax.f32 %v2018, %v2019
        %v2021 = vsel %vm1975, %v1213, -inf
        %v2022 = vmax.f32 %v2020, %v2021
        %v2023 = vsel %vm1975, %v1221, -inf
        %v2024 = vmax.f32 %v2022, %v2023
        %v2025 = vsel %vm1975, %v1229, -inf
        %v2026 = vmax.f32 %v2024, %v2025
        %v2027 = vsel %vm1975, %v1237, -inf
        %v2028 = vmax.f32 %v2026, %v2027
        %v2029 = vsel %vm1975, %v1245, -inf
        %v2030 = vmax.f32 %v2028, %v2029
        %v2031 = vsel %vm1975, %v1253, -inf
        %v2032 = vmax.f32 %v2030, %v2031
        %v2033 = vsel %vm1975, %v1261, -inf
        %v2034 = vmax.f32 %v2032, %v2033
        %v2035 = vsel %vm1975, %v1269, -inf
        %v2036 = vmax.f32 %v2034, %v2035
        %v2037 = vsel %vm1975, %v1277, -inf
        %v2038 = vmax.f32 %v2036, %v2037
        %v2039 = vsel %vm1975, %v1285, -inf
        %v2040 = vmax.f32 %v2038, %v2039
        %v2041 = vsel %vm1975, %v1293, -inf
        %v2042 = vmax.f32 %v2040, %v2041
        %v2043 = vsel %vm1975, %v1301, -inf
        %v2044 = vmax.f32 %v2042, %v2043
        %v2045 = vsel %vm1975, %v1309, -inf
        %v2046 = vmax.f32 %v2044, %v2045
        %v2047 = vsel %vm1975, %v1317, -inf
        %v2048 = vmax.f32 %v2046, %v2047
        %v2049 = vsel %vm1975, %v1325, -inf
        %v2050 = vmax.f32 %v2048, %v2049
        %v2051 = vsel %vm1975, %v1333, -inf
        %v2052 = vmax.f32 %v2050, %v2051
        %v2053 = vsel %vm1975, %v1341, -inf
        %v2054 = vmax.f32 %v2052, %v2053
        %v2055 = vsel %vm1975, %v1349, -inf
        %v2056 = vmax.f32 %v2054, %v2055
        %v2057 = vsel %vm1975, %v1357, -inf
        %v2058 = vmax.f32 %v2056, %v2057
        %v2059 = vsel %vm1975, %v1365, -inf
        %v2060 = vmax.f32 %v2058, %v2059
        %v2061 = vsel %vm1975, %v1373, -inf
        %v2062 = vmax.f32 %v2060, %v2061
        %v2063 = vsel %vm1975, %v1381, -inf
        %v2064 = vmax.f32 %v2062, %v2063
        %v2065 = vsel %vm1975, %v1389, -inf
        %v2066 = vmax.f32 %v2064, %v2065
        %v2067 = vsel %vm1975, %v1397, -inf
        %v2068 = vmax.f32 %v2066, %v2067
        %v2069 = vsel %vm1975, %v1405, -inf
        %v2070 = vmax.f32 %v2068, %v2069
        %v2071 = vsel %vm1975, %v1413, -inf
        %v2072 = vmax.f32 %v2070, %v2071
        %v2073 = vsel %vm1975, %v1421, -inf
        %v2074 = vmax.f32 %v2072, %v2073
        %v2075 = vsel %vm1975, %v1429, -inf
        %v2076 = vmax.f32 %v2074, %v2075
        %v2077 = vsel %vm1975, %v1437, -inf
        %v2078 = vmax.f32 %v2076, %v2077
        %v2079 = vsel %vm1975, %v1445, -inf
        %v2080 = vmax.f32 %v2078, %v2079
        %v2081 = vsel %vm1975, %v1453, -inf
        %v2082 = vmax.f32 %v2080, %v2081
        %v2083 = vsel %vm1975, %v1461, -inf
        %v2084 = vmax.f32 %v2082, %v2083
        %v2085 = vsel %vm1975, %v1469, -inf
        %v2086 = vmax.f32 %v2084, %v2085
        %v2087 = vsel %vm1975, %v1477, -inf
        %v2088 = vmax.f32 %v2086, %v2087
        %v2089 = vsel %vm1975, %v1485, -inf
        %v2090 = vmax.f32 %v2088, %v2089
        %v2091 = vsel %vm1975, %v1493, -inf
        %v2092 = vmax.f32 %v2090, %v2091
        %v2093 = vsel %vm1975, %v1501, -inf
        %v2094 = vmax.f32 %v2092, %v2093
        %v2095 = vsel %vm1975, %v1509, -inf
        %v2096 = vmax.f32 %v2094, %v2095
        %v2097 = vsel %vm1975, %v1517, -inf
        %v2098 = vmax.f32 %v2096, %v2097
        %v2099 = vsel %vm1975, %v1525, -inf
        %v2100 = vmax.f32 %v2098, %v2099
        %v2101 = vsel %vm1975, %v1533, -inf
        %v2102 = vmax.f32 %v2100, %v2101
        %v2103 = vld [vmem:[#allocation2] sm:$0xff]
        %v2104 = vld [vmem:[#allocation2 + $0x8] sm:$0xff]
        %v2105 = vld [vmem:[#allocation2 + $0x10] sm:$0xff]
        %v2106 = vld [vmem:[#allocation2 + $0x18] sm:$0xff]
        %v2107 = vld [vmem:[#allocation2 + $0x20] sm:$0xff]
        %v2108 = vld [vmem:[#allocation2 + $0x28] sm:$0xff]
        %v2109 = vld [vmem:[#allocation2 + $0x30] sm:$0xff]
        %v2110 = vld [vmem:[#allocation2 + $0x38] sm:$0xff]
        %v2111 = vmax.f32 %v2103, %v1596
        %v2112 = vmax.f32 %v2104, %v1659
        %v2113 = vmax.f32 %v2105, %v1722
        %v2114 = vmax.f32 %v2106, %v1785
        %v2115 = vmax.f32 %v2107, %v1848
        %v2116 = vmax.f32 %v2108, %v1911
        %v2117 = vmax.f32 %v2109, %v1974
        %v2118 = vmax.f32 %v2110, %v2102
        %v2119 = vsub.f32 %v1022, %v2111
        %v2120 = vsub.f32 %v1023, %v2112
        %v2121 = vsub.f32 %v1024, %v2113
        %v2122 = vsub.f32 %v1025, %v2114
        %v2123 = vsub.f32 %v1026, %v2115
        %v2124 = vsub.f32 %v1027, %v2116
        %v2125 = vsub.f32 %v1028, %v2117
        %v2126 = vsub.f32 %v1029, %v2118
        %v2127 = vsub.f32 %v1030, %v2111
        %v2128 = vsub.f32 %v1031, %v2112
        %v2129 = vsub.f32 %v1032, %v2113
        %v2130 = vsub.f32 %v1033, %v2114
        %v2131 = vsub.f32 %v1034, %v2115
        %v2132 = vsub.f32 %v1035, %v2116
        %v2133 = vsub.f32 %v1036, %v2117
        %v2134 = vsub.f32 %v1037, %v2118
        %v2135 = vsub.f32 %v1038, %v2111
        %v2136 = vsub.f32 %v1039, %v2112
        %v2137 = vsub.f32 %v1040, %v2113
        %v2138 = vsub.f32 %v1041, %v2114
        %v2139 = vsub.f32 %v1042, %v2115
        %v2140 = vsub.f32 %v1043, %v2116
        %v2141 = vsub.f32 %v1044, %v2117
        %v2142 = vsub.f32 %v1045, %v2118
        %v2143 = vsub.f32 %v1046, %v2111
        %v2144 = vsub.f32 %v1047, %v2112
        %v2145 = vsub.f32 %v1048, %v2113
        %v2146 = vsub.f32 %v1049, %v2114
        %v2147 = vsub.f32 %v1050, %v2115
        %v2148 = vsub.f32 %v1051, %v2116
        %v2149 = vsub.f32 %v1052, %v2117
        %v2150 = vsub.f32 %v1053, %v2118
        %v2151 = vsub.f32 %v1054, %v2111
        %v2152 = vsub.f32 %v1055, %v2112
        %v2153 = vsub.f32 %v1056, %v2113
        %v2154 = vsub.f32 %v1057, %v2114
        %v2155 = vsub.f32 %v1058, %v2115
        %v2156 = vsub.f32 %v1059, %v2116
        %v2157 = vsub.f32 %v1060, %v2117
        %v2158 = vsub.f32 %v1061, %v2118
        %v2159 = vsub.f32 %v1062, %v2111
        %v2160 = vsub.f32 %v1063, %v2112
        %v2161 = vsub.f32 %v1064, %v2113
        %v2162 = vsub.f32 %v1065, %v2114
        %v2163 = vsub.f32 %v1066, %v2115
        %v2164 = vsub.f32 %v1067, %v2116
        %v2165 = vsub.f32 %v1068, %v2117
        %v2166 = vsub.f32 %v1069, %v2118
        %v2167 = vsub.f32 %v1070, %v2111
        %v2168 = vsub.f32 %v1071, %v2112
        %v2169 = vsub.f32 %v1072, %v2113
        %v2170 = vsub.f32 %v1073, %v2114
        %v2171 = vsub.f32 %v1074, %v2115
        %v2172 = vsub.f32 %v1075, %v2116
        %v2173 = vsub.f32 %v1076, %v2117
        %v2174 = vsub.f32 %v1077, %v2118
        %v2175 = vsub.f32 %v1078, %v2111
        %v2176 = vsub.f32 %v1079, %v2112
        %v2177 = vsub.f32 %v1080, %v2113
        %v2178 = vsub.f32 %v1081, %v2114
        %v2179 = vsub.f32 %v1082, %v2115
        %v2180 = vsub.f32 %v1083, %v2116
        %v2181 = vsub.f32 %v1084, %v2117
        %v2182 = vsub.f32 %v1085, %v2118
        %v2183 = vsub.f32 %v1086, %v2111
        %v2184 = vsub.f32 %v1087, %v2112
        %v2185 = vsub.f32 %v1088, %v2113
        %v2186 = vsub.f32 %v1089, %v2114
        %v2187 = vsub.f32 %v1090, %v2115
        %v2188 = vsub.f32 %v1091, %v2116
        %v2189 = vsub.f32 %v1092, %v2117
        %v2190 = vsub.f32 %v1093, %v2118
        %v2191 = vsub.f32 %v1094, %v2111
        %v2192 = vsub.f32 %v1095, %v2112
        %v2193 = vsub.f32 %v1096, %v2113
        %v2194 = vsub.f32 %v1097, %v2114
        %v2195 = vsub.f32 %v1098, %v2115
        %v2196 = vsub.f32 %v1099, %v2116
        %v2197 = vsub.f32 %v1100, %v2117
        %v2198 = vsub.f32 %v1101, %v2118
        %v2199 = vsub.f32 %v1102, %v2111
        %v2200 = vsub.f32 %v1103, %v2112
        %v2201 = vsub.f32 %v1104, %v2113
        %v2202 = vsub.f32 %v1105, %v2114
        %v2203 = vsub.f32 %v1106, %v2115
        %v2204 = vsub.f32 %v1107, %v2116
        %v2205 = vsub.f32 %v1108, %v2117
        %v2206 = vsub.f32 %v1109, %v2118
        %v2207 = vsub.f32 %v1110, %v2111
        %v2208 = vsub.f32 %v1111, %v2112
        %v2209 = vsub.f32 %v1112, %v2113
        %v2210 = vsub.f32 %v1113, %v2114
        %v2211 = vsub.f32 %v1114, %v2115
        %v2212 = vsub.f32 %v1115, %v2116
        %v2213 = vsub.f32 %v1116, %v2117
        %v2214 = vsub.f32 %v1117, %v2118
        %v2215 = vsub.f32 %v1118, %v2111
        %v2216 = vsub.f32 %v1119, %v2112
        %v2217 = vsub.f32 %v1120, %v2113
        %v2218 = vsub.f32 %v1121, %v2114
        %v2219 = vsub.f32 %v1122, %v2115
        %v2220 = vsub.f32 %v1123, %v2116
        %v2221 = vsub.f32 %v1124, %v2117
        %v2222 = vsub.f32 %v1125, %v2118
        %v2223 = vsub.f32 %v1126, %v2111
        %v2224 = vsub.f32 %v1127, %v2112
        %v2225 = vsub.f32 %v1128, %v2113
        %v2226 = vsub.f32 %v1129, %v2114
        %v2227 = vsub.f32 %v1130, %v2115
        %v2228 = vsub.f32 %v1131, %v2116
        %v2229 = vsub.f32 %v1132, %v2117
        %v2230 = vsub.f32 %v1133, %v2118
        %v2231 = vsub.f32 %v1134, %v2111
        %v2232 = vsub.f32 %v1135, %v2112
        %v2233 = vsub.f32 %v1136, %v2113
        %v2234 = vsub.f32 %v1137, %v2114
        %v2235 = vsub.f32 %v1138, %v2115
        %v2236 = vsub.f32 %v1139, %v2116
        %v2237 = vsub.f32 %v1140, %v2117
        %v2238 = vsub.f32 %v1141, %v2118
        %v2239 = vsub.f32 %v1142, %v2111
        %v2240 = vsub.f32 %v1143, %v2112
        %v2241 = vsub.f32 %v1144, %v2113
        %v2242 = vsub.f32 %v1145, %v2114
        %v2243 = vsub.f32 %v1146, %v2115
        %v2244 = vsub.f32 %v1147, %v2116
        %v2245 = vsub.f32 %v1148, %v2117
        %v2246 = vsub.f32 %v1149, %v2118
        %v2247 = vsub.f32 %v1150, %v2111
        %v2248 = vsub.f32 %v1151, %v2112
        %v2249 = vsub.f32 %v1152, %v2113
        %v2250 = vsub.f32 %v1153, %v2114
        %v2251 = vsub.f32 %v1154, %v2115
        %v2252 = vsub.f32 %v1155, %v2116
        %v2253 = vsub.f32 %v1156, %v2117
        %v2254 = vsub.f32 %v1157, %v2118
        %v2255 = vsub.f32 %v1158, %v2111
        %v2256 = vsub.f32 %v1159, %v2112
        %v2257 = vsub.f32 %v1160, %v2113
        %v2258 = vsub.f32 %v1161, %v2114
        %v2259 = vsub.f32 %v1162, %v2115
        %v2260 = vsub.f32 %v1163, %v2116
        %v2261 = vsub.f32 %v1164, %v2117
        %v2262 = vsub.f32 %v1165, %v2118
        %v2263 = vsub.f32 %v1166, %v2111
        %v2264 = vsub.f32 %v1167, %v2112
        %v2265 = vsub.f32 %v1168, %v2113
        %v2266 = vsub.f32 %v1169, %v2114
        %v2267 = vsub.f32 %v1170, %v2115
        %v2268 = vsub.f32 %v1171, %v2116
        %v2269 = vsub.f32 %v1172, %v2117
        %v2270 = vsub.f32 %v1173, %v2118
        %v2271 = vsub.f32 %v1174, %v2111
        %v2272 = vsub.f32 %v1175, %v2112
        %v2273 = vsub.f32 %v1176, %v2113
        %v2274 = vsub.f32 %v1177, %v2114
        %v2275 = vsub.f32 %v1178, %v2115
        %v2276 = vsub.f32 %v1179, %v2116
        %v2277 = vsub.f32 %v1180, %v2117
        %v2278 = vsub.f32 %v1181, %v2118
        %v2279 = vsub.f32 %v1182, %v2111
        %v2280 = vsub.f32 %v1183, %v2112
        %v2281 = vsub.f32 %v1184, %v2113
        %v2282 = vsub.f32 %v1185, %v2114
        %v2283 = vsub.f32 %v1186, %v2115
        %v2284 = vsub.f32 %v1187, %v2116
        %v2285 = vsub.f32 %v1188, %v2117
        %v2286 = vsub.f32 %v1189, %v2118
        %v2287 = vsub.f32 %v1190, %v2111
        %v2288 = vsub.f32 %v1191, %v2112
        %v2289 = vsub.f32 %v1192, %v2113
        %v2290 = vsub.f32 %v1193, %v2114
        %v2291 = vsub.f32 %v1194, %v2115
        %v2292 = vsub.f32 %v1195, %v2116
        %v2293 = vsub.f32 %v1196, %v2117
        %v2294 = vsub.f32 %v1197, %v2118
        %v2295 = vsub.f32 %v1198, %v2111
        %v2296 = vsub.f32 %v1199, %v2112
        %v2297 = vsub.f32 %v1200, %v2113
        %v2298 = vsub.f32 %v1201, %v2114
        %v2299 = vsub.f32 %v1202, %v2115
        %v2300 = vsub.f32 %v1203, %v2116
        %v2301 = vsub.f32 %v1204, %v2117
        %v2302 = vsub.f32 %v1205, %v2118
        %v2303 = vsub.f32 %v1206, %v2111
        %v2304 = vsub.f32 %v1207, %v2112
        %v2305 = vsub.f32 %v1208, %v2113
        %v2306 = vsub.f32 %v1209, %v2114
        %v2307 = vsub.f32 %v1210, %v2115
        %v2308 = vsub.f32 %v1211, %v2116
        %v2309 = vsub.f32 %v1212, %v2117
        %v2310 = vsub.f32 %v1213, %v2118
        %v2311 = vsub.f32 %v1214, %v2111
        %v2312 = vsub.f32 %v1215, %v2112
        %v2313 = vsub.f32 %v1216, %v2113
        %v2314 = vsub.f32 %v1217, %v2114
        %v2315 = vsub.f32 %v1218, %v2115
        %v2316 = vsub.f32 %v1219, %v2116
        %v2317 = vsub.f32 %v1220, %v2117
        %v2318 = vsub.f32 %v1221, %v2118
        %v2319 = vsub.f32 %v1222, %v2111
        %v2320 = vsub.f32 %v1223, %v2112
        %v2321 = vsub.f32 %v1224, %v2113
        %v2322 = vsub.f32 %v1225, %v2114
        %v2323 = vsub.f32 %v1226, %v2115
        %v2324 = vsub.f32 %v1227, %v2116
        %v2325 = vsub.f32 %v1228, %v2117
        %v2326 = vsub.f32 %v1229, %v2118
        %v2327 = vsub.f32 %v1230, %v2111
        %v2328 = vsub.f32 %v1231, %v2112
        %v2329 = vsub.f32 %v1232, %v2113
        %v2330 = vsub.f32 %v1233, %v2114
        %v2331 = vsub.f32 %v1234, %v2115
        %v2332 = vsub.f32 %v1235, %v2116
        %v2333 = vsub.f32 %v1236, %v2117
        %v2334 = vsub.f32 %v1237, %v2118
        %v2335 = vsub.f32 %v1238, %v2111
        %v2336 = vsub.f32 %v1239, %v2112
        %v2337 = vsub.f32 %v1240, %v2113
        %v2338 = vsub.f32 %v1241, %v2114
        %v2339 = vsub.f32 %v1242, %v2115
        %v2340 = vsub.f32 %v1243, %v2116
        %v2341 = vsub.f32 %v1244, %v2117
        %v2342 = vsub.f32 %v1245, %v2118
        %v2343 = vsub.f32 %v1246, %v2111
        %v2344 = vsub.f32 %v1247, %v2112
        %v2345 = vsub.f32 %v1248, %v2113
        %v2346 = vsub.f32 %v1249, %v2114
        %v2347 = vsub.f32 %v1250, %v2115
        %v2348 = vsub.f32 %v1251, %v2116
        %v2349 = vsub.f32 %v1252, %v2117
        %v2350 = vsub.f32 %v1253, %v2118
        %v2351 = vsub.f32 %v1254, %v2111
        %v2352 = vsub.f32 %v1255, %v2112
        %v2353 = vsub.f32 %v1256, %v2113
        %v2354 = vsub.f32 %v1257, %v2114
        %v2355 = vsub.f32 %v1258, %v2115
        %v2356 = vsub.f32 %v1259, %v2116
        %v2357 = vsub.f32 %v1260, %v2117
        %v2358 = vsub.f32 %v1261, %v2118
        %v2359 = vsub.f32 %v1262, %v2111
        %v2360 = vsub.f32 %v1263, %v2112
        %v2361 = vsub.f32 %v1264, %v2113
        %v2362 = vsub.f32 %v1265, %v2114
        %v2363 = vsub.f32 %v1266, %v2115
        %v2364 = vsub.f32 %v1267, %v2116
        %v2365 = vsub.f32 %v1268, %v2117
        %v2366 = vsub.f32 %v1269, %v2118
        %v2367 = vsub.f32 %v1270, %v2111
        %v2368 = vsub.f32 %v1271, %v2112
        %v2369 = vsub.f32 %v1272, %v2113
        %v2370 = vsub.f32 %v1273, %v2114
        %v2371 = vsub.f32 %v1274, %v2115
        %v2372 = vsub.f32 %v1275, %v2116
        %v2373 = vsub.f32 %v1276, %v2117
        %v2374 = vsub.f32 %v1277, %v2118
        %v2375 = vsub.f32 %v1278, %v2111
        %v2376 = vsub.f32 %v1279, %v2112
        %v2377 = vsub.f32 %v1280, %v2113
        %v2378 = vsub.f32 %v1281, %v2114
        %v2379 = vsub.f32 %v1282, %v2115
        %v2380 = vsub.f32 %v1283, %v2116
        %v2381 = vsub.f32 %v1284, %v2117
        %v2382 = vsub.f32 %v1285, %v2118
        %v2383 = vsub.f32 %v1286, %v2111
        %v2384 = vsub.f32 %v1287, %v2112
        %v2385 = vsub.f32 %v1288, %v2113
        %v2386 = vsub.f32 %v1289, %v2114
        %v2387 = vsub.f32 %v1290, %v2115
        %v2388 = vsub.f32 %v1291, %v2116
        %v2389 = vsub.f32 %v1292, %v2117
        %v2390 = vsub.f32 %v1293, %v2118
        %v2391 = vsub.f32 %v1294, %v2111
        %v2392 = vsub.f32 %v1295, %v2112
        %v2393 = vsub.f32 %v1296, %v2113
        %v2394 = vsub.f32 %v1297, %v2114
        %v2395 = vsub.f32 %v1298, %v2115
        %v2396 = vsub.f32 %v1299, %v2116
        %v2397 = vsub.f32 %v1300, %v2117
        %v2398 = vsub.f32 %v1301, %v2118
        %v2399 = vsub.f32 %v1302, %v2111
        %v2400 = vsub.f32 %v1303, %v2112
        %v2401 = vsub.f32 %v1304, %v2113
        %v2402 = vsub.f32 %v1305, %v2114
        %v2403 = vsub.f32 %v1306, %v2115
        %v2404 = vsub.f32 %v1307, %v2116
        %v2405 = vsub.f32 %v1308, %v2117
        %v2406 = vsub.f32 %v1309, %v2118
        %v2407 = vsub.f32 %v1310, %v2111
        %v2408 = vsub.f32 %v1311, %v2112
        %v2409 = vsub.f32 %v1312, %v2113
        %v2410 = vsub.f32 %v1313, %v2114
        %v2411 = vsub.f32 %v1314, %v2115
        %v2412 = vsub.f32 %v1315, %v2116
        %v2413 = vsub.f32 %v1316, %v2117
        %v2414 = vsub.f32 %v1317, %v2118
        %v2415 = vsub.f32 %v1318, %v2111
        %v2416 = vsub.f32 %v1319, %v2112
        %v2417 = vsub.f32 %v1320, %v2113
        %v2418 = vsub.f32 %v1321, %v2114
        %v2419 = vsub.f32 %v1322, %v2115
        %v2420 = vsub.f32 %v1323, %v2116
        %v2421 = vsub.f32 %v1324, %v2117
        %v2422 = vsub.f32 %v1325, %v2118
        %v2423 = vsub.f32 %v1326, %v2111
        %v2424 = vsub.f32 %v1327, %v2112
        %v2425 = vsub.f32 %v1328, %v2113
        %v2426 = vsub.f32 %v1329, %v2114
        %v2427 = vsub.f32 %v1330, %v2115
        %v2428 = vsub.f32 %v1331, %v2116
        %v2429 = vsub.f32 %v1332, %v2117
        %v2430 = vsub.f32 %v1333, %v2118
        %v2431 = vsub.f32 %v1334, %v2111
        %v2432 = vsub.f32 %v1335, %v2112
        %v2433 = vsub.f32 %v1336, %v2113
        %v2434 = vsub.f32 %v1337, %v2114
        %v2435 = vsub.f32 %v1338, %v2115
        %v2436 = vsub.f32 %v1339, %v2116
        %v2437 = vsub.f32 %v1340, %v2117
        %v2438 = vsub.f32 %v1341, %v2118
        %v2439 = vsub.f32 %v1342, %v2111
        %v2440 = vsub.f32 %v1343, %v2112
        %v2441 = vsub.f32 %v1344, %v2113
        %v2442 = vsub.f32 %v1345, %v2114
        %v2443 = vsub.f32 %v1346, %v2115
        %v2444 = vsub.f32 %v1347, %v2116
        %v2445 = vsub.f32 %v1348, %v2117
        %v2446 = vsub.f32 %v1349, %v2118
        %v2447 = vsub.f32 %v1350, %v2111
        %v2448 = vsub.f32 %v1351, %v2112
        %v2449 = vsub.f32 %v1352, %v2113
        %v2450 = vsub.f32 %v1353, %v2114
        %v2451 = vsub.f32 %v1354, %v2115
        %v2452 = vsub.f32 %v1355, %v2116
        %v2453 = vsub.f32 %v1356, %v2117
        %v2454 = vsub.f32 %v1357, %v2118
        %v2455 = vsub.f32 %v1358, %v2111
        %v2456 = vsub.f32 %v1359, %v2112
        %v2457 = vsub.f32 %v1360, %v2113
        %v2458 = vsub.f32 %v1361, %v2114
        %v2459 = vsub.f32 %v1362, %v2115
        %v2460 = vsub.f32 %v1363, %v2116
        %v2461 = vsub.f32 %v1364, %v2117
        %v2462 = vsub.f32 %v1365, %v2118
        %v2463 = vsub.f32 %v1366, %v2111
        %v2464 = vsub.f32 %v1367, %v2112
        %v2465 = vsub.f32 %v1368, %v2113
        %v2466 = vsub.f32 %v1369, %v2114
        %v2467 = vsub.f32 %v1370, %v2115
        %v2468 = vsub.f32 %v1371, %v2116
        %v2469 = vsub.f32 %v1372, %v2117
        %v2470 = vsub.f32 %v1373, %v2118
        %v2471 = vsub.f32 %v1374, %v2111
        %v2472 = vsub.f32 %v1375, %v2112
        %v2473 = vsub.f32 %v1376, %v2113
        %v2474 = vsub.f32 %v1377, %v2114
        %v2475 = vsub.f32 %v1378, %v2115
        %v2476 = vsub.f32 %v1379, %v2116
        %v2477 = vsub.f32 %v1380, %v2117
        %v2478 = vsub.f32 %v1381, %v2118
        %v2479 = vsub.f32 %v1382, %v2111
        %v2480 = vsub.f32 %v1383, %v2112
        %v2481 = vsub.f32 %v1384, %v2113
        %v2482 = vsub.f32 %v1385, %v2114
        %v2483 = vsub.f32 %v1386, %v2115
        %v2484 = vsub.f32 %v1387, %v2116
        %v2485 = vsub.f32 %v1388, %v2117
        %v2486 = vsub.f32 %v1389, %v2118
        %v2487 = vsub.f32 %v1390, %v2111
        %v2488 = vsub.f32 %v1391, %v2112
        %v2489 = vsub.f32 %v1392, %v2113
        %v2490 = vsub.f32 %v1393, %v2114
        %v2491 = vsub.f32 %v1394, %v2115
        %v2492 = vsub.f32 %v1395, %v2116
        %v2493 = vsub.f32 %v1396, %v2117
        %v2494 = vsub.f32 %v1397, %v2118
        %v2495 = vsub.f32 %v1398, %v2111
        %v2496 = vsub.f32 %v1399, %v2112
        %v2497 = vsub.f32 %v1400, %v2113
        %v2498 = vsub.f32 %v1401, %v2114
        %v2499 = vsub.f32 %v1402, %v2115
        %v2500 = vsub.f32 %v1403, %v2116
        %v2501 = vsub.f32 %v1404, %v2117
        %v2502 = vsub.f32 %v1405, %v2118
        %v2503 = vsub.f32 %v1406, %v2111
        %v2504 = vsub.f32 %v1407, %v2112
        %v2505 = vsub.f32 %v1408, %v2113
        %v2506 = vsub.f32 %v1409, %v2114
        %v2507 = vsub.f32 %v1410, %v2115
        %v2508 = vsub.f32 %v1411, %v2116
        %v2509 = vsub.f32 %v1412, %v2117
        %v2510 = vsub.f32 %v1413, %v2118
        %v2511 = vsub.f32 %v1414, %v2111
        %v2512 = vsub.f32 %v1415, %v2112
        %v2513 = vsub.f32 %v1416, %v2113
        %v2514 = vsub.f32 %v1417, %v2114
        %v2515 = vsub.f32 %v1418, %v2115
        %v2516 = vsub.f32 %v1419, %v2116
        %v2517 = vsub.f32 %v1420, %v2117
        %v2518 = vsub.f32 %v1421, %v2118
        %v2519 = vsub.f32 %v1422, %v2111
        %v2520 = vsub.f32 %v1423, %v2112
        %v2521 = vsub.f32 %v1424, %v2113
        %v2522 = vsub.f32 %v1425, %v2114
        %v2523 = vsub.f32 %v1426, %v2115
        %v2524 = vsub.f32 %v1427, %v2116
        %v2525 = vsub.f32 %v1428, %v2117
        %v2526 = vsub.f32 %v1429, %v2118
        %v2527 = vsub.f32 %v1430, %v2111
        %v2528 = vsub.f32 %v1431, %v2112
        %v2529 = vsub.f32 %v1432, %v2113
        %v2530 = vsub.f32 %v1433, %v2114
        %v2531 = vsub.f32 %v1434, %v2115
        %v2532 = vsub.f32 %v1435, %v2116
        %v2533 = vsub.f32 %v1436, %v2117
        %v2534 = vsub.f32 %v1437, %v2118
        %v2535 = vsub.f32 %v1438, %v2111
        %v2536 = vsub.f32 %v1439, %v2112
        %v2537 = vsub.f32 %v1440, %v2113
        %v2538 = vsub.f32 %v1441, %v2114
        %v2539 = vsub.f32 %v1442, %v2115
        %v2540 = vsub.f32 %v1443, %v2116
        %v2541 = vsub.f32 %v1444, %v2117
        %v2542 = vsub.f32 %v1445, %v2118
        %v2543 = vsub.f32 %v1446, %v2111
        %v2544 = vsub.f32 %v1447, %v2112
        %v2545 = vsub.f32 %v1448, %v2113
        %v2546 = vsub.f32 %v1449, %v2114
        %v2547 = vsub.f32 %v1450, %v2115
        %v2548 = vsub.f32 %v1451, %v2116
        %v2549 = vsub.f32 %v1452, %v2117
        %v2550 = vsub.f32 %v1453, %v2118
        %v2551 = vsub.f32 %v1454, %v2111
        %v2552 = vsub.f32 %v1455, %v2112
        %v2553 = vsub.f32 %v1456, %v2113
        %v2554 = vsub.f32 %v1457, %v2114
        %v2555 = vsub.f32 %v1458, %v2115
        %v2556 = vsub.f32 %v1459, %v2116
        %v2557 = vsub.f32 %v1460, %v2117
        %v2558 = vsub.f32 %v1461, %v2118
        %v2559 = vsub.f32 %v1462, %v2111
        %v2560 = vsub.f32 %v1463, %v2112
        %v2561 = vsub.f32 %v1464, %v2113
        %v2562 = vsub.f32 %v1465, %v2114
        %v2563 = vsub.f32 %v1466, %v2115
        %v2564 = vsub.f32 %v1467, %v2116
        %v2565 = vsub.f32 %v1468, %v2117
        %v2566 = vsub.f32 %v1469, %v2118
        %v2567 = vsub.f32 %v1470, %v2111
        %v2568 = vsub.f32 %v1471, %v2112
        %v2569 = vsub.f32 %v1472, %v2113
        %v2570 = vsub.f32 %v1473, %v2114
        %v2571 = vsub.f32 %v1474, %v2115
        %v2572 = vsub.f32 %v1475, %v2116
        %v2573 = vsub.f32 %v1476, %v2117
        %v2574 = vsub.f32 %v1477, %v2118
        %v2575 = vsub.f32 %v1478, %v2111
        %v2576 = vsub.f32 %v1479, %v2112
        %v2577 = vsub.f32 %v1480, %v2113
        %v2578 = vsub.f32 %v1481, %v2114
        %v2579 = vsub.f32 %v1482, %v2115
        %v2580 = vsub.f32 %v1483, %v2116
        %v2581 = vsub.f32 %v1484, %v2117
        %v2582 = vsub.f32 %v1485, %v2118
        %v2583 = vsub.f32 %v1486, %v2111
        %v2584 = vsub.f32 %v1487, %v2112
        %v2585 = vsub.f32 %v1488, %v2113
        %v2586 = vsub.f32 %v1489, %v2114
        %v2587 = vsub.f32 %v1490, %v2115
        %v2588 = vsub.f32 %v1491, %v2116
        %v2589 = vsub.f32 %v1492, %v2117
        %v2590 = vsub.f32 %v1493, %v2118
        %v2591 = vsub.f32 %v1494, %v2111
        %v2592 = vsub.f32 %v1495, %v2112
        %v2593 = vsub.f32 %v1496, %v2113
        %v2594 = vsub.f32 %v1497, %v2114
        %v2595 = vsub.f32 %v1498, %v2115
        %v2596 = vsub.f32 %v1499, %v2116
        %v2597 = vsub.f32 %v1500, %v2117
        %v2598 = vsub.f32 %v1501, %v2118
        %v2599 = vsub.f32 %v1502, %v2111
        %v2600 = vsub.f32 %v1503, %v2112
        %v2601 = vsub.f32 %v1504, %v2113
        %v2602 = vsub.f32 %v1505, %v2114
        %v2603 = vsub.f32 %v1506, %v2115
        %v2604 = vsub.f32 %v1507, %v2116
        %v2605 = vsub.f32 %v1508, %v2117
        %v2606 = vsub.f32 %v1509, %v2118
        %v2607 = vsub.f32 %v1510, %v2111
        %v2608 = vsub.f32 %v1511, %v2112
        %v2609 = vsub.f32 %v1512, %v2113
        %v2610 = vsub.f32 %v1513, %v2114
        %v2611 = vsub.f32 %v1514, %v2115
        %v2612 = vsub.f32 %v1515, %v2116
        %v2613 = vsub.f32 %v1516, %v2117
        %v2614 = vsub.f32 %v1517, %v2118
        %v2615 = vsub.f32 %v1518, %v2111
        %v2616 = vsub.f32 %v1519, %v2112
        %v2617 = vsub.f32 %v1520, %v2113
        %v2618 = vsub.f32 %v1521, %v2114
        %v2619 = vsub.f32 %v1522, %v2115
        %v2620 = vsub.f32 %v1523, %v2116
        %v2621 = vsub.f32 %v1524, %v2117
        %v2622 = vsub.f32 %v1525, %v2118
        %v2623 = vsub.f32 %v1526, %v2111
        %v2624 = vsub.f32 %v1527, %v2112
        %v2625 = vsub.f32 %v1528, %v2113
        %v2626 = vsub.f32 %v1529, %v2114
        %v2627 = vsub.f32 %v1530, %v2115
        %v2628 = vsub.f32 %v1531, %v2116
        %v2629 = vsub.f32 %v1532, %v2117
        %v2630 = vsub.f32 %v1533, %v2118
        %v2631 = vmul.f32 %v2119, 1.442695
        %v2632 = vpow.pop %v2631
        %v2633 = vmul.f32 %v2120, 1.442695
        %v2634 = vpow.pop %v2633
        %v2635 = vmul.f32 %v2121, 1.442695
        %v2636 = vpow.pop %v2635
        %v2637 = vmul.f32 %v2122, 1.442695
        %v2638 = vpow.pop %v2637
        %v2639 = vmul.f32 %v2123, 1.442695
        %v2640 = vpow.pop %v2639
        %v2641 = vmul.f32 %v2124, 1.442695
        %v2642 = vpow.pop %v2641
        %v2643 = vmul.f32 %v2125, 1.442695
        %v2644 = vpow.pop %v2643
        %v2645 = vmul.f32 %v2126, 1.442695
        %v2646 = vpow.pop %v2645
        %v2647 = vmul.f32 %v2127, 1.442695
        %v2648 = vpow.pop %v2647
        %v2649 = vmul.f32 %v2128, 1.442695
        %v2650 = vpow.pop %v2649
        %v2651 = vmul.f32 %v2129, 1.442695
        %v2652 = vpow.pop %v2651
        %v2653 = vmul.f32 %v2130, 1.442695
        %v2654 = vpow.pop %v2653
        %v2655 = vmul.f32 %v2131, 1.442695
        %v2656 = vpow.pop %v2655
        %v2657 = vmul.f32 %v2132, 1.442695
        %v2658 = vpow.pop %v2657
        %v2659 = vmul.f32 %v2133, 1.442695
        %v2660 = vpow.pop %v2659
        %v2661 = vmul.f32 %v2134, 1.442695
        %v2662 = vpow.pop %v2661
        %v2663 = vmul.f32 %v2135, 1.442695
        %v2664 = vpow.pop %v2663
        %v2665 = vmul.f32 %v2136, 1.442695
        %v2666 = vpow.pop %v2665
        %v2667 = vmul.f32 %v2137, 1.442695
        %v2668 = vpow.pop %v2667
        %v2669 = vmul.f32 %v2138, 1.442695
        %v2670 = vpow.pop %v2669
        %v2671 = vmul.f32 %v2139, 1.442695
        %v2672 = vpow.pop %v2671
        %v2673 = vmul.f32 %v2140, 1.442695
        %v2674 = vpow.pop %v2673
        %v2675 = vmul.f32 %v2141, 1.442695
        %v2676 = vpow.pop %v2675
        %v2677 = vmul.f32 %v2142, 1.442695
        %v2678 = vpow.pop %v2677
        %v2679 = vmul.f32 %v2143, 1.442695
        %v2680 = vpow.pop %v2679
        %v2681 = vmul.f32 %v2144, 1.442695
        %v2682 = vpow.pop %v2681
        %v2683 = vmul.f32 %v2145, 1.442695
        %v2684 = vpow.pop %v2683
        %v2685 = vmul.f32 %v2146, 1.442695
        %v2686 = vpow.pop %v2685
        %v2687 = vmul.f32 %v2147, 1.442695
        %v2688 = vpow.pop %v2687
        %v2689 = vmul.f32 %v2148, 1.442695
        %v2690 = vpow.pop %v2689
        %v2691 = vmul.f32 %v2149, 1.442695
        %v2692 = vpow.pop %v2691
        %v2693 = vmul.f32 %v2150, 1.442695
        %v2694 = vpow.pop %v2693
        %v2695 = vmul.f32 %v2151, 1.442695
        %v2696 = vpow.pop %v2695
        %v2697 = vmul.f32 %v2152, 1.442695
        %v2698 = vpow.pop %v2697
        %v2699 = vmul.f32 %v2153, 1.442695
        %v2700 = vpow.pop %v2699
        %v2701 = vmul.f32 %v2154, 1.442695
        %v2702 = vpow.pop %v2701
        %v2703 = vmul.f32 %v2155, 1.442695
        %v2704 = vpow.pop %v2703
        %v2705 = vmul.f32 %v2156, 1.442695
        %v2706 = vpow.pop %v2705
        %v2707 = vmul.f32 %v2157, 1.442695
        %v2708 = vpow.pop %v2707
        %v2709 = vmul.f32 %v2158, 1.442695
        %v2710 = vpow.pop %v2709
        %v2711 = vmul.f32 %v2159, 1.442695
        %v2712 = vpow.pop %v2711
        %v2713 = vmul.f32 %v2160, 1.442695
        %v2714 = vpow.pop %v2713
        %v2715 = vmul.f32 %v2161, 1.442695
        %v2716 = vpow.pop %v2715
        %v2717 = vmul.f32 %v2162, 1.442695
        %v2718 = vpow.pop %v2717
        %v2719 = vmul.f32 %v2163, 1.442695
        %v2720 = vpow.pop %v2719
        %v2721 = vmul.f32 %v2164, 1.442695
        %v2722 = vpow.pop %v2721
        %v2723 = vmul.f32 %v2165, 1.442695
        %v2724 = vpow.pop %v2723
        %v2725 = vmul.f32 %v2166, 1.442695
        %v2726 = vpow.pop %v2725
        %v2727 = vmul.f32 %v2167, 1.442695
        %v2728 = vpow.pop %v2727
        %v2729 = vmul.f32 %v2168, 1.442695
        %v2730 = vpow.pop %v2729
        %v2731 = vmul.f32 %v2169, 1.442695
        %v2732 = vpow.pop %v2731
        %v2733 = vmul.f32 %v2170, 1.442695
        %v2734 = vpow.pop %v2733
        %v2735 = vmul.f32 %v2171, 1.442695
        %v2736 = vpow.pop %v2735
        %v2737 = vmul.f32 %v2172, 1.442695
        %v2738 = vpow.pop %v2737
        %v2739 = vmul.f32 %v2173, 1.442695
        %v2740 = vpow.pop %v2739
        %v2741 = vmul.f32 %v2174, 1.442695
        %v2742 = vpow.pop %v2741
        %v2743 = vmul.f32 %v2175, 1.442695
        %v2744 = vpow.pop %v2743
        %v2745 = vmul.f32 %v2176, 1.442695
        %v2746 = vpow.pop %v2745
        %v2747 = vmul.f32 %v2177, 1.442695
        %v2748 = vpow.pop %v2747
        %v2749 = vmul.f32 %v2178, 1.442695
        %v2750 = vpow.pop %v2749
        %v2751 = vmul.f32 %v2179, 1.442695
        %v2752 = vpow.pop %v2751
        %v2753 = vmul.f32 %v2180, 1.442695
        %v2754 = vpow.pop %v2753
        %v2755 = vmul.f32 %v2181, 1.442695
        %v2756 = vpow.pop %v2755
        %v2757 = vmul.f32 %v2182, 1.442695
        %v2758 = vpow.pop %v2757
        %v2759 = vmul.f32 %v2183, 1.442695
        %v2760 = vpow.pop %v2759
        %v2761 = vmul.f32 %v2184, 1.442695
        %v2762 = vpow.pop %v2761
        %v2763 = vmul.f32 %v2185, 1.442695
        %v2764 = vpow.pop %v2763
        %v2765 = vmul.f32 %v2186, 1.442695
        %v2766 = vpow.pop %v2765
        %v2767 = vmul.f32 %v2187, 1.442695
        %v2768 = vpow.pop %v2767
        %v2769 = vmul.f32 %v2188, 1.442695
        %v2770 = vpow.pop %v2769
        %v2771 = vmul.f32 %v2189, 1.442695
        %v2772 = vpow.pop %v2771
        %v2773 = vmul.f32 %v2190, 1.442695
        %v2774 = vpow.pop %v2773
        %v2775 = vmul.f32 %v2191, 1.442695
        %v2776 = vpow.pop %v2775
        %v2777 = vmul.f32 %v2192, 1.442695
        %v2778 = vpow.pop %v2777
        %v2779 = vmul.f32 %v2193, 1.442695
        %v2780 = vpow.pop %v2779
        %v2781 = vmul.f32 %v2194, 1.442695
        %v2782 = vpow.pop %v2781
        %v2783 = vmul.f32 %v2195, 1.442695
        %v2784 = vpow.pop %v2783
        %v2785 = vmul.f32 %v2196, 1.442695
        %v2786 = vpow.pop %v2785
        %v2787 = vmul.f32 %v2197, 1.442695
        %v2788 = vpow.pop %v2787
        %v2789 = vmul.f32 %v2198, 1.442695
        %v2790 = vpow.pop %v2789
        %v2791 = vmul.f32 %v2199, 1.442695
        %v2792 = vpow.pop %v2791
        %v2793 = vmul.f32 %v2200, 1.442695
        %v2794 = vpow.pop %v2793
        %v2795 = vmul.f32 %v2201, 1.442695
        %v2796 = vpow.pop %v2795
        %v2797 = vmul.f32 %v2202, 1.442695
        %v2798 = vpow.pop %v2797
        %v2799 = vmul.f32 %v2203, 1.442695
        %v2800 = vpow.pop %v2799
        %v2801 = vmul.f32 %v2204, 1.442695
        %v2802 = vpow.pop %v2801
        %v2803 = vmul.f32 %v2205, 1.442695
        %v2804 = vpow.pop %v2803
        %v2805 = vmul.f32 %v2206, 1.442695
        %v2806 = vpow.pop %v2805
        %v2807 = vmul.f32 %v2207, 1.442695
        %v2808 = vpow.pop %v2807
        %v2809 = vmul.f32 %v2208, 1.442695
        %v2810 = vpow.pop %v2809
        %v2811 = vmul.f32 %v2209, 1.442695
        %v2812 = vpow.pop %v2811
        %v2813 = vmul.f32 %v2210, 1.442695
        %v2814 = vpow.pop %v2813
        %v2815 = vmul.f32 %v2211, 1.442695
        %v2816 = vpow.pop %v2815
        %v2817 = vmul.f32 %v2212, 1.442695
        %v2818 = vpow.pop %v2817
        %v2819 = vmul.f32 %v2213, 1.442695
        %v2820 = vpow.pop %v2819
        %v2821 = vmul.f32 %v2214, 1.442695
        %v2822 = vpow.pop %v2821
        %v2823 = vmul.f32 %v2215, 1.442695
        %v2824 = vpow.pop %v2823
        %v2825 = vmul.f32 %v2216, 1.442695
        %v2826 = vpow.pop %v2825
        %v2827 = vmul.f32 %v2217, 1.442695
        %v2828 = vpow.pop %v2827
        %v2829 = vmul.f32 %v2218, 1.442695
        %v2830 = vpow.pop %v2829
        %v2831 = vmul.f32 %v2219, 1.442695
        %v2832 = vpow.pop %v2831
        %v2833 = vmul.f32 %v2220, 1.442695
        %v2834 = vpow.pop %v2833
        %v2835 = vmul.f32 %v2221, 1.442695
        %v2836 = vpow.pop %v2835
        %v2837 = vmul.f32 %v2222, 1.442695
        %v2838 = vpow.pop %v2837
        %v2839 = vmul.f32 %v2223, 1.442695
        %v2840 = vpow.pop %v2839
        %v2841 = vmul.f32 %v2224, 1.442695
        %v2842 = vpow.pop %v2841
        %v2843 = vmul.f32 %v2225, 1.442695
        %v2844 = vpow.pop %v2843
        %v2845 = vmul.f32 %v2226, 1.442695
        %v2846 = vpow.pop %v2845
        %v2847 = vmul.f32 %v2227, 1.442695
        %v2848 = vpow.pop %v2847
        %v2849 = vmul.f32 %v2228, 1.442695
        %v2850 = vpow.pop %v2849
        %v2851 = vmul.f32 %v2229, 1.442695
        %v2852 = vpow.pop %v2851
        %v2853 = vmul.f32 %v2230, 1.442695
        %v2854 = vpow.pop %v2853
        %v2855 = vmul.f32 %v2231, 1.442695
        %v2856 = vpow.pop %v2855
        %v2857 = vmul.f32 %v2232, 1.442695
        %v2858 = vpow.pop %v2857
        %v2859 = vmul.f32 %v2233, 1.442695
        %v2860 = vpow.pop %v2859
        %v2861 = vmul.f32 %v2234, 1.442695
        %v2862 = vpow.pop %v2861
        %v2863 = vmul.f32 %v2235, 1.442695
        %v2864 = vpow.pop %v2863
        %v2865 = vmul.f32 %v2236, 1.442695
        %v2866 = vpow.pop %v2865
        %v2867 = vmul.f32 %v2237, 1.442695
        %v2868 = vpow.pop %v2867
        %v2869 = vmul.f32 %v2238, 1.442695
        %v2870 = vpow.pop %v2869
        %v2871 = vmul.f32 %v2239, 1.442695
        %v2872 = vpow.pop %v2871
        %v2873 = vmul.f32 %v2240, 1.442695
        %v2874 = vpow.pop %v2873
        %v2875 = vmul.f32 %v2241, 1.442695
        %v2876 = vpow.pop %v2875
        %v2877 = vmul.f32 %v2242, 1.442695
        %v2878 = vpow.pop %v2877
        %v2879 = vmul.f32 %v2243, 1.442695
        %v2880 = vpow.pop %v2879
        %v2881 = vmul.f32 %v2244, 1.442695
        %v2882 = vpow.pop %v2881
        %v2883 = vmul.f32 %v2245, 1.442695
        %v2884 = vpow.pop %v2883
        %v2885 = vmul.f32 %v2246, 1.442695
        %v2886 = vpow.pop %v2885
        %v2887 = vmul.f32 %v2247, 1.442695
        %v2888 = vpow.pop %v2887
        %v2889 = vmul.f32 %v2248, 1.442695
        %v2890 = vpow.pop %v2889
        %v2891 = vmul.f32 %v2249, 1.442695
        %v2892 = vpow.pop %v2891
        %v2893 = vmul.f32 %v2250, 1.442695
        %v2894 = vpow.pop %v2893
        %v2895 = vmul.f32 %v2251, 1.442695
        %v2896 = vpow.pop %v2895
        %v2897 = vmul.f32 %v2252, 1.442695
        %v2898 = vpow.pop %v2897
        %v2899 = vmul.f32 %v2253, 1.442695
        %v2900 = vpow.pop %v2899
        %v2901 = vmul.f32 %v2254, 1.442695
        %v2902 = vpow.pop %v2901
        %v2903 = vmul.f32 %v2255, 1.442695
        %v2904 = vpow.pop %v2903
        %v2905 = vmul.f32 %v2256, 1.442695
        %v2906 = vpow.pop %v2905
        %v2907 = vmul.f32 %v2257, 1.442695
        %v2908 = vpow.pop %v2907
        %v2909 = vmul.f32 %v2258, 1.442695
        %v2910 = vpow.pop %v2909
        %v2911 = vmul.f32 %v2259, 1.442695
        %v2912 = vpow.pop %v2911
        %v2913 = vmul.f32 %v2260, 1.442695
        %v2914 = vpow.pop %v2913
        %v2915 = vmul.f32 %v2261, 1.442695
        %v2916 = vpow.pop %v2915
        %v2917 = vmul.f32 %v2262, 1.442695
        %v2918 = vpow.pop %v2917
        %v2919 = vmul.f32 %v2263, 1.442695
        %v2920 = vpow.pop %v2919
        %v2921 = vmul.f32 %v2264, 1.442695
        %v2922 = vpow.pop %v2921
        %v2923 = vmul.f32 %v2265, 1.442695
        %v2924 = vpow.pop %v2923
        %v2925 = vmul.f32 %v2266, 1.442695
        %v2926 = vpow.pop %v2925
        %v2927 = vmul.f32 %v2267, 1.442695
        %v2928 = vpow.pop %v2927
        %v2929 = vmul.f32 %v2268, 1.442695
        %v2930 = vpow.pop %v2929
        %v2931 = vmul.f32 %v2269, 1.442695
        %v2932 = vpow.pop %v2931
        %v2933 = vmul.f32 %v2270, 1.442695
        %v2934 = vpow.pop %v2933
        %v2935 = vmul.f32 %v2271, 1.442695
        %v2936 = vpow.pop %v2935
        %v2937 = vmul.f32 %v2272, 1.442695
        %v2938 = vpow.pop %v2937
        %v2939 = vmul.f32 %v2273, 1.442695
        %v2940 = vpow.pop %v2939
        %v2941 = vmul.f32 %v2274, 1.442695
        %v2942 = vpow.pop %v2941
        %v2943 = vmul.f32 %v2275, 1.442695
        %v2944 = vpow.pop %v2943
        %v2945 = vmul.f32 %v2276, 1.442695
        %v2946 = vpow.pop %v2945
        %v2947 = vmul.f32 %v2277, 1.442695
        %v2948 = vpow.pop %v2947
        %v2949 = vmul.f32 %v2278, 1.442695
        %v2950 = vpow.pop %v2949
        %v2951 = vmul.f32 %v2279, 1.442695
        %v2952 = vpow.pop %v2951
        %v2953 = vmul.f32 %v2280, 1.442695
        %v2954 = vpow.pop %v2953
        %v2955 = vmul.f32 %v2281, 1.442695
        %v2956 = vpow.pop %v2955
        %v2957 = vmul.f32 %v2282, 1.442695
        %v2958 = vpow.pop %v2957
        %v2959 = vmul.f32 %v2283, 1.442695
        %v2960 = vpow.pop %v2959
        %v2961 = vmul.f32 %v2284, 1.442695
        %v2962 = vpow.pop %v2961
        %v2963 = vmul.f32 %v2285, 1.442695
        %v2964 = vpow.pop %v2963
        %v2965 = vmul.f32 %v2286, 1.442695
        %v2966 = vpow.pop %v2965
        %v2967 = vmul.f32 %v2287, 1.442695
        %v2968 = vpow.pop %v2967
        %v2969 = vmul.f32 %v2288, 1.442695
        %v2970 = vpow.pop %v2969
        %v2971 = vmul.f32 %v2289, 1.442695
        %v2972 = vpow.pop %v2971
        %v2973 = vmul.f32 %v2290, 1.442695
        %v2974 = vpow.pop %v2973
        %v2975 = vmul.f32 %v2291, 1.442695
        %v2976 = vpow.pop %v2975
        %v2977 = vmul.f32 %v2292, 1.442695
        %v2978 = vpow.pop %v2977
        %v2979 = vmul.f32 %v2293, 1.442695
        %v2980 = vpow.pop %v2979
        %v2981 = vmul.f32 %v2294, 1.442695
        %v2982 = vpow.pop %v2981
        %v2983 = vmul.f32 %v2295, 1.442695
        %v2984 = vpow.pop %v2983
        %v2985 = vmul.f32 %v2296, 1.442695
        %v2986 = vpow.pop %v2985
        %v2987 = vmul.f32 %v2297, 1.442695
        %v2988 = vpow.pop %v2987
        %v2989 = vmul.f32 %v2298, 1.442695
        %v2990 = vpow.pop %v2989
        %v2991 = vmul.f32 %v2299, 1.442695
        %v2992 = vpow.pop %v2991
        %v2993 = vmul.f32 %v2300, 1.442695
        %v2994 = vpow.pop %v2993
        %v2995 = vmul.f32 %v2301, 1.442695
        %v2996 = vpow.pop %v2995
        %v2997 = vmul.f32 %v2302, 1.442695
        %v2998 = vpow.pop %v2997
        %v2999 = vmul.f32 %v2303, 1.442695
        %v3000 = vpow.pop %v2999
        %v3001 = vmul.f32 %v2304, 1.442695
        %v3002 = vpow.pop %v3001
        %v3003 = vmul.f32 %v2305, 1.442695
        %v3004 = vpow.pop %v3003
        %v3005 = vmul.f32 %v2306, 1.442695
        %v3006 = vpow.pop %v3005
        %v3007 = vmul.f32 %v2307, 1.442695
        %v3008 = vpow.pop %v3007
        %v3009 = vmul.f32 %v2308, 1.442695
        %v3010 = vpow.pop %v3009
        %v3011 = vmul.f32 %v2309, 1.442695
        %v3012 = vpow.pop %v3011
        %v3013 = vmul.f32 %v2310, 1.442695
        %v3014 = vpow.pop %v3013
        %v3015 = vmul.f32 %v2311, 1.442695
        %v3016 = vpow.pop %v3015
        %v3017 = vmul.f32 %v2312, 1.442695
        %v3018 = vpow.pop %v3017
        %v3019 = vmul.f32 %v2313, 1.442695
        %v3020 = vpow.pop %v3019
        %v3021 = vmul.f32 %v2314, 1.442695
        %v3022 = vpow.pop %v3021
        %v3023 = vmul.f32 %v2315, 1.442695
        %v3024 = vpow.pop %v3023
        %v3025 = vmul.f32 %v2316, 1.442695
        %v3026 = vpow.pop %v3025
        %v3027 = vmul.f32 %v2317, 1.442695
        %v3028 = vpow.pop %v3027
        %v3029 = vmul.f32 %v2318, 1.442695
        %v3030 = vpow.pop %v3029
        %v3031 = vmul.f32 %v2319, 1.442695
        %v3032 = vpow.pop %v3031
        %v3033 = vmul.f32 %v2320, 1.442695
        %v3034 = vpow.pop %v3033
        %v3035 = vmul.f32 %v2321, 1.442695
        %v3036 = vpow.pop %v3035
        %v3037 = vmul.f32 %v2322, 1.442695
        %v3038 = vpow.pop %v3037
        %v3039 = vmul.f32 %v2323, 1.442695
        %v3040 = vpow.pop %v3039
        %v3041 = vmul.f32 %v2324, 1.442695
        %v3042 = vpow.pop %v3041
        %v3043 = vmul.f32 %v2325, 1.442695
        %v3044 = vpow.pop %v3043
        %v3045 = vmul.f32 %v2326, 1.442695
        %v3046 = vpow.pop %v3045
        %v3047 = vmul.f32 %v2327, 1.442695
        %v3048 = vpow.pop %v3047
        %v3049 = vmul.f32 %v2328, 1.442695
        %v3050 = vpow.pop %v3049
        %v3051 = vmul.f32 %v2329, 1.442695
        %v3052 = vpow.pop %v3051
        %v3053 = vmul.f32 %v2330, 1.442695
        %v3054 = vpow.pop %v3053
        %v3055 = vmul.f32 %v2331, 1.442695
        %v3056 = vpow.pop %v3055
        %v3057 = vmul.f32 %v2332, 1.442695
        %v3058 = vpow.pop %v3057
        %v3059 = vmul.f32 %v2333, 1.442695
        %v3060 = vpow.pop %v3059
        %v3061 = vmul.f32 %v2334, 1.442695
        %v3062 = vpow.pop %v3061
        %v3063 = vmul.f32 %v2335, 1.442695
        %v3064 = vpow.pop %v3063
        %v3065 = vmul.f32 %v2336, 1.442695
        %v3066 = vpow.pop %v3065
        %v3067 = vmul.f32 %v2337, 1.442695
        %v3068 = vpow.pop %v3067
        %v3069 = vmul.f32 %v2338, 1.442695
        %v3070 = vpow.pop %v3069
        %v3071 = vmul.f32 %v2339, 1.442695
        %v3072 = vpow.pop %v3071
        %v3073 = vmul.f32 %v2340, 1.442695
        %v3074 = vpow.pop %v3073
        %v3075 = vmul.f32 %v2341, 1.442695
        %v3076 = vpow.pop %v3075
        %v3077 = vmul.f32 %v2342, 1.442695
        %v3078 = vpow.pop %v3077
        %v3079 = vmul.f32 %v2343, 1.442695
        %v3080 = vpow.pop %v3079
        %v3081 = vmul.f32 %v2344, 1.442695
        %v3082 = vpow.pop %v3081
        %v3083 = vmul.f32 %v2345, 1.442695
        %v3084 = vpow.pop %v3083
        %v3085 = vmul.f32 %v2346, 1.442695
        %v3086 = vpow.pop %v3085
        %v3087 = vmul.f32 %v2347, 1.442695
        %v3088 = vpow.pop %v3087
        %v3089 = vmul.f32 %v2348, 1.442695
        %v3090 = vpow.pop %v3089
        %v3091 = vmul.f32 %v2349, 1.442695
        %v3092 = vpow.pop %v3091
        %v3093 = vmul.f32 %v2350, 1.442695
        %v3094 = vpow.pop %v3093
        %v3095 = vmul.f32 %v2351, 1.442695
        %v3096 = vpow.pop %v3095
        %v3097 = vmul.f32 %v2352, 1.442695
        %v3098 = vpow.pop %v3097
        %v3099 = vmul.f32 %v2353, 1.442695
        %v3100 = vpow.pop %v3099
        %v3101 = vmul.f32 %v2354, 1.442695
        %v3102 = vpow.pop %v3101
        %v3103 = vmul.f32 %v2355, 1.442695
        %v3104 = vpow.pop %v3103
        %v3105 = vmul.f32 %v2356, 1.442695
        %v3106 = vpow.pop %v3105
        %v3107 = vmul.f32 %v2357, 1.442695
        %v3108 = vpow.pop %v3107
        %v3109 = vmul.f32 %v2358, 1.442695
        %v3110 = vpow.pop %v3109
        %v3111 = vmul.f32 %v2359, 1.442695
        %v3112 = vpow.pop %v3111
        %v3113 = vmul.f32 %v2360, 1.442695
        %v3114 = vpow.pop %v3113
        %v3115 = vmul.f32 %v2361, 1.442695
        %v3116 = vpow.pop %v3115
        %v3117 = vmul.f32 %v2362, 1.442695
        %v3118 = vpow.pop %v3117
        %v3119 = vmul.f32 %v2363, 1.442695
        %v3120 = vpow.pop %v3119
        %v3121 = vmul.f32 %v2364, 1.442695
        %v3122 = vpow.pop %v3121
        %v3123 = vmul.f32 %v2365, 1.442695
        %v3124 = vpow.pop %v3123
        %v3125 = vmul.f32 %v2366, 1.442695
        %v3126 = vpow.pop %v3125
        %v3127 = vmul.f32 %v2367, 1.442695
        %v3128 = vpow.pop %v3127
        %v3129 = vmul.f32 %v2368, 1.442695
        %v3130 = vpow.pop %v3129
        %v3131 = vmul.f32 %v2369, 1.442695
        %v3132 = vpow.pop %v3131
        %v3133 = vmul.f32 %v2370, 1.442695
        %v3134 = vpow.pop %v3133
        %v3135 = vmul.f32 %v2371, 1.442695
        %v3136 = vpow.pop %v3135
        %v3137 = vmul.f32 %v2372, 1.442695
        %v3138 = vpow.pop %v3137
        %v3139 = vmul.f32 %v2373, 1.442695
        %v3140 = vpow.pop %v3139
        %v3141 = vmul.f32 %v2374, 1.442695
        %v3142 = vpow.pop %v3141
        %v3143 = vmul.f32 %v2375, 1.442695
        %v3144 = vpow.pop %v3143
        %v3145 = vmul.f32 %v2376, 1.442695
        %v3146 = vpow.pop %v3145
        %v3147 = vmul.f32 %v2377, 1.442695
        %v3148 = vpow.pop %v3147
        %v3149 = vmul.f32 %v2378, 1.442695
        %v3150 = vpow.pop %v3149
        %v3151 = vmul.f32 %v2379, 1.442695
        %v3152 = vpow.pop %v3151
        %v3153 = vmul.f32 %v2380, 1.442695
        %v3154 = vpow.pop %v3153
        %v3155 = vmul.f32 %v2381, 1.442695
        %v3156 = vpow.pop %v3155
        %v3157 = vmul.f32 %v2382, 1.442695
        %v3158 = vpow.pop %v3157
        %v3159 = vmul.f32 %v2383, 1.442695
        %v3160 = vpow.pop %v3159
        %v3161 = vmul.f32 %v2384, 1.442695
        %v3162 = vpow.pop %v3161
        %v3163 = vmul.f32 %v2385, 1.442695
        %v3164 = vpow.pop %v3163
        %v3165 = vmul.f32 %v2386, 1.442695
        %v3166 = vpow.pop %v3165
        %v3167 = vmul.f32 %v2387, 1.442695
        %v3168 = vpow.pop %v3167
        %v3169 = vmul.f32 %v2388, 1.442695
        %v3170 = vpow.pop %v3169
        %v3171 = vmul.f32 %v2389, 1.442695
        %v3172 = vpow.pop %v3171
        %v3173 = vmul.f32 %v2390, 1.442695
        %v3174 = vpow.pop %v3173
        %v3175 = vmul.f32 %v2391, 1.442695
        %v3176 = vpow.pop %v3175
        %v3177 = vmul.f32 %v2392, 1.442695
        %v3178 = vpow.pop %v3177
        %v3179 = vmul.f32 %v2393, 1.442695
        %v3180 = vpow.pop %v3179
        %v3181 = vmul.f32 %v2394, 1.442695
        %v3182 = vpow.pop %v3181
        %v3183 = vmul.f32 %v2395, 1.442695
        %v3184 = vpow.pop %v3183
        %v3185 = vmul.f32 %v2396, 1.442695
        %v3186 = vpow.pop %v3185
        %v3187 = vmul.f32 %v2397, 1.442695
        %v3188 = vpow.pop %v3187
        %v3189 = vmul.f32 %v2398, 1.442695
        %v3190 = vpow.pop %v3189
        %v3191 = vmul.f32 %v2399, 1.442695
        %v3192 = vpow.pop %v3191
        %v3193 = vmul.f32 %v2400, 1.442695
        %v3194 = vpow.pop %v3193
        %v3195 = vmul.f32 %v2401, 1.442695
        %v3196 = vpow.pop %v3195
        %v3197 = vmul.f32 %v2402, 1.442695
        %v3198 = vpow.pop %v3197
        %v3199 = vmul.f32 %v2403, 1.442695
        %v3200 = vpow.pop %v3199
        %v3201 = vmul.f32 %v2404, 1.442695
        %v3202 = vpow.pop %v3201
        %v3203 = vmul.f32 %v2405, 1.442695
        %v3204 = vpow.pop %v3203
        %v3205 = vmul.f32 %v2406, 1.442695
        %v3206 = vpow.pop %v3205
        %v3207 = vmul.f32 %v2407, 1.442695
        %v3208 = vpow.pop %v3207
        %v3209 = vmul.f32 %v2408, 1.442695
        %v3210 = vpow.pop %v3209
        %v3211 = vmul.f32 %v2409, 1.442695
        %v3212 = vpow.pop %v3211
        %v3213 = vmul.f32 %v2410, 1.442695
        %v3214 = vpow.pop %v3213
        %v3215 = vmul.f32 %v2411, 1.442695
        %v3216 = vpow.pop %v3215
        %v3217 = vmul.f32 %v2412, 1.442695
        %v3218 = vpow.pop %v3217
        %v3219 = vmul.f32 %v2413, 1.442695
        %v3220 = vpow.pop %v3219
        %v3221 = vmul.f32 %v2414, 1.442695
        %v3222 = vpow.pop %v3221
        %v3223 = vmul.f32 %v2415, 1.442695
        %v3224 = vpow.pop %v3223
        %v3225 = vmul.f32 %v2416, 1.442695
        %v3226 = vpow.pop %v3225
        %v3227 = vmul.f32 %v2417, 1.442695
        %v3228 = vpow.pop %v3227
        %v3229 = vmul.f32 %v2418, 1.442695
        %v3230 = vpow.pop %v3229
        %v3231 = vmul.f32 %v2419, 1.442695
        %v3232 = vpow.pop %v3231
        %v3233 = vmul.f32 %v2420, 1.442695
        %v3234 = vpow.pop %v3233
        %v3235 = vmul.f32 %v2421, 1.442695
        %v3236 = vpow.pop %v3235
        %v3237 = vmul.f32 %v2422, 1.442695
        %v3238 = vpow.pop %v3237
        %v3239 = vmul.f32 %v2423, 1.442695
        %v3240 = vpow.pop %v3239
        %v3241 = vmul.f32 %v2424, 1.442695
        %v3242 = vpow.pop %v3241
        %v3243 = vmul.f32 %v2425, 1.442695
        %v3244 = vpow.pop %v3243
        %v3245 = vmul.f32 %v2426, 1.442695
        %v3246 = vpow.pop %v3245
        %v3247 = vmul.f32 %v2427, 1.442695
        %v3248 = vpow.pop %v3247
        %v3249 = vmul.f32 %v2428, 1.442695
        %v3250 = vpow.pop %v3249
        %v3251 = vmul.f32 %v2429, 1.442695
        %v3252 = vpow.pop %v3251
        %v3253 = vmul.f32 %v2430, 1.442695
        %v3254 = vpow.pop %v3253
        %v3255 = vmul.f32 %v2431, 1.442695
        %v3256 = vpow.pop %v3255
        %v3257 = vmul.f32 %v2432, 1.442695
        %v3258 = vpow.pop %v3257
        %v3259 = vmul.f32 %v2433, 1.442695
        %v3260 = vpow.pop %v3259
        %v3261 = vmul.f32 %v2434, 1.442695
        %v3262 = vpow.pop %v3261
        %v3263 = vmul.f32 %v2435, 1.442695
        %v3264 = vpow.pop %v3263
        %v3265 = vmul.f32 %v2436, 1.442695
        %v3266 = vpow.pop %v3265
        %v3267 = vmul.f32 %v2437, 1.442695
        %v3268 = vpow.pop %v3267
        %v3269 = vmul.f32 %v2438, 1.442695
        %v3270 = vpow.pop %v3269
        %v3271 = vmul.f32 %v2439, 1.442695
        %v3272 = vpow.pop %v3271
        %v3273 = vmul.f32 %v2440, 1.442695
        %v3274 = vpow.pop %v3273
        %v3275 = vmul.f32 %v2441, 1.442695
        %v3276 = vpow.pop %v3275
        %v3277 = vmul.f32 %v2442, 1.442695
        %v3278 = vpow.pop %v3277
        %v3279 = vmul.f32 %v2443, 1.442695
        %v3280 = vpow.pop %v3279
        %v3281 = vmul.f32 %v2444, 1.442695
        %v3282 = vpow.pop %v3281
        %v3283 = vmul.f32 %v2445, 1.442695
        %v3284 = vpow.pop %v3283
        %v3285 = vmul.f32 %v2446, 1.442695
        %v3286 = vpow.pop %v3285
        %v3287 = vmul.f32 %v2447, 1.442695
        %v3288 = vpow.pop %v3287
        %v3289 = vmul.f32 %v2448, 1.442695
        %v3290 = vpow.pop %v3289
        %v3291 = vmul.f32 %v2449, 1.442695
        %v3292 = vpow.pop %v3291
        %v3293 = vmul.f32 %v2450, 1.442695
        %v3294 = vpow.pop %v3293
        %v3295 = vmul.f32 %v2451, 1.442695
        %v3296 = vpow.pop %v3295
        %v3297 = vmul.f32 %v2452, 1.442695
        %v3298 = vpow.pop %v3297
        %v3299 = vmul.f32 %v2453, 1.442695
        %v3300 = vpow.pop %v3299
        %v3301 = vmul.f32 %v2454, 1.442695
        %v3302 = vpow.pop %v3301
        %v3303 = vmul.f32 %v2455, 1.442695
        %v3304 = vpow.pop %v3303
        %v3305 = vmul.f32 %v2456, 1.442695
        %v3306 = vpow.pop %v3305
        %v3307 = vmul.f32 %v2457, 1.442695
        %v3308 = vpow.pop %v3307
        %v3309 = vmul.f32 %v2458, 1.442695
        %v3310 = vpow.pop %v3309
        %v3311 = vmul.f32 %v2459, 1.442695
        %v3312 = vpow.pop %v3311
        %v3313 = vmul.f32 %v2460, 1.442695
        %v3314 = vpow.pop %v3313
        %v3315 = vmul.f32 %v2461, 1.442695
        %v3316 = vpow.pop %v3315
        %v3317 = vmul.f32 %v2462, 1.442695
        %v3318 = vpow.pop %v3317
        %v3319 = vmul.f32 %v2463, 1.442695
        %v3320 = vpow.pop %v3319
        %v3321 = vmul.f32 %v2464, 1.442695
        %v3322 = vpow.pop %v3321
        %v3323 = vmul.f32 %v2465, 1.442695
        %v3324 = vpow.pop %v3323
        %v3325 = vmul.f32 %v2466, 1.442695
        %v3326 = vpow.pop %v3325
        %v3327 = vmul.f32 %v2467, 1.442695
        %v3328 = vpow.pop %v3327
        %v3329 = vmul.f32 %v2468, 1.442695
        %v3330 = vpow.pop %v3329
        %v3331 = vmul.f32 %v2469, 1.442695
        %v3332 = vpow.pop %v3331
        %v3333 = vmul.f32 %v2470, 1.442695
        %v3334 = vpow.pop %v3333
        %v3335 = vmul.f32 %v2471, 1.442695
        %v3336 = vpow.pop %v3335
        %v3337 = vmul.f32 %v2472, 1.442695
        %v3338 = vpow.pop %v3337
        %v3339 = vmul.f32 %v2473, 1.442695
        %v3340 = vpow.pop %v3339
        %v3341 = vmul.f32 %v2474, 1.442695
        %v3342 = vpow.pop %v3341
        %v3343 = vmul.f32 %v2475, 1.442695
        %v3344 = vpow.pop %v3343
        %v3345 = vmul.f32 %v2476, 1.442695
        %v3346 = vpow.pop %v3345
        %v3347 = vmul.f32 %v2477, 1.442695
        %v3348 = vpow.pop %v3347
        %v3349 = vmul.f32 %v2478, 1.442695
        %v3350 = vpow.pop %v3349
        %v3351 = vmul.f32 %v2479, 1.442695
        %v3352 = vpow.pop %v3351
        %v3353 = vmul.f32 %v2480, 1.442695
        %v3354 = vpow.pop %v3353
        %v3355 = vmul.f32 %v2481, 1.442695
        %v3356 = vpow.pop %v3355
        %v3357 = vmul.f32 %v2482, 1.442695
        %v3358 = vpow.pop %v3357
        %v3359 = vmul.f32 %v2483, 1.442695
        %v3360 = vpow.pop %v3359
        %v3361 = vmul.f32 %v2484, 1.442695
        %v3362 = vpow.pop %v3361
        %v3363 = vmul.f32 %v2485, 1.442695
        %v3364 = vpow.pop %v3363
        %v3365 = vmul.f32 %v2486, 1.442695
        %v3366 = vpow.pop %v3365
        %v3367 = vmul.f32 %v2487, 1.442695
        %v3368 = vpow.pop %v3367
        %v3369 = vmul.f32 %v2488, 1.442695
        %v3370 = vpow.pop %v3369
        %v3371 = vmul.f32 %v2489, 1.442695
        %v3372 = vpow.pop %v3371
        %v3373 = vmul.f32 %v2490, 1.442695
        %v3374 = vpow.pop %v3373
        %v3375 = vmul.f32 %v2491, 1.442695
        %v3376 = vpow.pop %v3375
        %v3377 = vmul.f32 %v2492, 1.442695
        %v3378 = vpow.pop %v3377
        %v3379 = vmul.f32 %v2493, 1.442695
        %v3380 = vpow.pop %v3379
        %v3381 = vmul.f32 %v2494, 1.442695
        %v3382 = vpow.pop %v3381
        %v3383 = vmul.f32 %v2495, 1.442695
        %v3384 = vpow.pop %v3383
        %v3385 = vmul.f32 %v2496, 1.442695
        %v3386 = vpow.pop %v3385
        %v3387 = vmul.f32 %v2497, 1.442695
        %v3388 = vpow.pop %v3387
        %v3389 = vmul.f32 %v2498, 1.442695
        %v3390 = vpow.pop %v3389
        %v3391 = vmul.f32 %v2499, 1.442695
        %v3392 = vpow.pop %v3391
        %v3393 = vmul.f32 %v2500, 1.442695
        %v3394 = vpow.pop %v3393
        %v3395 = vmul.f32 %v2501, 1.442695
        %v3396 = vpow.pop %v3395
        %v3397 = vmul.f32 %v2502, 1.442695
        %v3398 = vpow.pop %v3397
        %v3399 = vmul.f32 %v2503, 1.442695
        %v3400 = vpow.pop %v3399
        %v3401 = vmul.f32 %v2504, 1.442695
        %v3402 = vpow.pop %v3401
        %v3403 = vmul.f32 %v2505, 1.442695
        %v3404 = vpow.pop %v3403
        %v3405 = vmul.f32 %v2506, 1.442695
        %v3406 = vpow.pop %v3405
        %v3407 = vmul.f32 %v2507, 1.442695
        %v3408 = vpow.pop %v3407
        %v3409 = vmul.f32 %v2508, 1.442695
        %v3410 = vpow.pop %v3409
        %v3411 = vmul.f32 %v2509, 1.442695
        %v3412 = vpow.pop %v3411
        %v3413 = vmul.f32 %v2510, 1.442695
        %v3414 = vpow.pop %v3413
        %v3415 = vmul.f32 %v2511, 1.442695
        %v3416 = vpow.pop %v3415
        %v3417 = vmul.f32 %v2512, 1.442695
        %v3418 = vpow.pop %v3417
        %v3419 = vmul.f32 %v2513, 1.442695
        %v3420 = vpow.pop %v3419
        %v3421 = vmul.f32 %v2514, 1.442695
        %v3422 = vpow.pop %v3421
        %v3423 = vmul.f32 %v2515, 1.442695
        %v3424 = vpow.pop %v3423
        %v3425 = vmul.f32 %v2516, 1.442695
        %v3426 = vpow.pop %v3425
        %v3427 = vmul.f32 %v2517, 1.442695
        %v3428 = vpow.pop %v3427
        %v3429 = vmul.f32 %v2518, 1.442695
        %v3430 = vpow.pop %v3429
        %v3431 = vmul.f32 %v2519, 1.442695
        %v3432 = vpow.pop %v3431
        %v3433 = vmul.f32 %v2520, 1.442695
        %v3434 = vpow.pop %v3433
        %v3435 = vmul.f32 %v2521, 1.442695
        %v3436 = vpow.pop %v3435
        %v3437 = vmul.f32 %v2522, 1.442695
        %v3438 = vpow.pop %v3437
        %v3439 = vmul.f32 %v2523, 1.442695
        %v3440 = vpow.pop %v3439
        %v3441 = vmul.f32 %v2524, 1.442695
        %v3442 = vpow.pop %v3441
        %v3443 = vmul.f32 %v2525, 1.442695
        %v3444 = vpow.pop %v3443
        %v3445 = vmul.f32 %v2526, 1.442695
        %v3446 = vpow.pop %v3445
        %v3447 = vmul.f32 %v2527, 1.442695
        %v3448 = vpow.pop %v3447
        %v3449 = vmul.f32 %v2528, 1.442695
        %v3450 = vpow.pop %v3449
        %v3451 = vmul.f32 %v2529, 1.442695
        %v3452 = vpow.pop %v3451
        %v3453 = vmul.f32 %v2530, 1.442695
        %v3454 = vpow.pop %v3453
        %v3455 = vmul.f32 %v2531, 1.442695
        %v3456 = vpow.pop %v3455
        %v3457 = vmul.f32 %v2532, 1.442695
        %v3458 = vpow.pop %v3457
        %v3459 = vmul.f32 %v2533, 1.442695
        %v3460 = vpow.pop %v3459
        %v3461 = vmul.f32 %v2534, 1.442695
        %v3462 = vpow.pop %v3461
        %v3463 = vmul.f32 %v2535, 1.442695
        %v3464 = vpow.pop %v3463
        %v3465 = vmul.f32 %v2536, 1.442695
        %v3466 = vpow.pop %v3465
        %v3467 = vmul.f32 %v2537, 1.442695
        %v3468 = vpow.pop %v3467
        %v3469 = vmul.f32 %v2538, 1.442695
        %v3470 = vpow.pop %v3469
        %v3471 = vmul.f32 %v2539, 1.442695
        %v3472 = vpow.pop %v3471
        %v3473 = vmul.f32 %v2540, 1.442695
        %v3474 = vpow.pop %v3473
        %v3475 = vmul.f32 %v2541, 1.442695
        %v3476 = vpow.pop %v3475
        %v3477 = vmul.f32 %v2542, 1.442695
        %v3478 = vpow.pop %v3477
        %v3479 = vmul.f32 %v2543, 1.442695
        %v3480 = vpow.pop %v3479
        %v3481 = vmul.f32 %v2544, 1.442695
        %v3482 = vpow.pop %v3481
        %v3483 = vmul.f32 %v2545, 1.442695
        %v3484 = vpow.pop %v3483
        %v3485 = vmul.f32 %v2546, 1.442695
        %v3486 = vpow.pop %v3485
        %v3487 = vmul.f32 %v2547, 1.442695
        %v3488 = vpow.pop %v3487
        %v3489 = vmul.f32 %v2548, 1.442695
        %v3490 = vpow.pop %v3489
        %v3491 = vmul.f32 %v2549, 1.442695
        %v3492 = vpow.pop %v3491
        %v3493 = vmul.f32 %v2550, 1.442695
        %v3494 = vpow.pop %v3493
        %v3495 = vmul.f32 %v2551, 1.442695
        %v3496 = vpow.pop %v3495
        %v3497 = vmul.f32 %v2552, 1.442695
        %v3498 = vpow.pop %v3497
        %v3499 = vmul.f32 %v2553, 1.442695
        %v3500 = vpow.pop %v3499
        %v3501 = vmul.f32 %v2554, 1.442695
        %v3502 = vpow.pop %v3501
        %v3503 = vmul.f32 %v2555, 1.442695
        %v3504 = vpow.pop %v3503
        %v3505 = vmul.f32 %v2556, 1.442695
        %v3506 = vpow.pop %v3505
        %v3507 = vmul.f32 %v2557, 1.442695
        %v3508 = vpow.pop %v3507
        %v3509 = vmul.f32 %v2558, 1.442695
        %v3510 = vpow.pop %v3509
        %v3511 = vmul.f32 %v2559, 1.442695
        %v3512 = vpow.pop %v3511
        %v3513 = vmul.f32 %v2560, 1.442695
        %v3514 = vpow.pop %v3513
        %v3515 = vmul.f32 %v2561, 1.442695
        %v3516 = vpow.pop %v3515
        %v3517 = vmul.f32 %v2562, 1.442695
        %v3518 = vpow.pop %v3517
        %v3519 = vmul.f32 %v2563, 1.442695
        %v3520 = vpow.pop %v3519
        %v3521 = vmul.f32 %v2564, 1.442695
        %v3522 = vpow.pop %v3521
        %v3523 = vmul.f32 %v2565, 1.442695
        %v3524 = vpow.pop %v3523
        %v3525 = vmul.f32 %v2566, 1.442695
        %v3526 = vpow.pop %v3525
        %v3527 = vmul.f32 %v2567, 1.442695
        %v3528 = vpow.pop %v3527
        %v3529 = vmul.f32 %v2568, 1.442695
        %v3530 = vpow.pop %v3529
        %v3531 = vmul.f32 %v2569, 1.442695
        %v3532 = vpow.pop %v3531
        %v3533 = vmul.f32 %v2570, 1.442695
        %v3534 = vpow.pop %v3533
        %v3535 = vmul.f32 %v2571, 1.442695
        %v3536 = vpow.pop %v3535
        %v3537 = vmul.f32 %v2572, 1.442695
        %v3538 = vpow.pop %v3537
        %v3539 = vmul.f32 %v2573, 1.442695
        %v3540 = vpow.pop %v3539
        %v3541 = vmul.f32 %v2574, 1.442695
        %v3542 = vpow.pop %v3541
        %v3543 = vmul.f32 %v2575, 1.442695
        %v3544 = vpow.pop %v3543
        %v3545 = vmul.f32 %v2576, 1.442695
        %v3546 = vpow.pop %v3545
        %v3547 = vmul.f32 %v2577, 1.442695
        %v3548 = vpow.pop %v3547
        %v3549 = vmul.f32 %v2578, 1.442695
        %v3550 = vpow.pop %v3549
        %v3551 = vmul.f32 %v2579, 1.442695
        %v3552 = vpow.pop %v3551
        %v3553 = vmul.f32 %v2580, 1.442695
        %v3554 = vpow.pop %v3553
        %v3555 = vmul.f32 %v2581, 1.442695
        %v3556 = vpow.pop %v3555
        %v3557 = vmul.f32 %v2582, 1.442695
        %v3558 = vpow.pop %v3557
        %v3559 = vmul.f32 %v2583, 1.442695
        %v3560 = vpow.pop %v3559
        %v3561 = vmul.f32 %v2584, 1.442695
        %v3562 = vpow.pop %v3561
        %v3563 = vmul.f32 %v2585, 1.442695
        %v3564 = vpow.pop %v3563
        %v3565 = vmul.f32 %v2586, 1.442695
        %v3566 = vpow.pop %v3565
        %v3567 = vmul.f32 %v2587, 1.442695
        %v3568 = vpow.pop %v3567
        %v3569 = vmul.f32 %v2588, 1.442695
        %v3570 = vpow.pop %v3569
        %v3571 = vmul.f32 %v2589, 1.442695
        %v3572 = vpow.pop %v3571
        %v3573 = vmul.f32 %v2590, 1.442695
        %v3574 = vpow.pop %v3573
        %v3575 = vmul.f32 %v2591, 1.442695
        %v3576 = vpow.pop %v3575
        %v3577 = vmul.f32 %v2592, 1.442695
        %v3578 = vpow.pop %v3577
        %v3579 = vmul.f32 %v2593, 1.442695
        %v3580 = vpow.pop %v3579
        %v3581 = vmul.f32 %v2594, 1.442695
        %v3582 = vpow.pop %v3581
        %v3583 = vmul.f32 %v2595, 1.442695
        %v3584 = vpow.pop %v3583
        %v3585 = vmul.f32 %v2596, 1.442695
        %v3586 = vpow.pop %v3585
        %v3587 = vmul.f32 %v2597, 1.442695
        %v3588 = vpow.pop %v3587
        %v3589 = vmul.f32 %v2598, 1.442695
        %v3590 = vpow.pop %v3589
        %v3591 = vmul.f32 %v2599, 1.442695
        %v3592 = vpow.pop %v3591
        %v3593 = vmul.f32 %v2600, 1.442695
        %v3594 = vpow.pop %v3593
        %v3595 = vmul.f32 %v2601, 1.442695
        %v3596 = vpow.pop %v3595
        %v3597 = vmul.f32 %v2602, 1.442695
        %v3598 = vpow.pop %v3597
        %v3599 = vmul.f32 %v2603, 1.442695
        %v3600 = vpow.pop %v3599
        %v3601 = vmul.f32 %v2604, 1.442695
        %v3602 = vpow.pop %v3601
        %v3603 = vmul.f32 %v2605, 1.442695
        %v3604 = vpow.pop %v3603
        %v3605 = vmul.f32 %v2606, 1.442695
        %v3606 = vpow.pop %v3605
        %v3607 = vmul.f32 %v2607, 1.442695
        %v3608 = vpow.pop %v3607
        %v3609 = vmul.f32 %v2608, 1.442695
        %v3610 = vpow.pop %v3609
        %v3611 = vmul.f32 %v2609, 1.442695
        %v3612 = vpow.pop %v3611
        %v3613 = vmul.f32 %v2610, 1.442695
        %v3614 = vpow.pop %v3613
        %v3615 = vmul.f32 %v2611, 1.442695
        %v3616 = vpow.pop %v3615
        %v3617 = vmul.f32 %v2612, 1.442695
        %v3618 = vpow.pop %v3617
        %v3619 = vmul.f32 %v2613, 1.442695
        %v3620 = vpow.pop %v3619
        %v3621 = vmul.f32 %v2614, 1.442695
        %v3622 = vpow.pop %v3621
        %v3623 = vmul.f32 %v2615, 1.442695
        %v3624 = vpow.pop %v3623
        %v3625 = vmul.f32 %v2616, 1.442695
        %v3626 = vpow.pop %v3625
        %v3627 = vmul.f32 %v2617, 1.442695
        %v3628 = vpow.pop %v3627
        %v3629 = vmul.f32 %v2618, 1.442695
        %v3630 = vpow.pop %v3629
        %v3631 = vmul.f32 %v2619, 1.442695
        %v3632 = vpow.pop %v3631
        %v3633 = vmul.f32 %v2620, 1.442695
        %v3634 = vpow.pop %v3633
        %v3635 = vmul.f32 %v2621, 1.442695
        %v3636 = vpow.pop %v3635
        %v3637 = vmul.f32 %v2622, 1.442695
        %v3638 = vpow.pop %v3637
        %v3639 = vmul.f32 %v2623, 1.442695
        %v3640 = vpow.pop %v3639
        %v3641 = vmul.f32 %v2624, 1.442695
        %v3642 = vpow.pop %v3641
        %v3643 = vmul.f32 %v2625, 1.442695
        %v3644 = vpow.pop %v3643
        %v3645 = vmul.f32 %v2626, 1.442695
        %v3646 = vpow.pop %v3645
        %v3647 = vmul.f32 %v2627, 1.442695
        %v3648 = vpow.pop %v3647
        %v3649 = vmul.f32 %v2628, 1.442695
        %v3650 = vpow.pop %v3649
        %v3651 = vmul.f32 %v2629, 1.442695
        %v3652 = vpow.pop %v3651
        %v3653 = vmul.f32 %v2630, 1.442695
        %v3654 = vpow.pop %v3653
        %v3655 = vsel %vm958, %v2632, 0.0
        %v3656 = vsel %vm958, %v2634, 0.0
        %v3657 = vsel %vm958, %v2636, 0.0
        %v3658 = vsel %vm958, %v2638, 0.0
        %v3659 = vsel %vm958, %v2640, 0.0
        %v3660 = vsel %vm958, %v2642, 0.0
        %v3661 = vsel %vm958, %v2644, 0.0
        %v3662 = vsel %vm958, %v2646, 0.0
        %v3663 = vsel %vm959, %v2648, 0.0
        %v3664 = vsel %vm959, %v2650, 0.0
        %v3665 = vsel %vm959, %v2652, 0.0
        %v3666 = vsel %vm959, %v2654, 0.0
        %v3667 = vsel %vm959, %v2656, 0.0
        %v3668 = vsel %vm959, %v2658, 0.0
        %v3669 = vsel %vm959, %v2660, 0.0
        %v3670 = vsel %vm959, %v2662, 0.0
        %v3671 = vsel %vm960, %v2664, 0.0
        %v3672 = vsel %vm960, %v2666, 0.0
        %v3673 = vsel %vm960, %v2668, 0.0
        %v3674 = vsel %vm960, %v2670, 0.0
        %v3675 = vsel %vm960, %v2672, 0.0
        %v3676 = vsel %vm960, %v2674, 0.0
        %v3677 = vsel %vm960, %v2676, 0.0
        %v3678 = vsel %vm960, %v2678, 0.0
        %v3679 = vsel %vm961, %v2680, 0.0
        %v3680 = vsel %vm961, %v2682, 0.0
        %v3681 = vsel %vm961, %v2684, 0.0
        %v3682 = vsel %vm961, %v2686, 0.0
        %v3683 = vsel %vm961, %v2688, 0.0
        %v3684 = vsel %vm961, %v2690, 0.0
        %v3685 = vsel %vm961, %v2692, 0.0
        %v3686 = vsel %vm961, %v2694, 0.0
        %v3687 = vsel %vm962, %v2696, 0.0
        %v3688 = vsel %vm962, %v2698, 0.0
        %v3689 = vsel %vm962, %v2700, 0.0
        %v3690 = vsel %vm962, %v2702, 0.0
        %v3691 = vsel %vm962, %v2704, 0.0
        %v3692 = vsel %vm962, %v2706, 0.0
        %v3693 = vsel %vm962, %v2708, 0.0
        %v3694 = vsel %vm962, %v2710, 0.0
        %v3695 = vsel %vm963, %v2712, 0.0
        %v3696 = vsel %vm963, %v2714, 0.0
        %v3697 = vsel %vm963, %v2716, 0.0
        %v3698 = vsel %vm963, %v2718, 0.0
        %v3699 = vsel %vm963, %v2720, 0.0
        %v3700 = vsel %vm963, %v2722, 0.0
        %v3701 = vsel %vm963, %v2724, 0.0
        %v3702 = vsel %vm963, %v2726, 0.0
        %v3703 = vsel %vm964, %v2728, 0.0
        %v3704 = vsel %vm964, %v2730, 0.0
        %v3705 = vsel %vm964, %v2732, 0.0
        %v3706 = vsel %vm964, %v2734, 0.0
        %v3707 = vsel %vm964, %v2736, 0.0
        %v3708 = vsel %vm964, %v2738, 0.0
        %v3709 = vsel %vm964, %v2740, 0.0
        %v3710 = vsel %vm964, %v2742, 0.0
        %v3711 = vsel %vm965, %v2744, 0.0
        %v3712 = vsel %vm965, %v2746, 0.0
        %v3713 = vsel %vm965, %v2748, 0.0
        %v3714 = vsel %vm965, %v2750, 0.0
        %v3715 = vsel %vm965, %v2752, 0.0
        %v3716 = vsel %vm965, %v2754, 0.0
        %v3717 = vsel %vm965, %v2756, 0.0
        %v3718 = vsel %vm965, %v2758, 0.0
        %v3719 = vsel %vm966, %v2760, 0.0
        %v3720 = vsel %vm966, %v2762, 0.0
        %v3721 = vsel %vm966, %v2764, 0.0
        %v3722 = vsel %vm966, %v2766, 0.0
        %v3723 = vsel %vm966, %v2768, 0.0
        %v3724 = vsel %vm966, %v2770, 0.0
        %v3725 = vsel %vm966, %v2772, 0.0
        %v3726 = vsel %vm966, %v2774, 0.0
        %v3727 = vsel %vm967, %v2776, 0.0
        %v3728 = vsel %vm967, %v2778, 0.0
        %v3729 = vsel %vm967, %v2780, 0.0
        %v3730 = vsel %vm967, %v2782, 0.0
        %v3731 = vsel %vm967, %v2784, 0.0
        %v3732 = vsel %vm967, %v2786, 0.0
        %v3733 = vsel %vm967, %v2788, 0.0
        %v3734 = vsel %vm967, %v2790, 0.0
        %v3735 = vsel %vm968, %v2792, 0.0
        %v3736 = vsel %vm968, %v2794, 0.0
        %v3737 = vsel %vm968, %v2796, 0.0
        %v3738 = vsel %vm968, %v2798, 0.0
        %v3739 = vsel %vm968, %v2800, 0.0
        %v3740 = vsel %vm968, %v2802, 0.0
        %v3741 = vsel %vm968, %v2804, 0.0
        %v3742 = vsel %vm968, %v2806, 0.0
        %v3743 = vsel %vm969, %v2808, 0.0
        %v3744 = vsel %vm969, %v2810, 0.0
        %v3745 = vsel %vm969, %v2812, 0.0
        %v3746 = vsel %vm969, %v2814, 0.0
        %v3747 = vsel %vm969, %v2816, 0.0
        %v3748 = vsel %vm969, %v2818, 0.0
        %v3749 = vsel %vm969, %v2820, 0.0
        %v3750 = vsel %vm969, %v2822, 0.0
        %v3751 = vsel %vm970, %v2824, 0.0
        %v3752 = vsel %vm970, %v2826, 0.0
        %v3753 = vsel %vm970, %v2828, 0.0
        %v3754 = vsel %vm970, %v2830, 0.0
        %v3755 = vsel %vm970, %v2832, 0.0
        %v3756 = vsel %vm970, %v2834, 0.0
        %v3757 = vsel %vm970, %v2836, 0.0
        %v3758 = vsel %vm970, %v2838, 0.0
        %v3759 = vsel %vm971, %v2840, 0.0
        %v3760 = vsel %vm971, %v2842, 0.0
        %v3761 = vsel %vm971, %v2844, 0.0
        %v3762 = vsel %vm971, %v2846, 0.0
        %v3763 = vsel %vm971, %v2848, 0.0
        %v3764 = vsel %vm971, %v2850, 0.0
        %v3765 = vsel %vm971, %v2852, 0.0
        %v3766 = vsel %vm971, %v2854, 0.0
        %v3767 = vsel %vm972, %v2856, 0.0
        %v3768 = vsel %vm972, %v2858, 0.0
        %v3769 = vsel %vm972, %v2860, 0.0
        %v3770 = vsel %vm972, %v2862, 0.0
        %v3771 = vsel %vm972, %v2864, 0.0
        %v3772 = vsel %vm972, %v2866, 0.0
        %v3773 = vsel %vm972, %v2868, 0.0
        %v3774 = vsel %vm972, %v2870, 0.0
        %v3775 = vsel %vm973, %v2872, 0.0
        %v3776 = vsel %vm973, %v2874, 0.0
        %v3777 = vsel %vm973, %v2876, 0.0
        %v3778 = vsel %vm973, %v2878, 0.0
        %v3779 = vsel %vm973, %v2880, 0.0
        %v3780 = vsel %vm973, %v2882, 0.0
        %v3781 = vsel %vm973, %v2884, 0.0
        %v3782 = vsel %vm973, %v2886, 0.0
        %v3783 = vsel %vm974, %v2888, 0.0
        %v3784 = vsel %vm974, %v2890, 0.0
        %v3785 = vsel %vm974, %v2892, 0.0
        %v3786 = vsel %vm974, %v2894, 0.0
        %v3787 = vsel %vm974, %v2896, 0.0
        %v3788 = vsel %vm974, %v2898, 0.0
        %v3789 = vsel %vm974, %v2900, 0.0
        %v3790 = vsel %vm974, %v2902, 0.0
        %v3791 = vsel %vm975, %v2904, 0.0
        %v3792 = vsel %vm975, %v2906, 0.0
        %v3793 = vsel %vm975, %v2908, 0.0
        %v3794 = vsel %vm975, %v2910, 0.0
        %v3795 = vsel %vm975, %v2912, 0.0
        %v3796 = vsel %vm975, %v2914, 0.0
        %v3797 = vsel %vm975, %v2916, 0.0
        %v3798 = vsel %vm975, %v2918, 0.0
        %v3799 = vsel %vm976, %v2920, 0.0
        %v3800 = vsel %vm976, %v2922, 0.0
        %v3801 = vsel %vm976, %v2924, 0.0
        %v3802 = vsel %vm976, %v2926, 0.0
        %v3803 = vsel %vm976, %v2928, 0.0
        %v3804 = vsel %vm976, %v2930, 0.0
        %v3805 = vsel %vm976, %v2932, 0.0
        %v3806 = vsel %vm976, %v2934, 0.0
        %v3807 = vsel %vm977, %v2936, 0.0
        %v3808 = vsel %vm977, %v2938, 0.0
        %v3809 = vsel %vm977, %v2940, 0.0
        %v3810 = vsel %vm977, %v2942, 0.0
        %v3811 = vsel %vm977, %v2944, 0.0
        %v3812 = vsel %vm977, %v2946, 0.0
        %v3813 = vsel %vm977, %v2948, 0.0
        %v3814 = vsel %vm977, %v2950, 0.0
        %v3815 = vsel %vm978, %v2952, 0.0
        %v3816 = vsel %vm978, %v2954, 0.0
        %v3817 = vsel %vm978, %v2956, 0.0
        %v3818 = vsel %vm978, %v2958, 0.0
        %v3819 = vsel %vm978, %v2960, 0.0
        %v3820 = vsel %vm978, %v2962, 0.0
        %v3821 = vsel %vm978, %v2964, 0.0
        %v3822 = vsel %vm978, %v2966, 0.0
        %v3823 = vsel %vm979, %v2968, 0.0
        %v3824 = vsel %vm979, %v2970, 0.0
        %v3825 = vsel %vm979, %v2972, 0.0
        %v3826 = vsel %vm979, %v2974, 0.0
        %v3827 = vsel %vm979, %v2976, 0.0
        %v3828 = vsel %vm979, %v2978, 0.0
        %v3829 = vsel %vm979, %v2980, 0.0
        %v3830 = vsel %vm979, %v2982, 0.0
        %v3831 = vsel %vm980, %v2984, 0.0
        %v3832 = vsel %vm980, %v2986, 0.0
        %v3833 = vsel %vm980, %v2988, 0.0
        %v3834 = vsel %vm980, %v2990, 0.0
        %v3835 = vsel %vm980, %v2992, 0.0
        %v3836 = vsel %vm980, %v2994, 0.0
        %v3837 = vsel %vm980, %v2996, 0.0
        %v3838 = vsel %vm980, %v2998, 0.0
        %v3839 = vsel %vm981, %v3000, 0.0
        %v3840 = vsel %vm981, %v3002, 0.0
        %v3841 = vsel %vm981, %v3004, 0.0
        %v3842 = vsel %vm981, %v3006, 0.0
        %v3843 = vsel %vm981, %v3008, 0.0
        %v3844 = vsel %vm981, %v3010, 0.0
        %v3845 = vsel %vm981, %v3012, 0.0
        %v3846 = vsel %vm981, %v3014, 0.0
        %v3847 = vsel %vm982, %v3016, 0.0
        %v3848 = vsel %vm982, %v3018, 0.0
        %v3849 = vsel %vm982, %v3020, 0.0
        %v3850 = vsel %vm982, %v3022, 0.0
        %v3851 = vsel %vm982, %v3024, 0.0
        %v3852 = vsel %vm982, %v3026, 0.0
        %v3853 = vsel %vm982, %v3028, 0.0
        %v3854 = vsel %vm982, %v3030, 0.0
        %v3855 = vsel %vm983, %v3032, 0.0
        %v3856 = vsel %vm983, %v3034, 0.0
        %v3857 = vsel %vm983, %v3036, 0.0
        %v3858 = vsel %vm983, %v3038, 0.0
        %v3859 = vsel %vm983, %v3040, 0.0
        %v3860 = vsel %vm983, %v3042, 0.0
        %v3861 = vsel %vm983, %v3044, 0.0
        %v3862 = vsel %vm983, %v3046, 0.0
        %v3863 = vsel %vm984, %v3048, 0.0
        %v3864 = vsel %vm984, %v3050, 0.0
        %v3865 = vsel %vm984, %v3052, 0.0
        %v3866 = vsel %vm984, %v3054, 0.0
        %v3867 = vsel %vm984, %v3056, 0.0
        %v3868 = vsel %vm984, %v3058, 0.0
        %v3869 = vsel %vm984, %v3060, 0.0
        %v3870 = vsel %vm984, %v3062, 0.0
        %v3871 = vsel %vm985, %v3064, 0.0
        %v3872 = vsel %vm985, %v3066, 0.0
        %v3873 = vsel %vm985, %v3068, 0.0
        %v3874 = vsel %vm985, %v3070, 0.0
        %v3875 = vsel %vm985, %v3072, 0.0
        %v3876 = vsel %vm985, %v3074, 0.0
        %v3877 = vsel %vm985, %v3076, 0.0
        %v3878 = vsel %vm985, %v3078, 0.0
        %v3879 = vsel %vm986, %v3080, 0.0
        %v3880 = vsel %vm986, %v3082, 0.0
        %v3881 = vsel %vm986, %v3084, 0.0
        %v3882 = vsel %vm986, %v3086, 0.0
        %v3883 = vsel %vm986, %v3088, 0.0
        %v3884 = vsel %vm986, %v3090, 0.0
        %v3885 = vsel %vm986, %v3092, 0.0
        %v3886 = vsel %vm986, %v3094, 0.0
        %v3887 = vsel %vm987, %v3096, 0.0
        %v3888 = vsel %vm987, %v3098, 0.0
        %v3889 = vsel %vm987, %v3100, 0.0
        %v3890 = vsel %vm987, %v3102, 0.0
        %v3891 = vsel %vm987, %v3104, 0.0
        %v3892 = vsel %vm987, %v3106, 0.0
        %v3893 = vsel %vm987, %v3108, 0.0
        %v3894 = vsel %vm987, %v3110, 0.0
        %v3895 = vsel %vm988, %v3112, 0.0
        %v3896 = vsel %vm988, %v3114, 0.0
        %v3897 = vsel %vm988, %v3116, 0.0
        %v3898 = vsel %vm988, %v3118, 0.0
        %v3899 = vsel %vm988, %v3120, 0.0
        %v3900 = vsel %vm988, %v3122, 0.0
        %v3901 = vsel %vm988, %v3124, 0.0
        %v3902 = vsel %vm988, %v3126, 0.0
        %v3903 = vsel %vm989, %v3128, 0.0
        %v3904 = vsel %vm989, %v3130, 0.0
        %v3905 = vsel %vm989, %v3132, 0.0
        %v3906 = vsel %vm989, %v3134, 0.0
        %v3907 = vsel %vm989, %v3136, 0.0
        %v3908 = vsel %vm989, %v3138, 0.0
        %v3909 = vsel %vm989, %v3140, 0.0
        %v3910 = vsel %vm989, %v3142, 0.0
        %v3911 = vsel %vm990, %v3144, 0.0
        %v3912 = vsel %vm990, %v3146, 0.0
        %v3913 = vsel %vm990, %v3148, 0.0
        %v3914 = vsel %vm990, %v3150, 0.0
        %v3915 = vsel %vm990, %v3152, 0.0
        %v3916 = vsel %vm990, %v3154, 0.0
        %v3917 = vsel %vm990, %v3156, 0.0
        %v3918 = vsel %vm990, %v3158, 0.0
        %v3919 = vsel %vm991, %v3160, 0.0
        %v3920 = vsel %vm991, %v3162, 0.0
        %v3921 = vsel %vm991, %v3164, 0.0
        %v3922 = vsel %vm991, %v3166, 0.0
        %v3923 = vsel %vm991, %v3168, 0.0
        %v3924 = vsel %vm991, %v3170, 0.0
        %v3925 = vsel %vm991, %v3172, 0.0
        %v3926 = vsel %vm991, %v3174, 0.0
        %v3927 = vsel %vm992, %v3176, 0.0
        %v3928 = vsel %vm992, %v3178, 0.0
        %v3929 = vsel %vm992, %v3180, 0.0
        %v3930 = vsel %vm992, %v3182, 0.0
        %v3931 = vsel %vm992, %v3184, 0.0
        %v3932 = vsel %vm992, %v3186, 0.0
        %v3933 = vsel %vm992, %v3188, 0.0
        %v3934 = vsel %vm992, %v3190, 0.0
        %v3935 = vsel %vm993, %v3192, 0.0
        %v3936 = vsel %vm993, %v3194, 0.0
        %v3937 = vsel %vm993, %v3196, 0.0
        %v3938 = vsel %vm993, %v3198, 0.0
        %v3939 = vsel %vm993, %v3200, 0.0
        %v3940 = vsel %vm993, %v3202, 0.0
        %v3941 = vsel %vm993, %v3204, 0.0
        %v3942 = vsel %vm993, %v3206, 0.0
        %v3943 = vsel %vm994, %v3208, 0.0
        %v3944 = vsel %vm994, %v3210, 0.0
        %v3945 = vsel %vm994, %v3212, 0.0
        %v3946 = vsel %vm994, %v3214, 0.0
        %v3947 = vsel %vm994, %v3216, 0.0
        %v3948 = vsel %vm994, %v3218, 0.0
        %v3949 = vsel %vm994, %v3220, 0.0
        %v3950 = vsel %vm994, %v3222, 0.0
        %v3951 = vsel %vm995, %v3224, 0.0
        %v3952 = vsel %vm995, %v3226, 0.0
        %v3953 = vsel %vm995, %v3228, 0.0
        %v3954 = vsel %vm995, %v3230, 0.0
        %v3955 = vsel %vm995, %v3232, 0.0
        %v3956 = vsel %vm995, %v3234, 0.0
        %v3957 = vsel %vm995, %v3236, 0.0
        %v3958 = vsel %vm995, %v3238, 0.0
        %v3959 = vsel %vm996, %v3240, 0.0
        %v3960 = vsel %vm996, %v3242, 0.0
        %v3961 = vsel %vm996, %v3244, 0.0
        %v3962 = vsel %vm996, %v3246, 0.0
        %v3963 = vsel %vm996, %v3248, 0.0
        %v3964 = vsel %vm996, %v3250, 0.0
        %v3965 = vsel %vm996, %v3252, 0.0
        %v3966 = vsel %vm996, %v3254, 0.0
        %v3967 = vsel %vm997, %v3256, 0.0
        %v3968 = vsel %vm997, %v3258, 0.0
        %v3969 = vsel %vm997, %v3260, 0.0
        %v3970 = vsel %vm997, %v3262, 0.0
        %v3971 = vsel %vm997, %v3264, 0.0
        %v3972 = vsel %vm997, %v3266, 0.0
        %v3973 = vsel %vm997, %v3268, 0.0
        %v3974 = vsel %vm997, %v3270, 0.0
        %v3975 = vsel %vm998, %v3272, 0.0
        %v3976 = vsel %vm998, %v3274, 0.0
        %v3977 = vsel %vm998, %v3276, 0.0
        %v3978 = vsel %vm998, %v3278, 0.0
        %v3979 = vsel %vm998, %v3280, 0.0
        %v3980 = vsel %vm998, %v3282, 0.0
        %v3981 = vsel %vm998, %v3284, 0.0
        %v3982 = vsel %vm998, %v3286, 0.0
        %v3983 = vsel %vm999, %v3288, 0.0
        %v3984 = vsel %vm999, %v3290, 0.0
        %v3985 = vsel %vm999, %v3292, 0.0
        %v3986 = vsel %vm999, %v3294, 0.0
        %v3987 = vsel %vm999, %v3296, 0.0
        %v3988 = vsel %vm999, %v3298, 0.0
        %v3989 = vsel %vm999, %v3300, 0.0
        %v3990 = vsel %vm999, %v3302, 0.0
        %v3991 = vsel %vm1000, %v3304, 0.0
        %v3992 = vsel %vm1000, %v3306, 0.0
        %v3993 = vsel %vm1000, %v3308, 0.0
        %v3994 = vsel %vm1000, %v3310, 0.0
        %v3995 = vsel %vm1000, %v3312, 0.0
        %v3996 = vsel %vm1000, %v3314, 0.0
        %v3997 = vsel %vm1000, %v3316, 0.0
        %v3998 = vsel %vm1000, %v3318, 0.0
        %v3999 = vsel %vm1001, %v3320, 0.0
        %v4000 = vsel %vm1001, %v3322, 0.0
        %v4001 = vsel %vm1001, %v3324, 0.0
        %v4002 = vsel %vm1001, %v3326, 0.0
        %v4003 = vsel %vm1001, %v3328, 0.0
        %v4004 = vsel %vm1001, %v3330, 0.0
        %v4005 = vsel %vm1001, %v3332, 0.0
        %v4006 = vsel %vm1001, %v3334, 0.0
        %v4007 = vsel %vm1002, %v3336, 0.0
        %v4008 = vsel %vm1002, %v3338, 0.0
        %v4009 = vsel %vm1002, %v3340, 0.0
        %v4010 = vsel %vm1002, %v3342, 0.0
        %v4011 = vsel %vm1002, %v3344, 0.0
        %v4012 = vsel %vm1002, %v3346, 0.0
        %v4013 = vsel %vm1002, %v3348, 0.0
        %v4014 = vsel %vm1002, %v3350, 0.0
        %v4015 = vsel %vm1003, %v3352, 0.0
        %v4016 = vsel %vm1003, %v3354, 0.0
        %v4017 = vsel %vm1003, %v3356, 0.0
        %v4018 = vsel %vm1003, %v3358, 0.0
        %v4019 = vsel %vm1003, %v3360, 0.0
        %v4020 = vsel %vm1003, %v3362, 0.0
        %v4021 = vsel %vm1003, %v3364, 0.0
        %v4022 = vsel %vm1003, %v3366, 0.0
        %v4023 = vsel %vm1004, %v3368, 0.0
        %v4024 = vsel %vm1004, %v3370, 0.0
        %v4025 = vsel %vm1004, %v3372, 0.0
        %v4026 = vsel %vm1004, %v3374, 0.0
        %v4027 = vsel %vm1004, %v3376, 0.0
        %v4028 = vsel %vm1004, %v3378, 0.0
        %v4029 = vsel %vm1004, %v3380, 0.0
        %v4030 = vsel %vm1004, %v3382, 0.0
        %v4031 = vsel %vm1005, %v3384, 0.0
        %v4032 = vsel %vm1005, %v3386, 0.0
        %v4033 = vsel %vm1005, %v3388, 0.0
        %v4034 = vsel %vm1005, %v3390, 0.0
        %v4035 = vsel %vm1005, %v3392, 0.0
        %v4036 = vsel %vm1005, %v3394, 0.0
        %v4037 = vsel %vm1005, %v3396, 0.0
        %v4038 = vsel %vm1005, %v3398, 0.0
        %v4039 = vsel %vm1006, %v3400, 0.0
        %v4040 = vsel %vm1006, %v3402, 0.0
        %v4041 = vsel %vm1006, %v3404, 0.0
        %v4042 = vsel %vm1006, %v3406, 0.0
        %v4043 = vsel %vm1006, %v3408, 0.0
        %v4044 = vsel %vm1006, %v3410, 0.0
        %v4045 = vsel %vm1006, %v3412, 0.0
        %v4046 = vsel %vm1006, %v3414, 0.0
        %v4047 = vsel %vm1007, %v3416, 0.0
        %v4048 = vsel %vm1007, %v3418, 0.0
        %v4049 = vsel %vm1007, %v3420, 0.0
        %v4050 = vsel %vm1007, %v3422, 0.0
        %v4051 = vsel %vm1007, %v3424, 0.0
        %v4052 = vsel %vm1007, %v3426, 0.0
        %v4053 = vsel %vm1007, %v3428, 0.0
        %v4054 = vsel %vm1007, %v3430, 0.0
        %v4055 = vsel %vm1008, %v3432, 0.0
        %v4056 = vsel %vm1008, %v3434, 0.0
        %v4057 = vsel %vm1008, %v3436, 0.0
        %v4058 = vsel %vm1008, %v3438, 0.0
        %v4059 = vsel %vm1008, %v3440, 0.0
        %v4060 = vsel %vm1008, %v3442, 0.0
        %v4061 = vsel %vm1008, %v3444, 0.0
        %v4062 = vsel %vm1008, %v3446, 0.0
        %v4063 = vsel %vm1009, %v3448, 0.0
        %v4064 = vsel %vm1009, %v3450, 0.0
        %v4065 = vsel %vm1009, %v3452, 0.0
        %v4066 = vsel %vm1009, %v3454, 0.0
        %v4067 = vsel %vm1009, %v3456, 0.0
        %v4068 = vsel %vm1009, %v3458, 0.0
        %v4069 = vsel %vm1009, %v3460, 0.0
        %v4070 = vsel %vm1009, %v3462, 0.0
        %v4071 = vsel %vm1010, %v3464, 0.0
        %v4072 = vsel %vm1010, %v3466, 0.0
        %v4073 = vsel %vm1010, %v3468, 0.0
        %v4074 = vsel %vm1010, %v3470, 0.0
        %v4075 = vsel %vm1010, %v3472, 0.0
        %v4076 = vsel %vm1010, %v3474, 0.0
        %v4077 = vsel %vm1010, %v3476, 0.0
        %v4078 = vsel %vm1010, %v3478, 0.0
        %v4079 = vsel %vm1011, %v3480, 0.0
        %v4080 = vsel %vm1011, %v3482, 0.0
        %v4081 = vsel %vm1011, %v3484, 0.0
        %v4082 = vsel %vm1011, %v3486, 0.0
        %v4083 = vsel %vm1011, %v3488, 0.0
        %v4084 = vsel %vm1011, %v3490, 0.0
        %v4085 = vsel %vm1011, %v3492, 0.0
        %v4086 = vsel %vm1011, %v3494, 0.0
        %v4087 = vsel %vm1012, %v3496, 0.0
        %v4088 = vsel %vm1012, %v3498, 0.0
        %v4089 = vsel %vm1012, %v3500, 0.0
        %v4090 = vsel %vm1012, %v3502, 0.0
        %v4091 = vsel %vm1012, %v3504, 0.0
        %v4092 = vsel %vm1012, %v3506, 0.0
        %v4093 = vsel %vm1012, %v3508, 0.0
        %v4094 = vsel %vm1012, %v3510, 0.0
        %v4095 = vsel %vm1013, %v3512, 0.0
        %v4096 = vsel %vm1013, %v3514, 0.0
        %v4097 = vsel %vm1013, %v3516, 0.0
        %v4098 = vsel %vm1013, %v3518, 0.0
        %v4099 = vsel %vm1013, %v3520, 0.0
        %v4100 = vsel %vm1013, %v3522, 0.0
        %v4101 = vsel %vm1013, %v3524, 0.0
        %v4102 = vsel %vm1013, %v3526, 0.0
        %v4103 = vsel %vm1014, %v3528, 0.0
        %v4104 = vsel %vm1014, %v3530, 0.0
        %v4105 = vsel %vm1014, %v3532, 0.0
        %v4106 = vsel %vm1014, %v3534, 0.0
        %v4107 = vsel %vm1014, %v3536, 0.0
        %v4108 = vsel %vm1014, %v3538, 0.0
        %v4109 = vsel %vm1014, %v3540, 0.0
        %v4110 = vsel %vm1014, %v3542, 0.0
        %v4111 = vsel %vm1015, %v3544, 0.0
        %v4112 = vsel %vm1015, %v3546, 0.0
        %v4113 = vsel %vm1015, %v3548, 0.0
        %v4114 = vsel %vm1015, %v3550, 0.0
        %v4115 = vsel %vm1015, %v3552, 0.0
        %v4116 = vsel %vm1015, %v3554, 0.0
        %v4117 = vsel %vm1015, %v3556, 0.0
        %v4118 = vsel %vm1015, %v3558, 0.0
        %v4119 = vsel %vm1016, %v3560, 0.0
        %v4120 = vsel %vm1016, %v3562, 0.0
        %v4121 = vsel %vm1016, %v3564, 0.0
        %v4122 = vsel %vm1016, %v3566, 0.0
        %v4123 = vsel %vm1016, %v3568, 0.0
        %v4124 = vsel %vm1016, %v3570, 0.0
        %v4125 = vsel %vm1016, %v3572, 0.0
        %v4126 = vsel %vm1016, %v3574, 0.0
        %v4127 = vsel %vm1017, %v3576, 0.0
        %v4128 = vsel %vm1017, %v3578, 0.0
        %v4129 = vsel %vm1017, %v3580, 0.0
        %v4130 = vsel %vm1017, %v3582, 0.0
        %v4131 = vsel %vm1017, %v3584, 0.0
        %v4132 = vsel %vm1017, %v3586, 0.0
        %v4133 = vsel %vm1017, %v3588, 0.0
        %v4134 = vsel %vm1017, %v3590, 0.0
        %v4135 = vsel %vm1018, %v3592, 0.0
        %v4136 = vsel %vm1018, %v3594, 0.0
        %v4137 = vsel %vm1018, %v3596, 0.0
        %v4138 = vsel %vm1018, %v3598, 0.0
        %v4139 = vsel %vm1018, %v3600, 0.0
        %v4140 = vsel %vm1018, %v3602, 0.0
        %v4141 = vsel %vm1018, %v3604, 0.0
        %v4142 = vsel %vm1018, %v3606, 0.0
        %v4143 = vsel %vm1019, %v3608, 0.0
        %v4144 = vsel %vm1019, %v3610, 0.0
        %v4145 = vsel %vm1019, %v3612, 0.0
        %v4146 = vsel %vm1019, %v3614, 0.0
        %v4147 = vsel %vm1019, %v3616, 0.0
        %v4148 = vsel %vm1019, %v3618, 0.0
        %v4149 = vsel %vm1019, %v3620, 0.0
        %v4150 = vsel %vm1019, %v3622, 0.0
        %v4151 = vsel %vm1020, %v3624, 0.0
        %v4152 = vsel %vm1020, %v3626, 0.0
        %v4153 = vsel %vm1020, %v3628, 0.0
        %v4154 = vsel %vm1020, %v3630, 0.0
        %v4155 = vsel %vm1020, %v3632, 0.0
        %v4156 = vsel %vm1020, %v3634, 0.0
        %v4157 = vsel %vm1020, %v3636, 0.0
        %v4158 = vsel %vm1020, %v3638, 0.0
        %v4159 = vsel %vm1021, %v3640, 0.0
        %v4160 = vsel %vm1021, %v3642, 0.0
        %v4161 = vsel %vm1021, %v3644, 0.0
        %v4162 = vsel %vm1021, %v3646, 0.0
        %v4163 = vsel %vm1021, %v3648, 0.0
        %v4164 = vsel %vm1021, %v3650, 0.0
        %v4165 = vsel %vm1021, %v3652, 0.0
        %v4166 = vsel %vm1021, %v3654, 0.0
        %v4167 = vadd.f32 %v3655, %v3663
        %v4168 = vadd.f32 %v4167, %v3671
        %v4169 = vadd.f32 %v4168, %v3679
        %v4170 = vadd.f32 %v4169, %v3687
        %v4171 = vadd.f32 %v4170, %v3695
        %v4172 = vadd.f32 %v4171, %v3703
        %v4173 = vadd.f32 %v4172, %v3711
        %v4174 = vadd.f32 %v4173, %v3719
        %v4175 = vadd.f32 %v4174, %v3727
        %v4176 = vadd.f32 %v4175, %v3735
        %v4177 = vadd.f32 %v4176, %v3743
        %v4178 = vadd.f32 %v4177, %v3751
        %v4179 = vadd.f32 %v4178, %v3759
        %v4180 = vadd.f32 %v4179, %v3767
        %v4181 = vadd.f32 %v4180, %v3775
        %v4182 = vadd.f32 %v4181, %v3783
        %v4183 = vadd.f32 %v4182, %v3791
        %v4184 = vadd.f32 %v4183, %v3799
        %v4185 = vadd.f32 %v4184, %v3807
        %v4186 = vadd.f32 %v4185, %v3815
        %v4187 = vadd.f32 %v4186, %v3823
        %v4188 = vadd.f32 %v4187, %v3831
        %v4189 = vadd.f32 %v4188, %v3839
        %v4190 = vadd.f32 %v4189, %v3847
        %v4191 = vadd.f32 %v4190, %v3855
        %v4192 = vadd.f32 %v4191, %v3863
        %v4193 = vadd.f32 %v4192, %v3871
        %v4194 = vadd.f32 %v4193, %v3879
        %v4195 = vadd.f32 %v4194, %v3887
        %v4196 = vadd.f32 %v4195, %v3895
        %v4197 = vadd.f32 %v4196, %v3903
        %v4198 = vadd.f32 %v4197, %v3911
        %v4199 = vadd.f32 %v4198, %v3919
        %v4200 = vadd.f32 %v4199, %v3927
        %v4201 = vadd.f32 %v4200, %v3935
        %v4202 = vadd.f32 %v4201, %v3943
        %v4203 = vadd.f32 %v4202, %v3951
        %v4204 = vadd.f32 %v4203, %v3959
        %v4205 = vadd.f32 %v4204, %v3967
        %v4206 = vadd.f32 %v4205, %v3975
        %v4207 = vadd.f32 %v4206, %v3983
        %v4208 = vadd.f32 %v4207, %v3991
        %v4209 = vadd.f32 %v4208, %v3999
        %v4210 = vadd.f32 %v4209, %v4007
        %v4211 = vadd.f32 %v4210, %v4015
        %v4212 = vadd.f32 %v4211, %v4023
        %v4213 = vadd.f32 %v4212, %v4031
        %v4214 = vadd.f32 %v4213, %v4039
        %v4215 = vadd.f32 %v4214, %v4047
        %v4216 = vadd.f32 %v4215, %v4055
        %v4217 = vadd.f32 %v4216, %v4063
        %v4218 = vadd.f32 %v4217, %v4071
        %v4219 = vadd.f32 %v4218, %v4079
        %v4220 = vadd.f32 %v4219, %v4087
        %v4221 = vadd.f32 %v4220, %v4095
        %v4222 = vadd.f32 %v4221, %v4103
        %v4223 = vadd.f32 %v4222, %v4111
        %v4224 = vadd.f32 %v4223, %v4119
        %v4225 = vadd.f32 %v4224, %v4127
        %v4226 = vadd.f32 %v4225, %v4135
        %v4227 = vadd.f32 %v4226, %v4143
        %v4228 = vadd.f32 %v4227, %v4151
        %v4229 = vadd.f32 %v4228, %v4159
        %v4230 = vadd.f32 %v3656, %v3664
        %v4231 = vadd.f32 %v4230, %v3672
        %v4232 = vadd.f32 %v4231, %v3680
        %v4233 = vadd.f32 %v4232, %v3688
        %v4234 = vadd.f32 %v4233, %v3696
        %v4235 = vadd.f32 %v4234, %v3704
        %v4236 = vadd.f32 %v4235, %v3712
        %v4237 = vadd.f32 %v4236, %v3720
        %v4238 = vadd.f32 %v4237, %v3728
        %v4239 = vadd.f32 %v4238, %v3736
        %v4240 = vadd.f32 %v4239, %v3744
        %v4241 = vadd.f32 %v4240, %v3752
        %v4242 = vadd.f32 %v4241, %v3760
        %v4243 = vadd.f32 %v4242, %v3768
        %v4244 = vadd.f32 %v4243, %v3776
        %v4245 = vadd.f32 %v4244, %v3784
        %v4246 = vadd.f32 %v4245, %v3792
        %v4247 = vadd.f32 %v4246, %v3800
        %v4248 = vadd.f32 %v4247, %v3808
        %v4249 = vadd.f32 %v4248, %v3816
        %v4250 = vadd.f32 %v4249, %v3824
        %v4251 = vadd.f32 %v4250, %v3832
        %v4252 = vadd.f32 %v4251, %v3840
        %v4253 = vadd.f32 %v4252, %v3848
        %v4254 = vadd.f32 %v4253, %v3856
        %v4255 = vadd.f32 %v4254, %v3864
        %v4256 = vadd.f32 %v4255, %v3872
        %v4257 = vadd.f32 %v4256, %v3880
        %v4258 = vadd.f32 %v4257, %v3888
        %v4259 = vadd.f32 %v4258, %v3896
        %v4260 = vadd.f32 %v4259, %v3904
        %v4261 = vadd.f32 %v4260, %v3912
        %v4262 = vadd.f32 %v4261, %v3920
        %v4263 = vadd.f32 %v4262, %v3928
        %v4264 = vadd.f32 %v4263, %v3936
        %v4265 = vadd.f32 %v4264, %v3944
        %v4266 = vadd.f32 %v4265, %v3952
        %v4267 = vadd.f32 %v4266, %v3960
        %v4268 = vadd.f32 %v4267, %v3968
        %v4269 = vadd.f32 %v4268, %v3976
        %v4270 = vadd.f32 %v4269, %v3984
        %v4271 = vadd.f32 %v4270, %v3992
        %v4272 = vadd.f32 %v4271, %v4000
        %v4273 = vadd.f32 %v4272, %v4008
        %v4274 = vadd.f32 %v4273, %v4016
        %v4275 = vadd.f32 %v4274, %v4024
        %v4276 = vadd.f32 %v4275, %v4032
        %v4277 = vadd.f32 %v4276, %v4040
        %v4278 = vadd.f32 %v4277, %v4048
        %v4279 = vadd.f32 %v4278, %v4056
        %v4280 = vadd.f32 %v4279, %v4064
        %v4281 = vadd.f32 %v4280, %v4072
        %v4282 = vadd.f32 %v4281, %v4080
        %v4283 = vadd.f32 %v4282, %v4088
        %v4284 = vadd.f32 %v4283, %v4096
        %v4285 = vadd.f32 %v4284, %v4104
        %v4286 = vadd.f32 %v4285, %v4112
        %v4287 = vadd.f32 %v4286, %v4120
        %v4288 = vadd.f32 %v4287, %v4128
        %v4289 = vadd.f32 %v4288, %v4136
        %v4290 = vadd.f32 %v4289, %v4144
        %v4291 = vadd.f32 %v4290, %v4152
        %v4292 = vadd.f32 %v4291, %v4160
        %v4293 = vadd.f32 %v3657, %v3665
        %v4294 = vadd.f32 %v4293, %v3673
        %v4295 = vadd.f32 %v4294, %v3681
        %v4296 = vadd.f32 %v4295, %v3689
        %v4297 = vadd.f32 %v4296, %v3697
        %v4298 = vadd.f32 %v4297, %v3705
        %v4299 = vadd.f32 %v4298, %v3713
        %v4300 = vadd.f32 %v4299, %v3721
        %v4301 = vadd.f32 %v4300, %v3729
        %v4302 = vadd.f32 %v4301, %v3737
        %v4303 = vadd.f32 %v4302, %v3745
        %v4304 = vadd.f32 %v4303, %v3753
        %v4305 = vadd.f32 %v4304, %v3761
        %v4306 = vadd.f32 %v4305, %v3769
        %v4307 = vadd.f32 %v4306, %v3777
        %v4308 = vadd.f32 %v4307, %v3785
        %v4309 = vadd.f32 %v4308, %v3793
        %v4310 = vadd.f32 %v4309, %v3801
        %v4311 = vadd.f32 %v4310, %v3809
        %v4312 = vadd.f32 %v4311, %v3817
        %v4313 = vadd.f32 %v4312, %v3825
        %v4314 = vadd.f32 %v4313, %v3833
        %v4315 = vadd.f32 %v4314, %v3841
        %v4316 = vadd.f32 %v4315, %v3849
        %v4317 = vadd.f32 %v4316, %v3857
        %v4318 = vadd.f32 %v4317, %v3865
        %v4319 = vadd.f32 %v4318, %v3873
        %v4320 = vadd.f32 %v4319, %v3881
        %v4321 = vadd.f32 %v4320, %v3889
        %v4322 = vadd.f32 %v4321, %v3897
        %v4323 = vadd.f32 %v4322, %v3905
        %v4324 = vadd.f32 %v4323, %v3913
        %v4325 = vadd.f32 %v4324, %v3921
        %v4326 = vadd.f32 %v4325, %v3929
        %v4327 = vadd.f32 %v4326, %v3937
        %v4328 = vadd.f32 %v4327, %v3945
        %v4329 = vadd.f32 %v4328, %v3953
        %v4330 = vadd.f32 %v4329, %v3961
        %v4331 = vadd.f32 %v4330, %v3969
        %v4332 = vadd.f32 %v4331, %v3977
        %v4333 = vadd.f32 %v4332, %v3985
        %v4334 = vadd.f32 %v4333, %v3993
        %v4335 = vadd.f32 %v4334, %v4001
        %v4336 = vadd.f32 %v4335, %v4009
        %v4337 = vadd.f32 %v4336, %v4017
        %v4338 = vadd.f32 %v4337, %v4025
        %v4339 = vadd.f32 %v4338, %v4033
        %v4340 = vadd.f32 %v4339, %v4041
        %v4341 = vadd.f32 %v4340, %v4049
        %v4342 = vadd.f32 %v4341, %v4057
        %v4343 = vadd.f32 %v4342, %v4065
        %v4344 = vadd.f32 %v4343, %v4073
        %v4345 = vadd.f32 %v4344, %v4081
        %v4346 = vadd.f32 %v4345, %v4089
        %v4347 = vadd.f32 %v4346, %v4097
        %v4348 = vadd.f32 %v4347, %v4105
        %v4349 = vadd.f32 %v4348, %v4113
        %v4350 = vadd.f32 %v4349, %v4121
        %v4351 = vadd.f32 %v4350, %v4129
        %v4352 = vadd.f32 %v4351, %v4137
        %v4353 = vadd.f32 %v4352, %v4145
        %v4354 = vadd.f32 %v4353, %v4153
        %v4355 = vadd.f32 %v4354, %v4161
        %v4356 = vadd.f32 %v3658, %v3666
        %v4357 = vadd.f32 %v4356, %v3674
        %v4358 = vadd.f32 %v4357, %v3682
        %v4359 = vadd.f32 %v4358, %v3690
        %v4360 = vadd.f32 %v4359, %v3698
        %v4361 = vadd.f32 %v4360, %v3706
        %v4362 = vadd.f32 %v4361, %v3714
        %v4363 = vadd.f32 %v4362, %v3722
        %v4364 = vadd.f32 %v4363, %v3730
        %v4365 = vadd.f32 %v4364, %v3738
        %v4366 = vadd.f32 %v4365, %v3746
        %v4367 = vadd.f32 %v4366, %v3754
        %v4368 = vadd.f32 %v4367, %v3762
        %v4369 = vadd.f32 %v4368, %v3770
        %v4370 = vadd.f32 %v4369, %v3778
        %v4371 = vadd.f32 %v4370, %v3786
        %v4372 = vadd.f32 %v4371, %v3794
        %v4373 = vadd.f32 %v4372, %v3802
        %v4374 = vadd.f32 %v4373, %v3810
        %v4375 = vadd.f32 %v4374, %v3818
        %v4376 = vadd.f32 %v4375, %v3826
        %v4377 = vadd.f32 %v4376, %v3834
        %v4378 = vadd.f32 %v4377, %v3842
        %v4379 = vadd.f32 %v4378, %v3850
        %v4380 = vadd.f32 %v4379, %v3858
        %v4381 = vadd.f32 %v4380, %v3866
        %v4382 = vadd.f32 %v4381, %v3874
        %v4383 = vadd.f32 %v4382, %v3882
        %v4384 = vadd.f32 %v4383, %v3890
        %v4385 = vadd.f32 %v4384, %v3898
        %v4386 = vadd.f32 %v4385, %v3906
        %v4387 = vadd.f32 %v4386, %v3914
        %v4388 = vadd.f32 %v4387, %v3922
        %v4389 = vadd.f32 %v4388, %v3930
        %v4390 = vadd.f32 %v4389, %v3938
        %v4391 = vadd.f32 %v4390, %v3946
        %v4392 = vadd.f32 %v4391, %v3954
        %v4393 = vadd.f32 %v4392, %v3962
        %v4394 = vadd.f32 %v4393, %v3970
        %v4395 = vadd.f32 %v4394, %v3978
        %v4396 = vadd.f32 %v4395, %v3986
        %v4397 = vadd.f32 %v4396, %v3994
        %v4398 = vadd.f32 %v4397, %v4002
        %v4399 = vadd.f32 %v4398, %v4010
        %v4400 = vadd.f32 %v4399, %v4018
        %v4401 = vadd.f32 %v4400, %v4026
        %v4402 = vadd.f32 %v4401, %v4034
        %v4403 = vadd.f32 %v4402, %v4042
        %v4404 = vadd.f32 %v4403, %v4050
        %v4405 = vadd.f32 %v4404, %v4058
        %v4406 = vadd.f32 %v4405, %v4066
        %v4407 = vadd.f32 %v4406, %v4074
        %v4408 = vadd.f32 %v4407, %v4082
        %v4409 = vadd.f32 %v4408, %v4090
        %v4410 = vadd.f32 %v4409, %v4098
        %v4411 = vadd.f32 %v4410, %v4106
        %v4412 = vadd.f32 %v4411, %v4114
        %v4413 = vadd.f32 %v4412, %v4122
        %v4414 = vadd.f32 %v4413, %v4130
        %v4415 = vadd.f32 %v4414, %v4138
        %v4416 = vadd.f32 %v4415, %v4146
        %v4417 = vadd.f32 %v4416, %v4154
        %v4418 = vadd.f32 %v4417, %v4162
        %v4419 = vadd.f32 %v3659, %v3667
        %v4420 = vadd.f32 %v4419, %v3675
        %v4421 = vadd.f32 %v4420, %v3683
        %v4422 = vadd.f32 %v4421, %v3691
        %v4423 = vadd.f32 %v4422, %v3699
        %v4424 = vadd.f32 %v4423, %v3707
        %v4425 = vadd.f32 %v4424, %v3715
        %v4426 = vadd.f32 %v4425, %v3723
        %v4427 = vadd.f32 %v4426, %v3731
        %v4428 = vadd.f32 %v4427, %v3739
        %v4429 = vadd.f32 %v4428, %v3747
        %v4430 = vadd.f32 %v4429, %v3755
        %v4431 = vadd.f32 %v4430, %v3763
        %v4432 = vadd.f32 %v4431, %v3771
        %v4433 = vadd.f32 %v4432, %v3779
        %v4434 = vadd.f32 %v4433, %v3787
        %v4435 = vadd.f32 %v4434, %v3795
        %v4436 = vadd.f32 %v4435, %v3803
        %v4437 = vadd.f32 %v4436, %v3811
        %v4438 = vadd.f32 %v4437, %v3819
        %v4439 = vadd.f32 %v4438, %v3827
        %v4440 = vadd.f32 %v4439, %v3835
        %v4441 = vadd.f32 %v4440, %v3843
        %v4442 = vadd.f32 %v4441, %v3851
        %v4443 = vadd.f32 %v4442, %v3859
        %v4444 = vadd.f32 %v4443, %v3867
        %v4445 = vadd.f32 %v4444, %v3875
        %v4446 = vadd.f32 %v4445, %v3883
        %v4447 = vadd.f32 %v4446, %v3891
        %v4448 = vadd.f32 %v4447, %v3899
        %v4449 = vadd.f32 %v4448, %v3907
        %v4450 = vadd.f32 %v4449, %v3915
        %v4451 = vadd.f32 %v4450, %v3923
        %v4452 = vadd.f32 %v4451, %v3931
        %v4453 = vadd.f32 %v4452, %v3939
        %v4454 = vadd.f32 %v4453, %v3947
        %v4455 = vadd.f32 %v4454, %v3955
        %v4456 = vadd.f32 %v4455, %v3963
        %v4457 = vadd.f32 %v4456, %v3971
        %v4458 = vadd.f32 %v4457, %v3979
        %v4459 = vadd.f32 %v4458, %v3987
        %v4460 = vadd.f32 %v4459, %v3995
        %v4461 = vadd.f32 %v4460, %v4003
        %v4462 = vadd.f32 %v4461, %v4011
        %v4463 = vadd.f32 %v4462, %v4019
        %v4464 = vadd.f32 %v4463, %v4027
        %v4465 = vadd.f32 %v4464, %v4035
        %v4466 = vadd.f32 %v4465, %v4043
        %v4467 = vadd.f32 %v4466, %v4051
        %v4468 = vadd.f32 %v4467, %v4059
        %v4469 = vadd.f32 %v4468, %v4067
        %v4470 = vadd.f32 %v4469, %v4075
        %v4471 = vadd.f32 %v4470, %v4083
        %v4472 = vadd.f32 %v4471, %v4091
        %v4473 = vadd.f32 %v4472, %v4099
        %v4474 = vadd.f32 %v4473, %v4107
        %v4475 = vadd.f32 %v4474, %v4115
        %v4476 = vadd.f32 %v4475, %v4123
        %v4477 = vadd.f32 %v4476, %v4131
        %v4478 = vadd.f32 %v4477, %v4139
        %v4479 = vadd.f32 %v4478, %v4147
        %v4480 = vadd.f32 %v4479, %v4155
        %v4481 = vadd.f32 %v4480, %v4163
        %v4482 = vadd.f32 %v3660, %v3668
        %v4483 = vadd.f32 %v4482, %v3676
        %v4484 = vadd.f32 %v4483, %v3684
        %v4485 = vadd.f32 %v4484, %v3692
        %v4486 = vadd.f32 %v4485, %v3700
        %v4487 = vadd.f32 %v4486, %v3708
        %v4488 = vadd.f32 %v4487, %v3716
        %v4489 = vadd.f32 %v4488, %v3724
        %v4490 = vadd.f32 %v4489, %v3732
        %v4491 = vadd.f32 %v4490, %v3740
        %v4492 = vadd.f32 %v4491, %v3748
        %v4493 = vadd.f32 %v4492, %v3756
        %v4494 = vadd.f32 %v4493, %v3764
        %v4495 = vadd.f32 %v4494, %v3772
        %v4496 = vadd.f32 %v4495, %v3780
        %v4497 = vadd.f32 %v4496, %v3788
        %v4498 = vadd.f32 %v4497, %v3796
        %v4499 = vadd.f32 %v4498, %v3804
        %v4500 = vadd.f32 %v4499, %v3812
        %v4501 = vadd.f32 %v4500, %v3820
        %v4502 = vadd.f32 %v4501, %v3828
        %v4503 = vadd.f32 %v4502, %v3836
        %v4504 = vadd.f32 %v4503, %v3844
        %v4505 = vadd.f32 %v4504, %v3852
        %v4506 = vadd.f32 %v4505, %v3860
        %v4507 = vadd.f32 %v4506, %v3868
        %v4508 = vadd.f32 %v4507, %v3876
        %v4509 = vadd.f32 %v4508, %v3884
        %v4510 = vadd.f32 %v4509, %v3892
        %v4511 = vadd.f32 %v4510, %v3900
        %v4512 = vadd.f32 %v4511, %v3908
        %v4513 = vadd.f32 %v4512, %v3916
        %v4514 = vadd.f32 %v4513, %v3924
        %v4515 = vadd.f32 %v4514, %v3932
        %v4516 = vadd.f32 %v4515, %v3940
        %v4517 = vadd.f32 %v4516, %v3948
        %v4518 = vadd.f32 %v4517, %v3956
        %v4519 = vadd.f32 %v4518, %v3964
        %v4520 = vadd.f32 %v4519, %v3972
        %v4521 = vadd.f32 %v4520, %v3980
        %v4522 = vadd.f32 %v4521, %v3988
        %v4523 = vadd.f32 %v4522, %v3996
        %v4524 = vadd.f32 %v4523, %v4004
        %v4525 = vadd.f32 %v4524, %v4012
        %v4526 = vadd.f32 %v4525, %v4020
        %v4527 = vadd.f32 %v4526, %v4028
        %v4528 = vadd.f32 %v4527, %v4036
        %v4529 = vadd.f32 %v4528, %v4044
        %v4530 = vadd.f32 %v4529, %v4052
        %v4531 = vadd.f32 %v4530, %v4060
        %v4532 = vadd.f32 %v4531, %v4068
        %v4533 = vadd.f32 %v4532, %v4076
        %v4534 = vadd.f32 %v4533, %v4084
        %v4535 = vadd.f32 %v4534, %v4092
        %v4536 = vadd.f32 %v4535, %v4100
        %v4537 = vadd.f32 %v4536, %v4108
        %v4538 = vadd.f32 %v4537, %v4116
        %v4539 = vadd.f32 %v4538, %v4124
        %v4540 = vadd.f32 %v4539, %v4132
        %v4541 = vadd.f32 %v4540, %v4140
        %v4542 = vadd.f32 %v4541, %v4148
        %v4543 = vadd.f32 %v4542, %v4156
        %v4544 = vadd.f32 %v4543, %v4164
        %v4545 = vadd.f32 %v3661, %v3669
        %v4546 = vadd.f32 %v4545, %v3677
        %v4547 = vadd.f32 %v4546, %v3685
        %v4548 = vadd.f32 %v4547, %v3693
        %v4549 = vadd.f32 %v4548, %v3701
        %v4550 = vadd.f32 %v4549, %v3709
        %v4551 = vadd.f32 %v4550, %v3717
        %v4552 = vadd.f32 %v4551, %v3725
        %v4553 = vadd.f32 %v4552, %v3733
        %v4554 = vadd.f32 %v4553, %v3741
        %v4555 = vadd.f32 %v4554, %v3749
        %v4556 = vadd.f32 %v4555, %v3757
        %v4557 = vadd.f32 %v4556, %v3765
        %v4558 = vadd.f32 %v4557, %v3773
        %v4559 = vadd.f32 %v4558, %v3781
        %v4560 = vadd.f32 %v4559, %v3789
        %v4561 = vadd.f32 %v4560, %v3797
        %v4562 = vadd.f32 %v4561, %v3805
        %v4563 = vadd.f32 %v4562, %v3813
        %v4564 = vadd.f32 %v4563, %v3821
        %v4565 = vadd.f32 %v4564, %v3829
        %v4566 = vadd.f32 %v4565, %v3837
        %v4567 = vadd.f32 %v4566, %v3845
        %v4568 = vadd.f32 %v4567, %v3853
        %v4569 = vadd.f32 %v4568, %v3861
        %v4570 = vadd.f32 %v4569, %v3869
        %v4571 = vadd.f32 %v4570, %v3877
        %v4572 = vadd.f32 %v4571, %v3885
        %v4573 = vadd.f32 %v4572, %v3893
        %v4574 = vadd.f32 %v4573, %v3901
        %v4575 = vadd.f32 %v4574, %v3909
        %v4576 = vadd.f32 %v4575, %v3917
        %v4577 = vadd.f32 %v4576, %v3925
        %v4578 = vadd.f32 %v4577, %v3933
        %v4579 = vadd.f32 %v4578, %v3941
        %v4580 = vadd.f32 %v4579, %v3949
        %v4581 = vadd.f32 %v4580, %v3957
        %v4582 = vadd.f32 %v4581, %v3965
        %v4583 = vadd.f32 %v4582, %v3973
        %v4584 = vadd.f32 %v4583, %v3981
        %v4585 = vadd.f32 %v4584, %v3989
        %v4586 = vadd.f32 %v4585, %v3997
        %v4587 = vadd.f32 %v4586, %v4005
        %v4588 = vadd.f32 %v4587, %v4013
        %v4589 = vadd.f32 %v4588, %v4021
        %v4590 = vadd.f32 %v4589, %v4029
        %v4591 = vadd.f32 %v4590, %v4037
        %v4592 = vadd.f32 %v4591, %v4045
        %v4593 = vadd.f32 %v4592, %v4053
        %v4594 = vadd.f32 %v4593, %v4061
        %v4595 = vadd.f32 %v4594, %v4069
        %v4596 = vadd.f32 %v4595, %v4077
        %v4597 = vadd.f32 %v4596, %v4085
        %v4598 = vadd.f32 %v4597, %v4093
        %v4599 = vadd.f32 %v4598, %v4101
        %v4600 = vadd.f32 %v4599, %v4109
        %v4601 = vadd.f32 %v4600, %v4117
        %v4602 = vadd.f32 %v4601, %v4125
        %v4603 = vadd.f32 %v4602, %v4133
        %v4604 = vadd.f32 %v4603, %v4141
        %v4605 = vadd.f32 %v4604, %v4149
        %v4606 = vadd.f32 %v4605, %v4157
        %v4607 = vadd.f32 %v4606, %v4165
        %v4608 = vsel %vm1975, %v3662, 0.0
        %v4609 = vsel %vm1975, %v3670, 0.0
        %v4610 = vadd.f32 %v4608, %v4609
        %v4611 = vsel %vm1975, %v3678, 0.0
        %v4612 = vadd.f32 %v4610, %v4611
        %v4613 = vsel %vm1975, %v3686, 0.0
        %v4614 = vadd.f32 %v4612, %v4613
        %v4615 = vsel %vm1975, %v3694, 0.0
        %v4616 = vadd.f32 %v4614, %v4615
        %v4617 = vsel %vm1975, %v3702, 0.0
        %v4618 = vadd.f32 %v4616, %v4617
        %v4619 = vsel %vm1975, %v3710, 0.0
        %v4620 = vadd.f32 %v4618, %v4619
        %v4621 = vsel %vm1975, %v3718, 0.0
        %v4622 = vadd.f32 %v4620, %v4621
        %v4623 = vsel %vm1975, %v3726, 0.0
        %v4624 = vadd.f32 %v4622, %v4623
        %v4625 = vsel %vm1975, %v3734, 0.0
        %v4626 = vadd.f32 %v4624, %v4625
        %v4627 = vsel %vm1975, %v3742, 0.0
        %v4628 = vadd.f32 %v4626, %v4627
        %v4629 = vsel %vm1975, %v3750, 0.0
        %v4630 = vadd.f32 %v4628, %v4629
        %v4631 = vsel %vm1975, %v3758, 0.0
        %v4632 = vadd.f32 %v4630, %v4631
        %v4633 = vsel %vm1975, %v3766, 0.0
        %v4634 = vadd.f32 %v4632, %v4633
        %v4635 = vsel %vm1975, %v3774, 0.0
        %v4636 = vadd.f32 %v4634, %v4635
        %v4637 = vsel %vm1975, %v3782, 0.0
        %v4638 = vadd.f32 %v4636, %v4637
        %v4639 = vsel %vm1975, %v3790, 0.0
        %v4640 = vadd.f32 %v4638, %v4639
        %v4641 = vsel %vm1975, %v3798, 0.0
        %v4642 = vadd.f32 %v4640, %v4641
        %v4643 = vsel %vm1975, %v3806, 0.0
        %v4644 = vadd.f32 %v4642, %v4643
        %v4645 = vsel %vm1975, %v3814, 0.0
        %v4646 = vadd.f32 %v4644, %v4645
        %v4647 = vsel %vm1975, %v3822, 0.0
        %v4648 = vadd.f32 %v4646, %v4647
        %v4649 = vsel %vm1975, %v3830, 0.0
        %v4650 = vadd.f32 %v4648, %v4649
        %v4651 = vsel %vm1975, %v3838, 0.0
        %v4652 = vadd.f32 %v4650, %v4651
        %v4653 = vsel %vm1975, %v3846, 0.0
        %v4654 = vadd.f32 %v4652, %v4653
        %v4655 = vsel %vm1975, %v3854, 0.0
        %v4656 = vadd.f32 %v4654, %v4655
        %v4657 = vsel %vm1975, %v3862, 0.0
        %v4658 = vadd.f32 %v4656, %v4657
        %v4659 = vsel %vm1975, %v3870, 0.0
        %v4660 = vadd.f32 %v4658, %v4659
        %v4661 = vsel %vm1975, %v3878, 0.0
        %v4662 = vadd.f32 %v4660, %v4661
        %v4663 = vsel %vm1975, %v3886, 0.0
        %v4664 = vadd.f32 %v4662, %v4663
        %v4665 = vsel %vm1975, %v3894, 0.0
        %v4666 = vadd.f32 %v4664, %v4665
        %v4667 = vsel %vm1975, %v3902, 0.0
        %v4668 = vadd.f32 %v4666, %v4667
        %v4669 = vsel %vm1975, %v3910, 0.0
        %v4670 = vadd.f32 %v4668, %v4669
        %v4671 = vsel %vm1975, %v3918, 0.0
        %v4672 = vadd.f32 %v4670, %v4671
        %v4673 = vsel %vm1975, %v3926, 0.0
        %v4674 = vadd.f32 %v4672, %v4673
        %v4675 = vsel %vm1975, %v3934, 0.0
        %v4676 = vadd.f32 %v4674, %v4675
        %v4677 = vsel %vm1975, %v3942, 0.0
        %v4678 = vadd.f32 %v4676, %v4677
        %v4679 = vsel %vm1975, %v3950, 0.0
        %v4680 = vadd.f32 %v4678, %v4679
        %v4681 = vsel %vm1975, %v3958, 0.0
        %v4682 = vadd.f32 %v4680, %v4681
        %v4683 = vsel %vm1975, %v3966, 0.0
        %v4684 = vadd.f32 %v4682, %v4683
        %v4685 = vsel %vm1975, %v3974, 0.0
        %v4686 = vadd.f32 %v4684, %v4685
        %v4687 = vsel %vm1975, %v3982, 0.0
        %v4688 = vadd.f32 %v4686, %v4687
        %v4689 = vsel %vm1975, %v3990, 0.0
        %v4690 = vadd.f32 %v4688, %v4689
        %v4691 = vsel %vm1975, %v3998, 0.0
        %v4692 = vadd.f32 %v4690, %v4691
        %v4693 = vsel %vm1975, %v4006, 0.0
        %v4694 = vadd.f32 %v4692, %v4693
        %v4695 = vsel %vm1975, %v4014, 0.0
        %v4696 = vadd.f32 %v4694, %v4695
        %v4697 = vsel %vm1975, %v4022, 0.0
        %v4698 = vadd.f32 %v4696, %v4697
        %v4699 = vsel %vm1975, %v4030, 0.0
        %v4700 = vadd.f32 %v4698, %v4699
        %v4701 = vsel %vm1975, %v4038, 0.0
        %v4702 = vadd.f32 %v4700, %v4701
        %v4703 = vsel %vm1975, %v4046, 0.0
        %v4704 = vadd.f32 %v4702, %v4703
        %v4705 = vsel %vm1975, %v4054, 0.0
        %v4706 = vadd.f32 %v4704, %v4705
        %v4707 = vsel %vm1975, %v4062, 0.0
        %v4708 = vadd.f32 %v4706, %v4707
        %v4709 = vsel %vm1975, %v4070, 0.0
        %v4710 = vadd.f32 %v4708, %v4709
        %v4711 = vsel %vm1975, %v4078, 0.0
        %v4712 = vadd.f32 %v4710, %v4711
        %v4713 = vsel %vm1975, %v4086, 0.0
        %v4714 = vadd.f32 %v4712, %v4713
        %v4715 = vsel %vm1975, %v4094, 0.0
        %v4716 = vadd.f32 %v4714, %v4715
        %v4717 = vsel %vm1975, %v4102, 0.0
        %v4718 = vadd.f32 %v4716, %v4717
        %v4719 = vsel %vm1975, %v4110, 0.0
        %v4720 = vadd.f32 %v4718, %v4719
        %v4721 = vsel %vm1975, %v4118, 0.0
        %v4722 = vadd.f32 %v4720, %v4721
        %v4723 = vsel %vm1975, %v4126, 0.0
        %v4724 = vadd.f32 %v4722, %v4723
        %v4725 = vsel %vm1975, %v4134, 0.0
        %v4726 = vadd.f32 %v4724, %v4725
        %v4727 = vsel %vm1975, %v4142, 0.0
        %v4728 = vadd.f32 %v4726, %v4727
        %v4729 = vsel %vm1975, %v4150, 0.0
        %v4730 = vadd.f32 %v4728, %v4729
        %v4731 = vsel %vm1975, %v4158, 0.0
        %v4732 = vadd.f32 %v4730, %v4731
        %v4733 = vsel %vm1975, %v4166, 0.0
        %v4734 = vadd.f32 %v4732, %v4733
        %v4735 = vld [vmem:[#allocation3] sm:$0xff]
        %v4736 = vld [vmem:[#allocation3 + $0x8] sm:$0xff]
        %v4737 = vld [vmem:[#allocation3 + $0x10] sm:$0xff]
        %v4738 = vld [vmem:[#allocation3 + $0x18] sm:$0xff]
        %v4739 = vld [vmem:[#allocation3 + $0x20] sm:$0xff]
        %v4740 = vld [vmem:[#allocation3 + $0x28] sm:$0xff]
        %v4741 = vld [vmem:[#allocation3 + $0x30] sm:$0xff]
        %v4742 = vld [vmem:[#allocation3 + $0x38] sm:$0xff]
        %v4743 = vsub.f32 %v2103, %v2111
        %v4744 = vsub.f32 %v2104, %v2112
        %v4745 = vsub.f32 %v2105, %v2113
        %v4746 = vsub.f32 %v2106, %v2114
        %v4747 = vsub.f32 %v2107, %v2115
        %v4748 = vsub.f32 %v2108, %v2116
        %v4749 = vsub.f32 %v2109, %v2117
        %v4750 = vsub.f32 %v2110, %v2118
        %v4751 = vmul.f32 %v4743, 1.442695
        %v4752 = vpow.pop %v4751
        %v4753 = vmul.f32 %v4744, 1.442695
        %v4754 = vpow.pop %v4753
        %v4755 = vmul.f32 %v4745, 1.442695
        %v4756 = vpow.pop %v4755
        %v4757 = vmul.f32 %v4746, 1.442695
        %v4758 = vpow.pop %v4757
        %v4759 = vmul.f32 %v4747, 1.442695
        %v4760 = vpow.pop %v4759
        %v4761 = vmul.f32 %v4748, 1.442695
        %v4762 = vpow.pop %v4761
        %v4763 = vmul.f32 %v4749, 1.442695
        %v4764 = vpow.pop %v4763
        %v4765 = vmul.f32 %v4750, 1.442695
        %v4766 = vpow.pop %v4765
        %v4767 = vmul.f32 %v4735, %v4752
        %v4768 = vmul.f32 %v4736, %v4754
        %v4769 = vmul.f32 %v4737, %v4756
        %v4770 = vmul.f32 %v4738, %v4758
        %v4771 = vmul.f32 %v4739, %v4760
        %v4772 = vmul.f32 %v4740, %v4762
        %v4773 = vmul.f32 %v4741, %v4764
        %v4774 = vmul.f32 %v4742, %v4766
        %v4775 = vadd.f32 %v4767, %v4229
        %v4776 = vadd.f32 %v4768, %v4292
        %v4777 = vadd.f32 %v4769, %v4355
        %v4778 = vadd.f32 %v4770, %v4418
        %v4779 = vadd.f32 %v4771, %v4481
        %v4780 = vadd.f32 %v4772, %v4544
        %v4781 = vadd.f32 %v4773, %v4607
        %v4782 = vadd.f32 %v4774, %v4734
        %4783 = vst [vmem:[#allocation3] sm:$0xff] %v4775
        %4784 = vst [vmem:[#allocation3 + $0x8] sm:$0xff] %v4776
        %4785 = vst [vmem:[#allocation3 + $0x10] sm:$0xff] %v4777
        %4786 = vst [vmem:[#allocation3 + $0x18] sm:$0xff] %v4778
        %4787 = vst [vmem:[#allocation3 + $0x20] sm:$0xff] %v4779
        %4788 = vst [vmem:[#allocation3 + $0x28] sm:$0xff] %v4780
        %4789 = vst [vmem:[#allocation3 + $0x30] sm:$0xff] %v4781
        %4790 = vst.msk [vmem:[#allocation3 + $0x38] sm:$0xff] %vm1975, %v4782
        %4791 = vst [vmem:[#allocation2] sm:$0xff] %v2111
        %4792 = vst [vmem:[#allocation2 + $0x8] sm:$0xff] %v2112
        %4793 = vst [vmem:[#allocation2 + $0x10] sm:$0xff] %v2113
        %4794 = vst [vmem:[#allocation2 + $0x18] sm:$0xff] %v2114
        %4795 = vst [vmem:[#allocation2 + $0x20] sm:$0xff] %v2115
        %4796 = vst [vmem:[#allocation2 + $0x28] sm:$0xff] %v2116
        %4797 = vst [vmem:[#allocation2 + $0x30] sm:$0xff] %v2117
        %4798 = vst.msk [vmem:[#allocation2 + $0x38] sm:$0xff] %vm1975, %v2118
        // Predicated region
        $region33: #{tpu_custom_call.1} parent=23 // pred_check
          %p4799 = pneg %p166
        $region34: #{tpu_custom_call.1} parent=23 // pred_check_branch
          %4801 = sbr.rel (%p4799) target = $region36
        $region35: #{tpu_custom_call.1} parent=23 // pred_region
          %v4802 = vld [vmem:[#allocation2] sm:$0xff]
          %v4803 = vld [vmem:[#allocation2 + $0x8] sm:$0xff]
          %v4804 = vld [vmem:[#allocation2 + $0x10] sm:$0xff]
          %v4805 = vld [vmem:[#allocation2 + $0x18] sm:$0xff]
          %v4806 = vld [vmem:[#allocation2 + $0x20] sm:$0xff]
          %v4807 = vld [vmem:[#allocation2 + $0x28] sm:$0xff]
          %v4808 = vld [vmem:[#allocation2 + $0x30] sm:$0xff]
          %v4809 = vld [vmem:[#allocation2 + $0x38] sm:$0xff]
          %v4810 = vld [vmem:[#allocation3] sm:$0xff]
          %v4811 = vld [vmem:[#allocation3 + $0x8] sm:$0xff]
          %v4812 = vld [vmem:[#allocation3 + $0x10] sm:$0xff]
          %v4813 = vld [vmem:[#allocation3 + $0x18] sm:$0xff]
          %v4814 = vld [vmem:[#allocation3 + $0x20] sm:$0xff]
          %v4815 = vld [vmem:[#allocation3 + $0x28] sm:$0xff]
          %v4816 = vld [vmem:[#allocation3 + $0x30] sm:$0xff]
          %v4817 = vld [vmem:[#allocation3 + $0x38] sm:$0xff]
          %v4818 = vmax.f32 %v4802, %v4806
          %v4819 = vmax.f32 %v4803, %v4807
          %v4820 = vmax.f32 %v4804, %v4808
          %v4821 = vsel %vm1975, %v4809, -inf
          %v4822 = vmax.f32 %v4805, %v4821
          %v4823 = vmax.f32 %v4818, %v4819
          %v4824 = vmax.f32 %v4820, %v4822
          %v4825 = vmax.f32 %v4823, %v4824
          %4826 = vmax.xlane.f32.xlu0 %v4825
          %v4827 = vpop.xlane.xlu0 %4826
          %v4828 = vrot.slane %v4827, 4
          %v4829 = vmax.f32 %v4827, %v4828
          %v4830 = vrot.slane %v4829, 2
          %v4831 = vmax.f32 %v4829, %v4830
          %v4832 = vrot.slane %v4831, 1
          %v4833 = vmax.f32 %v4831, %v4832
          %s4834 = vtos %v4833
          %v4835 = vstv %s4834
          %v4836 = vsub.f32 %v4802, %v4835
          %v4837 = vsub.f32 %v4803, %v4835
          %v4838 = vsub.f32 %v4804, %v4835
          %v4839 = vsub.f32 %v4805, %v4835
          %v4840 = vsub.f32 %v4806, %v4835
          %v4841 = vsub.f32 %v4807, %v4835
          %v4842 = vsub.f32 %v4808, %v4835
          %v4843 = vsub.f32 %v4809, %v4835
          %v4844 = vmul.f32 %v4836, 1.442695
          %v4845 = vpow.pop %v4844
          %v4846 = vmul.f32 %v4837, 1.442695
          %v4847 = vpow.pop %v4846
          %v4848 = vmul.f32 %v4838, 1.442695
          %v4849 = vpow.pop %v4848
          %v4850 = vmul.f32 %v4839, 1.442695
          %v4851 = vpow.pop %v4850
          %v4852 = vmul.f32 %v4840, 1.442695
          %v4853 = vpow.pop %v4852
          %v4854 = vmul.f32 %v4841, 1.442695
          %v4855 = vpow.pop %v4854
          %v4856 = vmul.f32 %v4842, 1.442695
          %v4857 = vpow.pop %v4856
          %v4858 = vmul.f32 %v4843, 1.442695
          %v4859 = vpow.pop %v4858
          %v4860 = vmul.f32 %v4810, %v4845
          %v4861 = vmul.f32 %v4811, %v4847
          %v4862 = vmul.f32 %v4812, %v4849
          %v4863 = vmul.f32 %v4813, %v4851
          %v4864 = vmul.f32 %v4814, %v4853
          %v4865 = vmul.f32 %v4815, %v4855
          %v4866 = vmul.f32 %v4816, %v4857
          %v4867 = vmul.f32 %v4817, %v4859
          %v4868 = vadd.f32 %v4860, %v4861
          %v4869 = vadd.f32 %v4868, %v4862
          %v4870 = vadd.f32 %v4869, %v4863
          %v4871 = vadd.f32 %v4870, %v4864
          %v4872 = vadd.f32 %v4871, %v4865
          %v4873 = vadd.f32 %v4872, %v4866
          %v4874 = vsel %vm1975, %v4867, 0.0
          %v4875 = vadd.f32 %v4873, %v4874
          %4876 = vadd.xlane.f32.xlu0 %v4875
          %v4877 = vpop.xlane.xlu0 %4876
          %v4878 = vrot.slane %v4877, 4
          %v4879 = vadd.f32 %v4877, %v4878
          %v4880 = vrot.slane %v4879, 2
          %v4881 = vadd.f32 %v4879, %v4880
          %v4882 = vrot.slane %v4881, 1
          %v4883 = vadd.f32 %v4881, %v4882
          %s4884 = vtos %v4883
          %v4885 = vstv %s4884
          %v4886 = vlog2.pop %v4885
          %v4887 = vmul.f32 %v4886, 0.6931472
          %v4888 = vadd.f32 %v4835, %v4887
          %4889 = vst [vmem:[%s158] sm:$0xff] %v4888
        $region36: #{tpu_custom_call.1} parent=23 // pred_fallthru
          _
        %s4890 = sand.u32 %s66, 1
        %s4891 = scalar_lea.sflag [#allocation6], %s4890
        %s4892 = sand.u32 %s66, 1
        %s4893 = smul.addr %s4892, 8
        %s4894 = scalar_lea.vmem [#allocation7], %s4893
        // Predicated region
        $region37: #{tpu_custom_call.1} parent=23 // pred_check
          %p4895 = pneg %p76
        $region38: #{tpu_custom_call.1} parent=23 // pred_check_branch
          %4897 = sbr.rel (%p4895) target = $region40
        $region39: #{tpu_custom_call.1} parent=23 // pred_region
          %s4899 = ssub.s32 128, 128
          %4900 = vsyncadd %s4891, %s4899
          %s4901 = smul.addr %s22, 128
          %s4902 = scalar_lea.hbm %s1, %s4901
          %s4904 = sshll.u32 %s4894, 4
          %s4905 = int_to_ptr.vmem [resolvable:$true] %s4904
          %4907 = dma.vmem_to_hbm [thread:$0]  %s4905, 128, %s4902, %s4891
        $region40: #{tpu_custom_call.1} parent=23 // pred_fallthru
          _
      $region24: #{tpu_custom_call.1} parent=5 // pred_fallthru
        _
      %p4908 = scmp.le.s32.totalorder 2, %s13
      // Predicated region
      $region41: #{tpu_custom_call.1} parent=5 // pred_check
        %p4909 = pneg %p4908
      $region42: #{tpu_custom_call.1} parent=5 // pred_check_branch
        %4911 = sbr.rel (%p4909) target = $region44
      $region43: #{tpu_custom_call.1} parent=5 // pred_region
        %s4912 = ssub.s32 %s13, 2
        // Predicated region
        $region45: #{tpu_custom_call.1} parent=43 // pred_check
          %p4913 = pneg %p82
        $region46: #{tpu_custom_call.1} parent=43 // pred_check_branch
          %4915 = sbr.rel (%p4913) target = $region48
        $region47: #{tpu_custom_call.1} parent=43 // pred_region
          %s4916 = sand.u32 %s67, 1
          %s4917 = scalar_lea.sflag [#allocation6], %s4916
          %s4918 = sand.u32 %s67, 1
          %s4919 = smul.addr %s4918, 8
          %s4920 = scalar_lea.vmem [#allocation7], %s4919
          %4921 = dma.done %s4917, 128
        $region48: #{tpu_custom_call.1} parent=43 // pred_fallthru
          _
      $region44: #{tpu_custom_call.1} parent=5 // pred_fallthru
        _
    $region6: #{tpu_custom_call.1} parent=1 // loop_footer
      %s17 = sadd.s32 1, %s13
    $region7: #{tpu_custom_call.1} parent=1 // loop_footer_branch
      %12 = sbr.rel target = $region3
    $region8: #{tpu_custom_call.1} parent=1 // loop_exit
      _
    %4922 = vsyncpa [#allocation5], 1
    %s4923 = scalar_lea.sflag [#allocation5], 1
    %4924 = vsyncpa %s4923, 1
    %4925 = vsyncpa [#allocation6], 1
    %s4926 = scalar_lea.sflag [#allocation6], 1
    %4927 = vsyncpa %s4926, 1

</llo_original>
